<compile_context>
chip_gen: v7x
topology: tpu7x:2x2x1
jax: 0.10.0
libtpu: 0.0.40
codegen_flags: <defaults>
</compile_context>

<pallas_src>
import math
from functools import partial

import jax
import jax.numpy as jnp
import numpy as np
from jax.experimental import pallas as pl
from jax.experimental.pallas import tpu as pltpu


# ---------------------------------------------------------------------------
# shared math helper (pure jnp -> usable inside the kernel and in the reference)
# ---------------------------------------------------------------------------
def _layer_norm(s, gamma, beta, eps=1e-5):
    mu = jnp.mean(s, axis=-1, keepdims=True)
    var = jnp.mean((s - mu) ** 2, axis=-1, keepdims=True)
    return (s - mu) * jax.lax.rsqrt(var + eps) * gamma + beta


# ---------------------------------------------------------------------------
# Pallas kernel: full DecoderBlock forward for ONE batch element per grid step
# ---------------------------------------------------------------------------
def _decoder_block_kernel(x_ref, enc_ref, cross_bias_ref,
                          wqkv1, wo1, wq2, wkv2, wo2,
                          w1, b1, w2, lnb_ref,
                          out_ref, *, num_heads):
    _, S, H = x_ref.shape
    Se = enc_ref.shape[1]
    nh = num_heads
    d = H // nh
    scale = 1.0 / math.sqrt(d)

    x = x_ref[0]            # (S, H)  f32 residual stream
    enc = enc_ref[0]        # (Se, H) f32
    lnb = lnb_ref[...]      # (7, H)  f32: [g1, be1, g2, be2, g3, be3, b2]

    def attention(q, k, v, bias, skv):
        # q: (S, H) f32, k/v: (skv, H) f32; bias broadcastable to (nh, S, skv).
        # Head split via a single reshape (no per-head lane slicing / concat);
        # bf16 operands on the MXU with f32 accumulation; softmax math in f32.
        qh = q.reshape(S, nh, d).astype(jnp.bfloat16)
        kh = k.reshape(skv, nh, d).astype(jnp.bfloat16)
        vh = v.reshape(skv, nh, d).astype(jnp.bfloat16)
        s = jnp.einsum('qhd,khd->hqk', qh, kh,
                       preferred_element_type=jnp.float32) * scale   # (nh,S,skv)
        s = s + bias                                                  # additive -1e6 mask
        s = s - jnp.max(s, axis=-1, keepdims=True)
        p = jnp.exp(s)
        p = p * pl.reciprocal(jnp.sum(p, axis=-1, keepdims=True), approx=True)
        ctx = jnp.einsum('hqk,khd->qhd', p.astype(jnp.bfloat16), vh,
                         preferred_element_type=jnp.float32)          # (S,nh,d)
        return ctx.reshape(S, H).astype(jnp.bfloat16)

    # ---- 1) masked (causal) self-attention + AddNorm1 ------------------------
    qkv = jnp.dot(x.astype(jnp.bfloat16), wqkv1[...],
                  preferred_element_type=jnp.float32)                 # (S, 3H)
    qi = jax.lax.broadcasted_iota(jnp.int32, (S, S), 0)
    ki = jax.lax.broadcasted_iota(jnp.int32, (S, S), 1)
    causal_bias = jnp.where(ki <= qi, 0.0, -1e6).astype(jnp.float32)  # (S, S)
    ctx = attention(qkv[:, :H], qkv[:, H:2 * H], qkv[:, 2 * H:],
                    causal_bias[None], S)
    x2 = jnp.dot(ctx, wo1[...], preferred_element_type=jnp.float32)
    y = _layer_norm(x + x2, lnb[0:1], lnb[1:2])

    # ---- 2) encoder-decoder cross attention + AddNorm2 -----------------------
    q2 = jnp.dot(y.astype(jnp.bfloat16), wq2[...],
                 preferred_element_type=jnp.float32)                  # (S, H)
    kv = jnp.dot(enc.astype(jnp.bfloat16), wkv2[...],
                 preferred_element_type=jnp.float32)                  # (Se, 2H)
    cross_bias = cross_bias_ref[0][None]                              # (1, 1, Se), broadcasts
    ctx = attention(q2, kv[:, :H], kv[:, H:], cross_bias, Se)
    y2 = jnp.dot(ctx, wo2[...], preferred_element_type=jnp.float32)
    z = _layer_norm(y + y2, lnb[2:3], lnb[3:4])

    # ---- 3) position-wise FFN + AddNorm3 --------------------------------------
    h1 = jnp.maximum(
        jnp.dot(z.astype(jnp.bfloat16), w1[...],
                preferred_element_type=jnp.float32) + b1[...], 0.0)
    f = jnp.dot(h1.astype(jnp.bfloat16), w2[...],
                preferred_element_type=jnp.float32) + lnb[6:7]
    # TODO(synk): with H=32 this store is lane-sparse (32/128 lanes); pad H or fold
    # batch onto lanes for a lane-dense writeback at production sizes.
    out_ref[0] = _layer_norm(z + f, lnb[4:5], lnb[5:6]).astype(out_ref.dtype)


# ---------------------------------------------------------------------------
# wrapper: build masks, call the kernel with grid=(B,) (batch parallel)
# ---------------------------------------------------------------------------
def _full2d(arr):
    # full-array block, constant index -> loaded to VMEM once, never re-DMA'd
    return pl.BlockSpec(arr.shape, lambda b: (0, 0))


@partial(jax.jit, static_argnums=(4,))
def decoder_block_pallas(X, enc_outputs, enc_valid_lens, packed, num_heads):
    B, S, H = X.shape
    _, Se, _ = enc_outputs.shape
    assert H % num_heads == 0

    # Additive cross-attention bias (d2l masked_softmax): 0 where key < valid_len,
    # -1e6 otherwise; data-dependent on enc_valid_lens so built per call (cheap).
    cross_bias = jnp.where(
        jnp.arange(Se, dtype=jnp.int32)[None, None, :]
        < enc_valid_lens.astype(jnp.int32)[:, None, None],
        0.0, -1e6).astype(jnp.float32)                                 # (B, 1, Se)

    weights = (packed['wqkv1'], packed['wo1'], packed['wq2'], packed['wkv2'],
               packed['wo2'], packed['w1'], packed['b1'], packed['w2'],
               packed['lnb'])

    kernel = partial(_decoder_block_kernel, num_heads=num_heads)
    out = pl.pallas_call(
        kernel,
        out_shape=jax.ShapeDtypeStruct((B, S, H), X.dtype),
        grid=(B,),
        in_specs=[pl.BlockSpec((1, S, H), lambda b: (b, 0, 0)),
                  pl.BlockSpec((1, Se, H), lambda b: (b, 0, 0)),
                  pl.BlockSpec((1, 1, Se), lambda b: (b, 0, 0))]
                 + [_full2d(w) for w in weights],
        out_specs=pl.BlockSpec((1, S, H), lambda b: (b, 0, 0)),
        compiler_params=pltpu.CompilerParams(
            dimension_semantics=("parallel",),
            vmem_limit_bytes=32 * 1024 * 1024),
    )(X, enc_outputs, cross_bias, *weights)
    return out


def decoder_block_forward(packed_params, i, num_heads, X, state):
    """Mirrors DecoderBlock.forward(X, state) in training mode (dropout=0)."""
    enc_outputs, enc_valid_lens = state[0], state[1]
    if state[2][i] is None:
        key_values = X
    else:
        # TODO(synk): inference kv-cache path (key_values = concat(cache, X), no
        # causal mask) needs a separate growing-Skv kernel; guard instead of
        # silently computing the wrong thing.
        raise NotImplementedError(
            "DecoderBlock Pallas kernel implements the training path "
            "(empty kv-cache) only.")
    state[2][i] = key_values
    out = decoder_block_pallas(X, enc_outputs, enc_valid_lens,
                               packed_params, num_heads)
    return out, state


# ---------------------------------------------------------------------------
# deterministic parameter init (shapes from DecoderBlock.__init__) + packing
# ---------------------------------------------------------------------------
def init_params(key, num_hiddens, ffn_num_hiddens):
    H, F = num_hiddens, ffn_num_hiddens
    ks = jax.random.split(key, 12)

    def lin(k, fan_in, fan_out):
        return (jax.random.normal(k, (fan_in, fan_out), jnp.float32)
                / math.sqrt(fan_in))

    return {
        'wq1': lin(ks[0], H, H), 'wk1': lin(ks[1], H, H),
        'wv1': lin(ks[2], H, H), 'wo1': lin(ks[3], H, H),
        'wq2': lin(ks[4], H, H), 'wk2': lin(ks[5], H, H),
        'wv2': lin(ks[6], H, H), 'wo2': lin(ks[7], H, H),
        'w1': lin(ks[8], H, F),
        'b1': 0.1 * jax.random.normal(ks[9], (1, F), jnp.float32),
        'w2': lin(ks[10], F, H),
        'b2': 0.1 * jax.random.normal(ks[11], (1, H), jnp.float32),
        # LayerNorm affine params (PyTorch defaults: ones / zeros)
        'g1': jnp.ones((1, H), jnp.float32), 'be1': jnp.zeros((1, H), jnp.float32),
        'g2': jnp.ones((1, H), jnp.float32), 'be2': jnp.zeros((1, H), jnp.float32),
        'g3': jnp.ones((1, H), jnp.float32), 'be3': jnp.zeros((1, H), jnp.float32),
    }


def pack_params(p):
    """One-time (outside jit) packing: fused QKV/KV, bf16 matmul weights, and all
    (1,H)-sized vectors in a single (7,H) f32 slab."""
    bf = lambda a: a.astype(jnp.bfloat16)
    return {
        'wqkv1': bf(jnp.concatenate([p['wq1'], p['wk1'], p['wv1']], axis=1)),  # (H,3H)
        'wo1':   bf(p['wo1']),
        'wq2':   bf(p['wq2']),
        'wkv2':  bf(jnp.concatenate([p['wk2'], p['wv2']], axis=1)),            # (H,2H)
        'wo2':   bf(p['wo2']),
        'w1':    bf(p['w1']),
        'w2':    bf(p['w2']),
        'b1':    p['b1'].astype(jnp.float32),                                  # (1,F)
        'lnb':   jnp.concatenate([p['g1'], p['be1'], p['g2'], p['be2'],
                                  p['g3'], p['be3'], p['b2']],
                                 axis=0).astype(jnp.float32),                  # (7,H)
    }


# ---------------------------------------------------------------------------
# pure-JAX f32 reference (same math as the PyTorch module, no Pallas)
# ---------------------------------------------------------------------------
def _mha_ref(q, k, v, mask, wo, num_heads):
    S, H = q.shape
    d = H // num_heads
    out = jnp.zeros((S, H), jnp.float32)
    for h in range(num_heads):
        sl = slice(h * d, (h + 1) * d)
        scores = (q[:, sl] @ k[:, sl].T) / math.sqrt(d)
        scores = jnp.where(mask, scores, -1e6)
        scores = scores - jnp.max(scores, axis=-1, keepdims=True)
        p = jnp.exp(scores)
        p = p / jnp.sum(p, axis=-1, keepdims=True)
        out = out + (p @ v[:, sl]) @ wo[sl, :]
    return out


def reference(params, X, enc_outputs, enc_valid_lens, num_heads):
    B, S, H = X.shape
    Se = enc_outputs.shape[1]
    outs = []
    for b in range(B):
        x, enc = X[b], enc_outputs[b]
        q = x @ params['wq1']; k = x @ params['wk1']; v = x @ params['wv1']
        qi = jax.lax.broadcasted_iota(jnp.int32, (S, S), 0)
        ki = jax.lax.broadcasted_iota(jnp.int32, (S, S), 1)
        x2 = _mha_ref(q, k, v, ki <= qi, params['wo1'], num_heads)
        y = _layer_norm(x + x2, params['g1'], params['be1'])

        q = y @ params['wq2']; k = enc @ params['wk2']; v = enc @ params['wv2']
        kj = jax.lax.broadcasted_iota(jnp.int32, (S, Se), 1)
        y2 = _mha_ref(q, k, v, kj < enc_valid_lens[b], params['wo2'], num_heads)
        z = _layer_norm(y + y2, params['g2'], params['be2'])

        h = jnp.maximum(z @ params['w1'] + params['b1'], 0.0)
        f = h @ params['w2'] + params['b2']
        outs.append(_layer_norm(z + f, params['g3'], params['be3']))
    return jnp.stack(outs, axis=0)


if __name__ == "__main__":
    key = jax.random.PRNGKey(0)
    B, S, Se = 2, 8, 8
    num_hiddens, ffn_num_hiddens, num_heads = 32, 64, 4
    k_x, k_enc, k_p = jax.random.split(key, 3)

    params = init_params(k_p, num_hiddens, ffn_num_hiddens)
    packed = pack_params(params)          # one-time packing / bf16 cast
    X = jax.random.normal(k_x, (B, S, num_hiddens), jnp.float32)
    enc_outputs = jax.random.normal(k_enc, (B, Se, num_hiddens), jnp.float32)
    enc_valid_lens = jnp.array([5, 8], dtype=jnp.int32)

    # state = [enc_outputs, enc_valid_lens, [None] * num_layers]  (block i = 0)
    state = [enc_outputs, enc_valid_lens, [None]]

    out, state = decoder_block_forward(packed, 0, num_heads, X, state)
    out = jax.block_until_ready(out)

    ref = reference(params, X, enc_outputs, enc_valid_lens, num_heads)
    # Tolerance accommodates bf16 matmul operands (f32 accumulation) and the
    # approx EUP reciprocal in the kernel softmax vs. the pure-f32 reference.
    np.testing.assert_allclose(np.asarray(out), np.asarray(ref),
                               rtol=4e-2, atol=4e-2)
    assert state[2][0].shape == X.shape   # kv-cache updated with key_values == X
    print("KERNEL_OK")
</pallas_src>

<mosaic_0001>
module attributes {stable_mosaic.version = 11 : i64} {
  func.func @_decoder_block_kernel(%arg0: i32, %arg1: memref<1x8x32xf32, #tpu.memory_space<vmem>>, %arg2: memref<1x8x32xf32, #tpu.memory_space<vmem>>, %arg3: memref<1x1x8xf32, #tpu.memory_space<vmem>>, %arg4: memref<32x96xbf16, #tpu.memory_space<vmem>>, %arg5: memref<32x32xbf16, #tpu.memory_space<vmem>>, %arg6: memref<32x32xbf16, #tpu.memory_space<vmem>>, %arg7: memref<32x64xbf16, #tpu.memory_space<vmem>>, %arg8: memref<32x32xbf16, #tpu.memory_space<vmem>>, %arg9: memref<32x64xbf16, #tpu.memory_space<vmem>>, %arg10: memref<1x64xf32, #tpu.memory_space<vmem>>, %arg11: memref<64x32xbf16, #tpu.memory_space<vmem>>, %arg12: memref<7x32xf32, #tpu.memory_space<vmem>>, %arg13: memref<1x8x32xf32, #tpu.memory_space<vmem>>) attributes {dimension_semantics = [#tpu.dimension_semantics<parallel>], iteration_bounds = array<i64: 2>, scalar_prefetch = 0 : i64, scratch_operands = 0 : i64, tpu.core_type = #tpu.core_type<tc>, window_params = [{transform_indices = @transform_0, window_bounds = array<i64: 1, 8, 32>}, {transform_indices = @transform_1, window_bounds = array<i64: 1, 8, 32>}, {transform_indices = @transform_2, window_bounds = array<i64: 1, 1, 8>}, {pipeline_mode = #tpu.pipeline_mode<synchronous>, transform_indices = @transform_3, window_bounds = array<i64: 32, 96>}, {pipeline_mode = #tpu.pipeline_mode<synchronous>, transform_indices = @transform_4, window_bounds = array<i64: 32, 32>}, {pipeline_mode = #tpu.pipeline_mode<synchronous>, transform_indices = @transform_5, window_bounds = array<i64: 32, 32>}, {pipeline_mode = #tpu.pipeline_mode<synchronous>, transform_indices = @transform_6, window_bounds = array<i64: 32, 64>}, {pipeline_mode = #tpu.pipeline_mode<synchronous>, transform_indices = @transform_7, window_bounds = array<i64: 32, 32>}, {pipeline_mode = #tpu.pipeline_mode<synchronous>, transform_indices = @transform_8, window_bounds = array<i64: 32, 64>}, {pipeline_mode = #tpu.pipeline_mode<synchronous>, transform_indices = @transform_9, window_bounds = array<i64: 1, 64>}, {pipeline_mode = #tpu.pipeline_mode<synchronous>, transform_indices = @transform_10, window_bounds = array<i64: 64, 32>}, {pipeline_mode = #tpu.pipeline_mode<synchronous>, transform_indices = @transform_11, window_bounds = array<i64: 7, 32>}, {transform_indices = @transform_12, window_bounds = array<i64: 1, 8, 32>}]} {
    %c0 = arith.constant 0 : index
    %c0_0 = arith.constant 0 : index
    %c0_1 = arith.constant 0 : index
    %0 = vector.load %arg1[%c0, %c0_0, %c0_1] : memref<1x8x32xf32, #tpu.memory_space<vmem>>, vector<1x8x32xf32>
    %1 = vector.shape_cast %0 : vector<1x8x32xf32> to vector<8x32xf32>
    %c0_2 = arith.constant 0 : index
    %c0_3 = arith.constant 0 : index
    %c0_4 = arith.constant 0 : index
    %2 = vector.load %arg2[%c0_2, %c0_3, %c0_4] : memref<1x8x32xf32, #tpu.memory_space<vmem>>, vector<1x8x32xf32>
    %3 = vector.shape_cast %2 : vector<1x8x32xf32> to vector<8x32xf32>
    %c0_5 = arith.constant 0 : index
    %c0_6 = arith.constant 0 : index
    %4 = vector.load %arg12[%c0_5, %c0_6] : memref<7x32xf32, #tpu.memory_space<vmem>>, vector<7x32xf32>
    %5 = arith.truncf %1 : vector<8x32xf32> to vector<8x32xbf16>
    %c0_7 = arith.constant 0 : index
    %c0_8 = arith.constant 0 : index
    %6 = vector.load %arg4[%c0_7, %c0_8] : memref<32x96xbf16, #tpu.memory_space<vmem>>, vector<32x96xbf16>
    %cst = arith.constant dense<0.000000e+00> : vector<8x96xf32>
    %7 = tpu.matmul %5, %6, %cst {dimension_numbers = #tpu.dot_dimension_numbers<[1], [0], [0], [1], [0, 0, 1, 1], [], []>} : vector<8x32xbf16>, vector<32x96xbf16>, vector<8x96xf32> -> vector<8x96xf32>
    %8 = tpu.iota {dimensions = array<i32: 0>} : vector<8x8xi32>
    %9 = tpu.iota {dimensions = array<i32: 1>} : vector<8x8xi32>
    %10 = arith.cmpi sle, %9, %8 : vector<8x8xi32>
    %cst_9 = arith.constant 0.000000e+00 : f32
    %cst_10 = arith.constant -1.000000e+06 : f32
    %11 = vector.broadcast %cst_9 : f32 to vector<8x8xf32>
    %12 = vector.broadcast %cst_10 : f32 to vector<8x8xf32>
    %13 = arith.select %10, %11, %12 : vector<8x8xi1>, vector<8x8xf32>
    %14 = vector.extract_strided_slice %7 {offsets = [0, 0], sizes = [8, 32], strides = [1, 1]} : vector<8x96xf32> to vector<8x32xf32>
    %15 = vector.extract_strided_slice %7 {offsets = [0, 32], sizes = [8, 32], strides = [1, 1]} : vector<8x96xf32> to vector<8x32xf32>
    %16 = vector.extract_strided_slice %7 {offsets = [0, 64], sizes = [8, 32], strides = [1, 1]} : vector<8x96xf32> to vector<8x32xf32>
    %17 = vector.shape_cast %13 : vector<8x8xf32> to vector<1x8x8xf32>
    %18 = vector.shape_cast %14 : vector<8x32xf32> to vector<8x4x8xf32>
    %19 = arith.truncf %18 : vector<8x4x8xf32> to vector<8x4x8xbf16>
    %20 = vector.shape_cast %15 : vector<8x32xf32> to vector<8x4x8xf32>
    %21 = arith.truncf %20 : vector<8x4x8xf32> to vector<8x4x8xbf16>
    %22 = vector.shape_cast %16 : vector<8x32xf32> to vector<8x4x8xf32>
    %23 = arith.truncf %22 : vector<8x4x8xf32> to vector<8x4x8xbf16>
    "tpu.trace_start"() <{level = 10 : i32, message = "qhd,khd->hqk"}> : () -> ()
    %cst_11 = arith.constant dense<0.000000e+00> : vector<4x8x8xf32>
    %24 = tpu.matmul %19, %21, %cst_11 {dimension_numbers = #tpu.dot_dimension_numbers<[2], [2], [0], [0], [0, 1, 0, 0, 1, 0], [1], [1]>} : vector<8x4x8xbf16>, vector<8x4x8xbf16>, vector<4x8x8xf32> -> vector<4x8x8xf32>
    "tpu.trace_stop"() : () -> ()
    %cst_12 = arith.constant 0.353553385 : f32
    %25 = vector.broadcast %cst_12 : f32 to vector<4x8x8xf32>
    %26 = arith.mulf %24, %25 : vector<4x8x8xf32>
    %27 = vector.broadcast %17 : vector<1x8x8xf32> to vector<4x8x8xf32>
    %28 = arith.addf %26, %27 : vector<4x8x8xf32>
    %cst_13 = arith.constant dense<0xFF800000> : vector<4x8xf32>
    %29 = vector.multi_reduction <maximumf>, %28, %cst_13 [2] : vector<4x8x8xf32> to vector<4x8xf32>
    %30 = vector.shape_cast %29 : vector<4x8xf32> to vector<4x8x1xf32>
    %31 = vector.broadcast %30 : vector<4x8x1xf32> to vector<4x8x8xf32>
    %32 = arith.subf %28, %31 : vector<4x8x8xf32>
    %33 = math.exp %32 : vector<4x8x8xf32>
    %cst_14 = arith.constant dense<0.000000e+00> : vector<4x8xf32>
    %34 = vector.multi_reduction <add>, %33, %cst_14 [2] : vector<4x8x8xf32> to vector<4x8xf32>
    %35 = vector.shape_cast %34 : vector<4x8xf32> to vector<4x8x1xf32>
    %36 = tpu.reciprocal %35 {approx = true} : vector<4x8x1xf32> -> vector<4x8x1xf32>
    %37 = vector.broadcast %36 : vector<4x8x1xf32> to vector<4x8x8xf32>
    %38 = arith.mulf %33, %37 : vector<4x8x8xf32>
    %39 = arith.truncf %38 : vector<4x8x8xf32> to vector<4x8x8xbf16>
    "tpu.trace_start"() <{level = 10 : i32, message = "hqk,khd->qhd"}> : () -> ()
    %cst_15 = arith.constant dense<0.000000e+00> : vector<4x8x8xf32>
    %40 = tpu.matmul %23, %39, %cst_15 {dimension_numbers = #tpu.dot_dimension_numbers<[0], [2], [2], [1], [0, 1, 0, 2, 1, 1], [1], [0]>} : vector<8x4x8xbf16>, vector<4x8x8xbf16>, vector<4x8x8xf32> -> vector<4x8x8xf32>
    %41 = tpu.transpose %40, [2, 0, 1] : vector<4x8x8xf32> -> vector<8x4x8xf32>
    "tpu.trace_stop"() : () -> ()
    %42 = vector.shape_cast %41 : vector<8x4x8xf32> to vector<8x32xf32>
    %43 = arith.truncf %42 : vector<8x32xf32> to vector<8x32xbf16>
    %c0_16 = arith.constant 0 : index
    %c0_17 = arith.constant 0 : index
    %44 = vector.load %arg5[%c0_16, %c0_17] : memref<32x32xbf16, #tpu.memory_space<vmem>>, vector<32x32xbf16>
    %cst_18 = arith.constant dense<0.000000e+00> : vector<8x32xf32>
    %45 = tpu.matmul %43, %44, %cst_18 {dimension_numbers = #tpu.dot_dimension_numbers<[1], [0], [0], [1], [0, 0, 1, 1], [], []>} : vector<8x32xbf16>, vector<32x32xbf16>, vector<8x32xf32> -> vector<8x32xf32>
    %46 = arith.addf %1, %45 : vector<8x32xf32>
    %47 = vector.extract_strided_slice %4 {offsets = [0, 0], sizes = [1, 32], strides = [1, 1]} : vector<7x32xf32> to vector<1x32xf32>
    %48 = vector.extract_strided_slice %4 {offsets = [1, 0], sizes = [1, 32], strides = [1, 1]} : vector<7x32xf32> to vector<1x32xf32>
    %cst_19 = arith.constant dense<0.000000e+00> : vector<8xf32>
    %49 = vector.multi_reduction <add>, %46, %cst_19 [1] : vector<8x32xf32> to vector<8xf32>
    %50 = vector.shape_cast %49 : vector<8xf32> to vector<8x1xf32>
    %cst_20 = arith.constant 3.200000e+01 : f32
    %51 = vector.broadcast %cst_20 : f32 to vector<8x1xf32>
    %52 = arith.divf %50, %51 : vector<8x1xf32>
    %53 = vector.broadcast %52 : vector<8x1xf32> to vector<8x32xf32>
    %54 = arith.subf %46, %53 : vector<8x32xf32>
    %55 = arith.mulf %54, %54 : vector<8x32xf32>
    %cst_21 = arith.constant dense<0.000000e+00> : vector<8xf32>
    %56 = vector.multi_reduction <add>, %55, %cst_21 [1] : vector<8x32xf32> to vector<8xf32>
    %57 = vector.shape_cast %56 : vector<8xf32> to vector<8x1xf32>
    %cst_22 = arith.constant 3.200000e+01 : f32
    %58 = vector.broadcast %cst_22 : f32 to vector<8x1xf32>
    %59 = arith.divf %57, %58 : vector<8x1xf32>
    %60 = vector.broadcast %52 : vector<8x1xf32> to vector<8x32xf32>
    %61 = arith.subf %46, %60 : vector<8x32xf32>
    %cst_23 = arith.constant 9.99999974E-6 : f32
    %62 = vector.broadcast %cst_23 : f32 to vector<8x1xf32>
    %63 = arith.addf %59, %62 : vector<8x1xf32>
    %64 = math.rsqrt %63 : vector<8x1xf32>
    %65 = vector.broadcast %64 : vector<8x1xf32> to vector<8x32xf32>
    %66 = arith.mulf %61, %65 : vector<8x32xf32>
    %67 = vector.broadcast %47 : vector<1x32xf32> to vector<8x32xf32>
    %68 = arith.mulf %66, %67 : vector<8x32xf32>
    %69 = vector.broadcast %48 : vector<1x32xf32> to vector<8x32xf32>
    %70 = arith.addf %68, %69 : vector<8x32xf32>
    %71 = arith.truncf %70 : vector<8x32xf32> to vector<8x32xbf16>
    %c0_24 = arith.constant 0 : index
    %c0_25 = arith.constant 0 : index
    %72 = vector.load %arg6[%c0_24, %c0_25] : memref<32x32xbf16, #tpu.memory_space<vmem>>, vector<32x32xbf16>
    %cst_26 = arith.constant dense<0.000000e+00> : vector<8x32xf32>
    %73 = tpu.matmul %71, %72, %cst_26 {dimension_numbers = #tpu.dot_dimension_numbers<[1], [0], [0], [1], [0, 0, 1, 1], [], []>} : vector<8x32xbf16>, vector<32x32xbf16>, vector<8x32xf32> -> vector<8x32xf32>
    %74 = arith.truncf %3 : vector<8x32xf32> to vector<8x32xbf16>
    %c0_27 = arith.constant 0 : index
    %c0_28 = arith.constant 0 : index
    %75 = vector.load %arg7[%c0_27, %c0_28] : memref<32x64xbf16, #tpu.memory_space<vmem>>, vector<32x64xbf16>
    %cst_29 = arith.constant dense<0.000000e+00> : vector<8x64xf32>
    %76 = tpu.matmul %74, %75, %cst_29 {dimension_numbers = #tpu.dot_dimension_numbers<[1], [0], [0], [1], [0, 0, 1, 1], [], []>} : vector<8x32xbf16>, vector<32x64xbf16>, vector<8x64xf32> -> vector<8x64xf32>
    %c0_30 = arith.constant 0 : index
    %c0_31 = arith.constant 0 : index
    %c0_32 = arith.constant 0 : index
    %77 = vector.load %arg3[%c0_30, %c0_31, %c0_32] : memref<1x1x8xf32, #tpu.memory_space<vmem>>, vector<1x1x8xf32>
    %78 = vector.shape_cast %77 : vector<1x1x8xf32> to vector<1x8xf32>
    %79 = vector.shape_cast %78 : vector<1x8xf32> to vector<1x1x8xf32>
    %80 = vector.extract_strided_slice %76 {offsets = [0, 0], sizes = [8, 32], strides = [1, 1]} : vector<8x64xf32> to vector<8x32xf32>
    %81 = vector.extract_strided_slice %76 {offsets = [0, 32], sizes = [8, 32], strides = [1, 1]} : vector<8x64xf32> to vector<8x32xf32>
    %82 = vector.shape_cast %73 : vector<8x32xf32> to vector<8x4x8xf32>
    %83 = arith.truncf %82 : vector<8x4x8xf32> to vector<8x4x8xbf16>
    %84 = vector.shape_cast %80 : vector<8x32xf32> to vector<8x4x8xf32>
    %85 = arith.truncf %84 : vector<8x4x8xf32> to vector<8x4x8xbf16>
    %86 = vector.shape_cast %81 : vector<8x32xf32> to vector<8x4x8xf32>
    %87 = arith.truncf %86 : vector<8x4x8xf32> to vector<8x4x8xbf16>
    "tpu.trace_start"() <{level = 10 : i32, message = "qhd,khd->hqk"}> : () -> ()
    %cst_33 = arith.constant dense<0.000000e+00> : vector<4x8x8xf32>
    %88 = tpu.matmul %83, %85, %cst_33 {dimension_numbers = #tpu.dot_dimension_numbers<[2], [2], [0], [0], [0, 1, 0, 0, 1, 0], [1], [1]>} : vector<8x4x8xbf16>, vector<8x4x8xbf16>, vector<4x8x8xf32> -> vector<4x8x8xf32>
    "tpu.trace_stop"() : () -> ()
    %cst_34 = arith.constant 0.353553385 : f32
    %89 = vector.broadcast %cst_34 : f32 to vector<4x8x8xf32>
    %90 = arith.mulf %88, %89 : vector<4x8x8xf32>
    %91 = vector.broadcast %79 : vector<1x1x8xf32> to vector<4x8x8xf32>
    %92 = arith.addf %90, %91 : vector<4x8x8xf32>
    %cst_35 = arith.constant dense<0xFF800000> : vector<4x8xf32>
    %93 = vector.multi_reduction <maximumf>, %92, %cst_35 [2] : vector<4x8x8xf32> to vector<4x8xf32>
    %94 = vector.shape_cast %93 : vector<4x8xf32> to vector<4x8x1xf32>
    %95 = vector.broadcast %94 : vector<4x8x1xf32> to vector<4x8x8xf32>
    %96 = arith.subf %92, %95 : vector<4x8x8xf32>
    %97 = math.exp %96 : vector<4x8x8xf32>
    %cst_36 = arith.constant dense<0.000000e+00> : vector<4x8xf32>
    %98 = vector.multi_reduction <add>, %97, %cst_36 [2] : vector<4x8x8xf32> to vector<4x8xf32>
    %99 = vector.shape_cast %98 : vector<4x8xf32> to vector<4x8x1xf32>
    %100 = tpu.reciprocal %99 {approx = true} : vector<4x8x1xf32> -> vector<4x8x1xf32>
    %101 = vector.broadcast %100 : vector<4x8x1xf32> to vector<4x8x8xf32>
    %102 = arith.mulf %97, %101 : vector<4x8x8xf32>
    %103 = arith.truncf %102 : vector<4x8x8xf32> to vector<4x8x8xbf16>
    "tpu.trace_start"() <{level = 10 : i32, message = "hqk,khd->qhd"}> : () -> ()
    %cst_37 = arith.constant dense<0.000000e+00> : vector<4x8x8xf32>
    %104 = tpu.matmul %87, %103, %cst_37 {dimension_numbers = #tpu.dot_dimension_numbers<[0], [2], [2], [1], [0, 1, 0, 2, 1, 1], [1], [0]>} : vector<8x4x8xbf16>, vector<4x8x8xbf16>, vector<4x8x8xf32> -> vector<4x8x8xf32>
    %105 = tpu.transpose %104, [2, 0, 1] : vector<4x8x8xf32> -> vector<8x4x8xf32>
    "tpu.trace_stop"() : () -> ()
    %106 = vector.shape_cast %105 : vector<8x4x8xf32> to vector<8x32xf32>
    %107 = arith.truncf %106 : vector<8x32xf32> to vector<8x32xbf16>
    %c0_38 = arith.constant 0 : index
    %c0_39 = arith.constant 0 : index
    %108 = vector.load %arg8[%c0_38, %c0_39] : memref<32x32xbf16, #tpu.memory_space<vmem>>, vector<32x32xbf16>
    %cst_40 = arith.constant dense<0.000000e+00> : vector<8x32xf32>
    %109 = tpu.matmul %107, %108, %cst_40 {dimension_numbers = #tpu.dot_dimension_numbers<[1], [0], [0], [1], [0, 0, 1, 1], [], []>} : vector<8x32xbf16>, vector<32x32xbf16>, vector<8x32xf32> -> vector<8x32xf32>
    %110 = arith.addf %70, %109 : vector<8x32xf32>
    %111 = vector.extract_strided_slice %4 {offsets = [2, 0], sizes = [1, 32], strides = [1, 1]} : vector<7x32xf32> to vector<1x32xf32>
    %112 = vector.extract_strided_slice %4 {offsets = [3, 0], sizes = [1, 32], strides = [1, 1]} : vector<7x32xf32> to vector<1x32xf32>
    %cst_41 = arith.constant dense<0.000000e+00> : vector<8xf32>
    %113 = vector.multi_reduction <add>, %110, %cst_41 [1] : vector<8x32xf32> to vector<8xf32>
    %114 = vector.shape_cast %113 : vector<8xf32> to vector<8x1xf32>
    %cst_42 = arith.constant 3.200000e+01 : f32
    %115 = vector.broadcast %cst_42 : f32 to vector<8x1xf32>
    %116 = arith.divf %114, %115 : vector<8x1xf32>
    %117 = vector.broadcast %116 : vector<8x1xf32> to vector<8x32xf32>
    %118 = arith.subf %110, %117 : vector<8x32xf32>
    %119 = arith.mulf %118, %118 : vector<8x32xf32>
    %cst_43 = arith.constant dense<0.000000e+00> : vector<8xf32>
    %120 = vector.multi_reduction <add>, %119, %cst_43 [1] : vector<8x32xf32> to vector<8xf32>
    %121 = vector.shape_cast %120 : vector<8xf32> to vector<8x1xf32>
    %cst_44 = arith.constant 3.200000e+01 : f32
    %122 = vector.broadcast %cst_44 : f32 to vector<8x1xf32>
    %123 = arith.divf %121, %122 : vector<8x1xf32>
    %124 = vector.broadcast %116 : vector<8x1xf32> to vector<8x32xf32>
    %125 = arith.subf %110, %124 : vector<8x32xf32>
    %cst_45 = arith.constant 9.99999974E-6 : f32
    %126 = vector.broadcast %cst_45 : f32 to vector<8x1xf32>
    %127 = arith.addf %123, %126 : vector<8x1xf32>
    %128 = math.rsqrt %127 : vector<8x1xf32>
    %129 = vector.broadcast %128 : vector<8x1xf32> to vector<8x32xf32>
    %130 = arith.mulf %125, %129 : vector<8x32xf32>
    %131 = vector.broadcast %111 : vector<1x32xf32> to vector<8x32xf32>
    %132 = arith.mulf %130, %131 : vector<8x32xf32>
    %133 = vector.broadcast %112 : vector<1x32xf32> to vector<8x32xf32>
    %134 = arith.addf %132, %133 : vector<8x32xf32>
    %135 = arith.truncf %134 : vector<8x32xf32> to vector<8x32xbf16>
    %c0_46 = arith.constant 0 : index
    %c0_47 = arith.constant 0 : index
    %136 = vector.load %arg9[%c0_46, %c0_47] : memref<32x64xbf16, #tpu.memory_space<vmem>>, vector<32x64xbf16>
    %cst_48 = arith.constant dense<0.000000e+00> : vector<8x64xf32>
    %137 = tpu.matmul %135, %136, %cst_48 {dimension_numbers = #tpu.dot_dimension_numbers<[1], [0], [0], [1], [0, 0, 1, 1], [], []>} : vector<8x32xbf16>, vector<32x64xbf16>, vector<8x64xf32> -> vector<8x64xf32>
    %c0_49 = arith.constant 0 : index
    %c0_50 = arith.constant 0 : index
    %138 = vector.load %arg10[%c0_49, %c0_50] : memref<1x64xf32, #tpu.memory_space<vmem>>, vector<1x64xf32>
    %139 = vector.broadcast %138 : vector<1x64xf32> to vector<8x64xf32>
    %140 = arith.addf %137, %139 : vector<8x64xf32>
    %cst_51 = arith.constant 0.000000e+00 : f32
    %141 = vector.broadcast %cst_51 : f32 to vector<8x64xf32>
    %142 = arith.maximumf %140, %141 : vector<8x64xf32>
    %143 = arith.truncf %142 : vector<8x64xf32> to vector<8x64xbf16>
    %c0_52 = arith.constant 0 : index
    %c0_53 = arith.constant 0 : index
    %144 = vector.load %arg11[%c0_52, %c0_53] : memref<64x32xbf16, #tpu.memory_space<vmem>>, vector<64x32xbf16>
    %cst_54 = arith.constant dense<0.000000e+00> : vector<8x32xf32>
    %145 = tpu.matmul %143, %144, %cst_54 {dimension_numbers = #tpu.dot_dimension_numbers<[1], [0], [0], [1], [0, 0, 1, 1], [], []>} : vector<8x64xbf16>, vector<64x32xbf16>, vector<8x32xf32> -> vector<8x32xf32>
    %146 = vector.extract_strided_slice %4 {offsets = [6, 0], sizes = [1, 32], strides = [1, 1]} : vector<7x32xf32> to vector<1x32xf32>
    %147 = vector.broadcast %146 : vector<1x32xf32> to vector<8x32xf32>
    %148 = arith.addf %145, %147 : vector<8x32xf32>
    %149 = arith.addf %134, %148 : vector<8x32xf32>
    %150 = vector.extract_strided_slice %4 {offsets = [4, 0], sizes = [1, 32], strides = [1, 1]} : vector<7x32xf32> to vector<1x32xf32>
    %151 = vector.extract_strided_slice %4 {offsets = [5, 0], sizes = [1, 32], strides = [1, 1]} : vector<7x32xf32> to vector<1x32xf32>
    %cst_55 = arith.constant dense<0.000000e+00> : vector<8xf32>
    %152 = vector.multi_reduction <add>, %149, %cst_55 [1] : vector<8x32xf32> to vector<8xf32>
    %153 = vector.shape_cast %152 : vector<8xf32> to vector<8x1xf32>
    %cst_56 = arith.constant 3.200000e+01 : f32
    %154 = vector.broadcast %cst_56 : f32 to vector<8x1xf32>
    %155 = arith.divf %153, %154 : vector<8x1xf32>
    %156 = vector.broadcast %155 : vector<8x1xf32> to vector<8x32xf32>
    %157 = arith.subf %149, %156 : vector<8x32xf32>
    %158 = arith.mulf %157, %157 : vector<8x32xf32>
    %cst_57 = arith.constant dense<0.000000e+00> : vector<8xf32>
    %159 = vector.multi_reduction <add>, %158, %cst_57 [1] : vector<8x32xf32> to vector<8xf32>
    %160 = vector.shape_cast %159 : vector<8xf32> to vector<8x1xf32>
    %cst_58 = arith.constant 3.200000e+01 : f32
    %161 = vector.broadcast %cst_58 : f32 to vector<8x1xf32>
    %162 = arith.divf %160, %161 : vector<8x1xf32>
    %163 = vector.broadcast %155 : vector<8x1xf32> to vector<8x32xf32>
    %164 = arith.subf %149, %163 : vector<8x32xf32>
    %cst_59 = arith.constant 9.99999974E-6 : f32
    %165 = vector.broadcast %cst_59 : f32 to vector<8x1xf32>
    %166 = arith.addf %162, %165 : vector<8x1xf32>
    %167 = math.rsqrt %166 : vector<8x1xf32>
    %168 = vector.broadcast %167 : vector<8x1xf32> to vector<8x32xf32>
    %169 = arith.mulf %164, %168 : vector<8x32xf32>
    %170 = vector.broadcast %150 : vector<1x32xf32> to vector<8x32xf32>
    %171 = arith.mulf %169, %170 : vector<8x32xf32>
    %172 = vector.broadcast %151 : vector<1x32xf32> to vector<8x32xf32>
    %173 = arith.addf %171, %172 : vector<8x32xf32>
    %c0_60 = arith.constant 0 : index
    %c0_61 = arith.constant 0 : index
    %c0_62 = arith.constant 0 : index
    %174 = vector.load %arg13[%c0_60, %c0_61, %c0_62] : memref<1x8x32xf32, #tpu.memory_space<vmem>>, vector<1x8x32xf32>
    %175 = vector.shape_cast %174 : vector<1x8x32xf32> to vector<8x32xf32>
    %176 = vector.shape_cast %173 : vector<8x32xf32> to vector<1x8x32xf32>
    tpu.vector_store %arg13[%c0_60, %c0_61, %c0_62], %176 {strides = array<i32>} : memref<1x8x32xf32, #tpu.memory_space<vmem>>, vector<1x8x32xf32>,
    return
  }
  func.func @transform_0(%arg0: i32) -> (i32, i32, i32) {
    %c0_i32 = arith.constant 0 : i32
    %c0_i32_0 = arith.constant 0 : i32
    %c0_i32_1 = arith.constant 0 : i32
    return %arg0, %c0_i32, %c0_i32_0 : i32, i32, i32
  }
  func.func @transform_1(%arg0: i32) -> (i32, i32, i32) {
    %c0_i32 = arith.constant 0 : i32
    %c0_i32_0 = arith.constant 0 : i32
    %c0_i32_1 = arith.constant 0 : i32
    return %arg0, %c0_i32, %c0_i32_0 : i32, i32, i32
  }
  func.func @transform_2(%arg0: i32) -> (i32, i32, i32) {
    %c0_i32 = arith.constant 0 : i32
    %c0_i32_0 = arith.constant 0 : i32
    %c0_i32_1 = arith.constant 0 : i32
    return %arg0, %c0_i32, %c0_i32_0 : i32, i32, i32
  }
  func.func @transform_3(%arg0: i32) -> (i32, i32) {
    %c0_i32 = arith.constant 0 : i32
    %c0_i32_0 = arith.constant 0 : i32
    %c0_i32_1 = arith.constant 0 : i32
    return %c0_i32, %c0_i32_0 : i32, i32
  }
  func.func @transform_4(%arg0: i32) -> (i32, i32) {
    %c0_i32 = arith.constant 0 : i32
    %c0_i32_0 = arith.constant 0 : i32
    %c0_i32_1 = arith.constant 0 : i32
    return %c0_i32, %c0_i32_0 : i32, i32
  }
  func.func @transform_5(%arg0: i32) -> (i32, i32) {
    %c0_i32 = arith.constant 0 : i32
    %c0_i32_0 = arith.constant 0 : i32
    %c0_i32_1 = arith.constant 0 : i32
    return %c0_i32, %c0_i32_0 : i32, i32
  }
  func.func @transform_6(%arg0: i32) -> (i32, i32) {
    %c0_i32 = arith.constant 0 : i32
    %c0_i32_0 = arith.constant 0 : i32
    %c0_i32_1 = arith.constant 0 : i32
    return %c0_i32, %c0_i32_0 : i32, i32
  }
  func.func @transform_7(%arg0: i32) -> (i32, i32) {
    %c0_i32 = arith.constant 0 : i32
    %c0_i32_0 = arith.constant 0 : i32
    %c0_i32_1 = arith.constant 0 : i32
    return %c0_i32, %c0_i32_0 : i32, i32
  }
  func.func @transform_8(%arg0: i32) -> (i32, i32) {
    %c0_i32 = arith.constant 0 : i32
    %c0_i32_0 = arith.constant 0 : i32
    %c0_i32_1 = arith.constant 0 : i32
    return %c0_i32, %c0_i32_0 : i32, i32
  }
  func.func @transform_9(%arg0: i32) -> (i32, i32) {
    %c0_i32 = arith.constant 0 : i32
    %c0_i32_0 = arith.constant 0 : i32
    %c0_i32_1 = arith.constant 0 : i32
    return %c0_i32, %c0_i32_0 : i32, i32
  }
  func.func @transform_10(%arg0: i32) -> (i32, i32) {
    %c0_i32 = arith.constant 0 : i32
    %c0_i32_0 = arith.constant 0 : i32
    %c0_i32_1 = arith.constant 0 : i32
    return %c0_i32, %c0_i32_0 : i32, i32
  }
  func.func @transform_11(%arg0: i32) -> (i32, i32) {
    %c0_i32 = arith.constant 0 : i32
    %c0_i32_0 = arith.constant 0 : i32
    %c0_i32_1 = arith.constant 0 : i32
    return %c0_i32, %c0_i32_0 : i32, i32
  }
  func.func @transform_12(%arg0: i32) -> (i32, i32, i32) {
    %c0_i32 = arith.constant 0 : i32
    %c0_i32_0 = arith.constant 0 : i32
    %c0_i32_1 = arith.constant 0 : i32
    return %arg0, %c0_i32, %c0_i32_0 : i32, i32, i32
  }
}

</mosaic_0001>

<llo_original>
// kernel: decoder_block_pallas.1
$region0: #{decoder_block_pallas.1}
  #allocation0 [shape = 'u32[]', space=smem, size = 0x4, offset = 0x4, fixed_abs, tag = 'smem constant byte address 0x4 - core index']
  #allocation1 [shape = 'u32[144,128]{1,0:T(1,128)}', space=vmem, size = 0x12000, scoped, tag = 'internal scratch']
  %s0 = inlined_call_operand.vmem [shape: f32[2,8,32], index: 0, kind: input, shape index: {}]
  %s1 = inlined_call_operand.vmem [shape: f32[2,8,32], index: 1, kind: input, shape index: {}]
  %s2 = inlined_call_operand.vmem [shape: f32[2,1,8], index: 2, kind: input, shape index: {}]
  %s3 = inlined_call_operand.vmem [shape: bf16[32,96], index: 3, kind: input, shape index: {}]
  %s4 = inlined_call_operand.vmem [shape: bf16[32,32], index: 4, kind: input, shape index: {}]
  %s5 = inlined_call_operand.hbm [shape: bf16[32,32], index: 5, kind: input, shape index: {}]
  %s6 = inlined_call_operand.hbm [shape: bf16[32,64], index: 6, kind: input, shape index: {}]
  %s7 = inlined_call_operand.hbm [shape: bf16[32,32], index: 7, kind: input, shape index: {}]
  %s8 = inlined_call_operand.hbm [shape: bf16[32,64], index: 8, kind: input, shape index: {}]
  %s9 = inlined_call_operand.vmem [shape: f32[1,64], index: 9, kind: input, shape index: {}]
  %s10 = inlined_call_operand.vmem [shape: bf16[64,32], index: 10, kind: input, shape index: {}]
  %s11 = inlined_call_operand.hbm [shape: f32[7,32], index: 11, kind: input, shape index: {}]
  %s12 = inlined_call_operand.hbm [shape: f32[2,8,32], index: 12, kind: output, shape index: {}]
  %s13 = sld [smem:[#allocation0]]
  $region101: #{decoder_block_pallas.1} parent=0
    _
  %s15 = ssub.s32 1, %s13
  %s16 = scalar_select 0, %s15, %s13
  $region1: #{decoder_block_pallas.1} parent=0
    #allocation2 [shape = 'u8[8192]{0}', space=vmem, size = 0x2000, scoped, tag = 'input window, operand 5, single buffered']
    #allocation3 [shape = 's32[2]{0}', space=sflag, size = 0x8, scoped, tag = 'scoped memory for decoder_block_pallas.1']
    #allocation4 [shape = 's32[2]{0}', space=sflag, size = 0x8, scoped, tag = 'scoped memory for decoder_block_pallas.1']
    #allocation5 [shape = 'u8[8192]{0}', space=vmem, size = 0x2000, scoped, tag = 'input window, operand 6, single buffered']
    #allocation6 [shape = 's32[1]{0}', space=sflag, size = 0x4, scoped, tag = 'scoped memory for decoder_block_pallas.1']
    #allocation7 [shape = 'u8[8192]{0}', space=vmem, size = 0x2000, scoped, tag = 'input window, operand 7, single buffered']
    #allocation8 [shape = 'u8[8192]{0}', space=vmem, size = 0x2000, scoped, tag = 'input window, operand 8, single buffered']
    #allocation9 [shape = 's32[1]{0}', space=sflag, size = 0x4, scoped, tag = 'scoped memory for decoder_block_pallas.1']
    #allocation10 [shape = 'u8[4096]{0}', space=vmem, size = 0x1000, scoped, tag = 'input window, operand 11, single buffered']
    #allocation11 [shape = 'u8[8192]{0}', space=vmem, size = 0x2000, scoped, tag = 'output window, operand 0']
    %17 = vsyncpa [#allocation3], 0
    %18 = vsyncpa [#allocation6], 0
    %19 = vsyncpa [#allocation9], 0
    %20 = vsyncpa [#allocation4], 0
    %s21 = scalar_lea.sflag [#allocation4], 1
    %22 = vsyncpa %s21, 0
    loop: start=0, step=1, limit=4
    $region2: #{decoder_block_pallas.1} parent=1 // loop_pre_header
      _
    $region3: #{decoder_block_pallas.1} parent=1 // loop_header
      %s24 = sphi 0, %s28
      %p25 = scmp.ge.s32.totalorder %s24, 4
      %s34 = sphi 0, %s36
      %s37 = sphi 0, %s34
      %s38 = sphi 0, %s37
      %s54 = sphi 0, %s38
      %s60 = sphi 0, %s62
      %s63 = sphi 0, %s60
      %s64 = sphi 0, %s63
      %s80 = sphi 0, %s64
      %s86 = sphi 0, %s88
      %s89 = sphi 0, %s86
      %s90 = sphi 0, %s89
      %s106 = sphi 0, %s90
      %s110 = sphi 0, %s110
      %s112 = sphi 0, %s110
      %s113 = sphi 0, %s112
      %s127 = sphi 0, %s113
      %s131 = sphi 0, %s131
      %s133 = sphi 0, %s131
      %s134 = sphi 0, %s133
      %s148 = sphi 0, %s134
      %s152 = sphi 0, %s152
      %s154 = sphi 0, %s152
      %s155 = sphi 0, %s154
      %s169 = sphi 0, %s155
      %s173 = sphi 0, %s173
      %s175 = sphi 0, %s173
      %s176 = sphi 0, %s175
      %s190 = sphi 0, %s176
      %s194 = sphi 0, %s194
      %s196 = sphi 0, %s194
      %s197 = sphi 0, %s196
      %s211 = sphi 0, %s197
      %s215 = sphi 0, %s215
      %s217 = sphi 0, %s215
      %s218 = sphi 0, %s217
      %s232 = sphi 0, %s218
      %s236 = sphi 0, %s236
      %s238 = sphi 0, %s236
      %s239 = sphi 0, %s238
      %s253 = sphi 0, %s239
      %s257 = sphi 0, %s257
      %s259 = sphi 0, %s257
      %s260 = sphi 0, %s259
      %s274 = sphi 0, %s260
      %s278 = sphi 0, %s278
      %s280 = sphi 0, %s278
      %s281 = sphi 0, %s280
      %s295 = sphi 0, %s281
      %s301 = sphi 0, %s303
      %s304 = sphi 0, %s301
      %s305 = sphi 0, %s304
      %s321 = sphi 0, %s305
    $region4: #{decoder_block_pallas.1} parent=1 // loop_header_branch
      %27 = sbr.rel (%p25) target = $region8
    $region5: #{decoder_block_pallas.1} parent=1 // loop_body
      %s29 = ssub.s32 %s24, 1
      %s30 = ssub.s32 %s24, 2
      %s31 = sadd.s32 %s24, 1
      %s32 = ssub.s32 %s24, %s31
      %p33 = scmp.eq.s32.totalorder %s32, 0
      %s35 = sadd.s32 %s34, 1
      %s36 = scalar_select %p33, %s34, %s35
      %p39 = pneg %p33
      %p40 = scmp.eq.s32.totalorder %s24, 1
      %p41 = por %p39, %p40
      %p42 = scmp.ne.s32.totalorder %s34, %s37
      %p43 = scmp.eq.s32.totalorder %s24, 0
      %p44 = por %p42, %p43
      %p45 = scmp.ne.s32.totalorder %s34, %s37
      %p46 = scmp.eq.s32.totalorder %s29, 1
      %p47 = por %p45, %p46
      %p48 = scmp.ne.s32.totalorder %s37, %s38
      %p49 = scmp.eq.s32.totalorder %s29, 0
      %p50 = por %p48, %p49
      %p51 = scmp.ne.s32.totalorder %s37, %s38
      %p52 = scmp.eq.s32.totalorder %s30, 1
      %p53 = por %p51, %p52
      %p55 = scmp.ne.s32.totalorder %s38, %s54
      %p56 = scmp.eq.s32.totalorder %s30, 0
      %p57 = por %p55, %p56
      %s58 = ssub.s32 %s24, %s31
      %p59 = scmp.eq.s32.totalorder %s58, 0
      %s61 = sadd.s32 %s60, 1
      %s62 = scalar_select %p59, %s60, %s61
      %p65 = pneg %p59
      %p66 = scmp.eq.s32.totalorder %s24, 1
      %p67 = por %p65, %p66
      %p68 = scmp.ne.s32.totalorder %s60, %s63
      %p69 = scmp.eq.s32.totalorder %s24, 0
      %p70 = por %p68, %p69
      %p71 = scmp.ne.s32.totalorder %s60, %s63
      %p72 = scmp.eq.s32.totalorder %s29, 1
      %p73 = por %p71, %p72
      %p74 = scmp.ne.s32.totalorder %s63, %s64
      %p75 = scmp.eq.s32.totalorder %s29, 0
      %p76 = por %p74, %p75
      %p77 = scmp.ne.s32.totalorder %s63, %s64
      %p78 = scmp.eq.s32.totalorder %s30, 1
      %p79 = por %p77, %p78
      %p81 = scmp.ne.s32.totalorder %s64, %s80
      %p82 = scmp.eq.s32.totalorder %s30, 0
      %p83 = por %p81, %p82
      %s84 = ssub.s32 %s24, %s31
      %p85 = scmp.eq.s32.totalorder %s84, 0
      %s87 = sadd.s32 %s86, 1
      %s88 = scalar_select %p85, %s86, %s87
      %p91 = pneg %p85
      %p92 = scmp.eq.s32.totalorder %s24, 1
      %p93 = por %p91, %p92
      %p94 = scmp.ne.s32.totalorder %s86, %s89
      %p95 = scmp.eq.s32.totalorder %s24, 0
      %p96 = por %p94, %p95
      %p97 = scmp.ne.s32.totalorder %s86, %s89
      %p98 = scmp.eq.s32.totalorder %s29, 1
      %p99 = por %p97, %p98
      %p100 = scmp.ne.s32.totalorder %s89, %s90
      %p101 = scmp.eq.s32.totalorder %s29, 0
      %p102 = por %p100, %p101
      %p103 = scmp.ne.s32.totalorder %s89, %s90
      %p104 = scmp.eq.s32.totalorder %s30, 1
      %p105 = por %p103, %p104
      %p107 = scmp.ne.s32.totalorder %s90, %s106
      %p108 = scmp.eq.s32.totalorder %s30, 0
      %p109 = por %p107, %p108
      %s111 = sadd.s32 %s110, 1
      %p114 = scmp.eq.s32.totalorder %s24, 1
      %p115 = scmp.ne.s32.totalorder %s110, %s112
      %p116 = scmp.eq.s32.totalorder %s24, 0
      %p117 = por %p115, %p116
      %p118 = scmp.ne.s32.totalorder %s110, %s112
      %p119 = scmp.eq.s32.totalorder %s29, 1
      %p120 = por %p118, %p119
      %p121 = scmp.ne.s32.totalorder %s112, %s113
      %p122 = scmp.eq.s32.totalorder %s29, 0
      %p123 = por %p121, %p122
      %p124 = scmp.ne.s32.totalorder %s112, %s113
      %p125 = scmp.eq.s32.totalorder %s30, 1
      %p126 = por %p124, %p125
      %p128 = scmp.ne.s32.totalorder %s113, %s127
      %p129 = scmp.eq.s32.totalorder %s30, 0
      %p130 = por %p128, %p129
      %s132 = sadd.s32 %s131, 1
      %p135 = scmp.eq.s32.totalorder %s24, 1
      %p136 = scmp.ne.s32.totalorder %s131, %s133
      %p137 = scmp.eq.s32.totalorder %s24, 0
      %p138 = por %p136, %p137
      %p139 = scmp.ne.s32.totalorder %s131, %s133
      %p140 = scmp.eq.s32.totalorder %s29, 1
      %p141 = por %p139, %p140
      %p142 = scmp.ne.s32.totalorder %s133, %s134
      %p143 = scmp.eq.s32.totalorder %s29, 0
      %p144 = por %p142, %p143
      %p145 = scmp.ne.s32.totalorder %s133, %s134
      %p146 = scmp.eq.s32.totalorder %s30, 1
      %p147 = por %p145, %p146
      %p149 = scmp.ne.s32.totalorder %s134, %s148
      %p150 = scmp.eq.s32.totalorder %s30, 0
      %p151 = por %p149, %p150
      %s153 = sadd.s32 %s152, 1
      %p156 = scmp.eq.s32.totalorder %s24, 1
      %p157 = scmp.ne.s32.totalorder %s152, %s154
      %p158 = scmp.eq.s32.totalorder %s24, 0
      %p159 = por %p157, %p158
      %p160 = scmp.ne.s32.totalorder %s152, %s154
      %p161 = scmp.eq.s32.totalorder %s29, 1
      %p162 = por %p160, %p161
      %p163 = scmp.ne.s32.totalorder %s154, %s155
      %p164 = scmp.eq.s32.totalorder %s29, 0
      %p165 = por %p163, %p164
      %p166 = scmp.ne.s32.totalorder %s154, %s155
      %p167 = scmp.eq.s32.totalorder %s30, 1
      %p168 = por %p166, %p167
      %p170 = scmp.ne.s32.totalorder %s155, %s169
      %p171 = scmp.eq.s32.totalorder %s30, 0
      %p172 = por %p170, %p171
      %s174 = sadd.s32 %s173, 1
      %p177 = scmp.eq.s32.totalorder %s24, 1
      %p178 = scmp.ne.s32.totalorder %s173, %s175
      %p179 = scmp.eq.s32.totalorder %s24, 0
      %p180 = por %p178, %p179
      %p181 = scmp.ne.s32.totalorder %s173, %s175
      %p182 = scmp.eq.s32.totalorder %s29, 1
      %p183 = por %p181, %p182
      %p184 = scmp.ne.s32.totalorder %s175, %s176
      %p185 = scmp.eq.s32.totalorder %s29, 0
      %p186 = por %p184, %p185
      %p187 = scmp.ne.s32.totalorder %s175, %s176
      %p188 = scmp.eq.s32.totalorder %s30, 1
      %p189 = por %p187, %p188
      %p191 = scmp.ne.s32.totalorder %s176, %s190
      %p192 = scmp.eq.s32.totalorder %s30, 0
      %p193 = por %p191, %p192
      %s195 = sadd.s32 %s194, 1
      %p198 = scmp.eq.s32.totalorder %s24, 1
      %p199 = scmp.ne.s32.totalorder %s194, %s196
      %p200 = scmp.eq.s32.totalorder %s24, 0
      %p201 = por %p199, %p200
      %p202 = scmp.ne.s32.totalorder %s194, %s196
      %p203 = scmp.eq.s32.totalorder %s29, 1
      %p204 = por %p202, %p203
      %p205 = scmp.ne.s32.totalorder %s196, %s197
      %p206 = scmp.eq.s32.totalorder %s29, 0
      %p207 = por %p205, %p206
      %p208 = scmp.ne.s32.totalorder %s196, %s197
      %p209 = scmp.eq.s32.totalorder %s30, 1
      %p210 = por %p208, %p209
      %p212 = scmp.ne.s32.totalorder %s197, %s211
      %p213 = scmp.eq.s32.totalorder %s30, 0
      %p214 = por %p212, %p213
      %s216 = sadd.s32 %s215, 1
      %p219 = scmp.eq.s32.totalorder %s24, 1
      %p220 = scmp.ne.s32.totalorder %s215, %s217
      %p221 = scmp.eq.s32.totalorder %s24, 0
      %p222 = por %p220, %p221
      %p223 = scmp.ne.s32.totalorder %s215, %s217
      %p224 = scmp.eq.s32.totalorder %s29, 1
      %p225 = por %p223, %p224
      %p226 = scmp.ne.s32.totalorder %s217, %s218
      %p227 = scmp.eq.s32.totalorder %s29, 0
      %p228 = por %p226, %p227
      %p229 = scmp.ne.s32.totalorder %s217, %s218
      %p230 = scmp.eq.s32.totalorder %s30, 1
      %p231 = por %p229, %p230
      %p233 = scmp.ne.s32.totalorder %s218, %s232
      %p234 = scmp.eq.s32.totalorder %s30, 0
      %p235 = por %p233, %p234
      %s237 = sadd.s32 %s236, 1
      %p240 = scmp.eq.s32.totalorder %s24, 1
      %p241 = scmp.ne.s32.totalorder %s236, %s238
      %p242 = scmp.eq.s32.totalorder %s24, 0
      %p243 = por %p241, %p242
      %p244 = scmp.ne.s32.totalorder %s236, %s238
      %p245 = scmp.eq.s32.totalorder %s29, 1
      %p246 = por %p244, %p245
      %p247 = scmp.ne.s32.totalorder %s238, %s239
      %p248 = scmp.eq.s32.totalorder %s29, 0
      %p249 = por %p247, %p248
      %p250 = scmp.ne.s32.totalorder %s238, %s239
      %p251 = scmp.eq.s32.totalorder %s30, 1
      %p252 = por %p250, %p251
      %p254 = scmp.ne.s32.totalorder %s239, %s253
      %p255 = scmp.eq.s32.totalorder %s30, 0
      %p256 = por %p254, %p255
      %s258 = sadd.s32 %s257, 1
      %p261 = scmp.eq.s32.totalorder %s24, 1
      %p262 = scmp.ne.s32.totalorder %s257, %s259
      %p263 = scmp.eq.s32.totalorder %s24, 0
      %p264 = por %p262, %p263
      %p265 = scmp.ne.s32.totalorder %s257, %s259
      %p266 = scmp.eq.s32.totalorder %s29, 1
      %p267 = por %p265, %p266
      %p268 = scmp.ne.s32.totalorder %s259, %s260
      %p269 = scmp.eq.s32.totalorder %s29, 0
      %p270 = por %p268, %p269
      %p271 = scmp.ne.s32.totalorder %s259, %s260
      %p272 = scmp.eq.s32.totalorder %s30, 1
      %p273 = por %p271, %p272
      %p275 = scmp.ne.s32.totalorder %s260, %s274
      %p276 = scmp.eq.s32.totalorder %s30, 0
      %p277 = por %p275, %p276
      %s279 = sadd.s32 %s278, 1
      %p282 = scmp.eq.s32.totalorder %s24, 1
      %p283 = scmp.ne.s32.totalorder %s278, %s280
      %p284 = scmp.eq.s32.totalorder %s24, 0
      %p285 = por %p283, %p284
      %p286 = scmp.ne.s32.totalorder %s278, %s280
      %p287 = scmp.eq.s32.totalorder %s29, 1
      %p288 = por %p286, %p287
      %p289 = scmp.ne.s32.totalorder %s280, %s281
      %p290 = scmp.eq.s32.totalorder %s29, 0
      %p291 = por %p289, %p290
      %p292 = scmp.ne.s32.totalorder %s280, %s281
      %p293 = scmp.eq.s32.totalorder %s30, 1
      %p294 = por %p292, %p293
      %p296 = scmp.ne.s32.totalorder %s281, %s295
      %p297 = scmp.eq.s32.totalorder %s30, 0
      %p298 = por %p296, %p297
      %s299 = ssub.s32 %s24, %s31
      %p300 = scmp.eq.s32.totalorder %s299, 0
      %s302 = sadd.s32 %s301, 1
      %s303 = scalar_select %p300, %s301, %s302
      %p306 = pneg %p300
      %p307 = scmp.eq.s32.totalorder %s24, 1
      %p308 = por %p306, %p307
      %p309 = scmp.ne.s32.totalorder %s301, %s304
      %p310 = scmp.eq.s32.totalorder %s24, 0
      %p311 = por %p309, %p310
      %p312 = scmp.ne.s32.totalorder %s301, %s304
      %p313 = scmp.eq.s32.totalorder %s29, 1
      %p314 = por %p312, %p313
      %p315 = scmp.ne.s32.totalorder %s304, %s305
      %p316 = scmp.eq.s32.totalorder %s29, 0
      %p317 = por %p315, %p316
      %p318 = scmp.ne.s32.totalorder %s304, %s305
      %p319 = scmp.eq.s32.totalorder %s30, 1
      %p320 = por %p318, %p319
      %p322 = scmp.ne.s32.totalorder %s305, %s321
      %p323 = scmp.eq.s32.totalorder %s30, 0
      %p324 = por %p322, %p323
      %p325 = scmp.le.s32.totalorder 1, %s24
      %p326 = scmp.lt.s32.totalorder %s24, 3
      %p327 = pnand %p325, %p326
      %p328 = pneg %p327
      // Predicated region
      $region9: #{decoder_block_pallas.1} parent=5 // pred_check
        _
      $region10: #{decoder_block_pallas.1} parent=5 // pred_check_branch
        %330 = sbr.rel (%p327) target = $region12
      $region11: #{decoder_block_pallas.1} parent=5 // pred_region
        %s331 = ssub.s32 %s24, 1
        // Predicated region
        $region13: #{decoder_block_pallas.1} parent=11 // pred_check
          %p332 = pneg %p123
        $region14: #{decoder_block_pallas.1} parent=11 // pred_check_branch
          %334 = sbr.rel (%p332) target = $region16
        $region15: #{decoder_block_pallas.1} parent=11 // pred_region
          _
        $region16: #{decoder_block_pallas.1} parent=11 // pred_fallthru
          _
        // Predicated region
        $region17: #{decoder_block_pallas.1} parent=11 // pred_check
          %p335 = pneg %p144
        $region18: #{decoder_block_pallas.1} parent=11 // pred_check_branch
          %337 = sbr.rel (%p335) target = $region20
        $region19: #{decoder_block_pallas.1} parent=11 // pred_region
          _
        $region20: #{decoder_block_pallas.1} parent=11 // pred_fallthru
          _
        // Predicated region
        $region21: #{decoder_block_pallas.1} parent=11 // pred_check
          %p338 = pneg %p165
        $region22: #{decoder_block_pallas.1} parent=11 // pred_check_branch
          %340 = sbr.rel (%p338) target = $region24
        $region23: #{decoder_block_pallas.1} parent=11 // pred_region
          %s342 = ssub.s32 256, 256
          %343 = vsyncadd [#allocation3], %s342
          %s344 = sshll.u32 [#allocation2], 4
          %s345 = int_to_ptr.vmem [resolvable:$true] %s344
          %350 = dma.hbm_to_vmem [thread:$0]  %s5, 256, %s345, [#allocation3], 64, 64, 4
        $region24: #{decoder_block_pallas.1} parent=11 // pred_fallthru
          _
        // Predicated region
        $region25: #{decoder_block_pallas.1} parent=11 // pred_check
          %p351 = pneg %p186
        $region26: #{decoder_block_pallas.1} parent=11 // pred_check_branch
          %353 = sbr.rel (%p351) target = $region28
        $region27: #{decoder_block_pallas.1} parent=11 // pred_region
          %s355 = ssub.s32 256, 256
          %356 = vsyncadd [#allocation6], %s355
          %s357 = sshll.u32 [#allocation5], 4
          %s358 = int_to_ptr.vmem [resolvable:$true] %s357
          %363 = dma.hbm_to_vmem [thread:$0]  %s6, 256, %s358, [#allocation6], 64, 64, 4
        $region28: #{decoder_block_pallas.1} parent=11 // pred_fallthru
          _
        // Predicated region
        $region29: #{decoder_block_pallas.1} parent=11 // pred_check
          %p364 = pneg %p207
        $region30: #{decoder_block_pallas.1} parent=11 // pred_check_branch
          %366 = sbr.rel (%p364) target = $region32
        $region31: #{decoder_block_pallas.1} parent=11 // pred_region
          %s368 = ssub.s32 256, 256
          %369 = vsyncadd [#allocation6], %s368
          %s370 = sshll.u32 [#allocation7], 4
          %s371 = int_to_ptr.vmem [resolvable:$true] %s370
          %376 = dma.hbm_to_vmem [thread:$0]  %s7, 256, %s371, [#allocation6], 64, 64, 4
        $region32: #{decoder_block_pallas.1} parent=11 // pred_fallthru
          _
        // Predicated region
        $region33: #{decoder_block_pallas.1} parent=11 // pred_check
          %p377 = pneg %p228
        $region34: #{decoder_block_pallas.1} parent=11 // pred_check_branch
          %379 = sbr.rel (%p377) target = $region36
        $region35: #{decoder_block_pallas.1} parent=11 // pred_region
          %s381 = ssub.s32 256, 256
          %382 = vsyncadd [#allocation9], %s381
          %s383 = sshll.u32 [#allocation8], 4
          %s384 = int_to_ptr.vmem [resolvable:$true] %s383
          %389 = dma.hbm_to_vmem [thread:$0]  %s8, 256, %s384, [#allocation9], 64, 64, 4
        $region36: #{decoder_block_pallas.1} parent=11 // pred_fallthru
          _
        // Predicated region
        $region37: #{decoder_block_pallas.1} parent=11 // pred_check
          %p390 = pneg %p249
        $region38: #{decoder_block_pallas.1} parent=11 // pred_check_branch
          %392 = sbr.rel (%p390) target = $region40
        $region39: #{decoder_block_pallas.1} parent=11 // pred_region
          _
        $region40: #{decoder_block_pallas.1} parent=11 // pred_fallthru
          _
        // Predicated region
        $region41: #{decoder_block_pallas.1} parent=11 // pred_check
          %p393 = pneg %p270
        $region42: #{decoder_block_pallas.1} parent=11 // pred_check_branch
          %395 = sbr.rel (%p393) target = $region44
        $region43: #{decoder_block_pallas.1} parent=11 // pred_region
          _
        $region44: #{decoder_block_pallas.1} parent=11 // pred_fallthru
          _
        // Predicated region
        $region45: #{decoder_block_pallas.1} parent=11 // pred_check
          %p396 = pneg %p291
        $region46: #{decoder_block_pallas.1} parent=11 // pred_check_branch
          %398 = sbr.rel (%p396) target = $region48
        $region47: #{decoder_block_pallas.1} parent=11 // pred_region
          %s400 = ssub.s32 128, 128
          %401 = vsyncadd [#allocation9], %s400
          %s403 = sshll.u32 [#allocation10], 4
          %s404 = int_to_ptr.vmem [resolvable:$true] %s403
          %406 = dma.hbm_to_vmem [thread:$0]  %s11, 128, %s404, [#allocation9]
        $region48: #{decoder_block_pallas.1} parent=11 // pred_fallthru
          _
      $region12: #{decoder_block_pallas.1} parent=5 // pred_fallthru
        _
      %p407 = scmp.lt.s32.totalorder %s24, 2
      // Predicated region
      $region49: #{decoder_block_pallas.1} parent=5 // pred_check
        %p408 = pneg %p407
      $region50: #{decoder_block_pallas.1} parent=5 // pred_check_branch
        %410 = sbr.rel (%p408) target = $region52
      $region51: #{decoder_block_pallas.1} parent=5 // pred_region
        // Predicated region
        $region53: #{decoder_block_pallas.1} parent=51 // pred_check
          %p411 = pneg %p44
        $region54: #{decoder_block_pallas.1} parent=51 // pred_check_branch
          %413 = sbr.rel (%p411) target = $region56
        $region55: #{decoder_block_pallas.1} parent=51 // pred_region
          %p414 = scmp.lt.s32.totalorder %s24, 1
          %s415 = scalar_select %p414, %s24, 1
          %s416 = smul.addr %s415, 8
          %s417 = scalar_lea.vmem %s0, %s416
        $region56: #{decoder_block_pallas.1} parent=51 // pred_fallthru
          _
        // Predicated region
        $region57: #{decoder_block_pallas.1} parent=51 // pred_check
          %p418 = pneg %p70
        $region58: #{decoder_block_pallas.1} parent=51 // pred_check_branch
          %420 = sbr.rel (%p418) target = $region60
        $region59: #{decoder_block_pallas.1} parent=51 // pred_region
          %p421 = scmp.lt.s32.totalorder %s24, 1
          %s422 = scalar_select %p421, %s24, 1
          %s423 = smul.addr %s422, 8
          %s424 = scalar_lea.vmem %s1, %s423
        $region60: #{decoder_block_pallas.1} parent=51 // pred_fallthru
          _
        // Predicated region
        $region61: #{decoder_block_pallas.1} parent=51 // pred_check
          %p425 = pneg %p96
        $region62: #{decoder_block_pallas.1} parent=51 // pred_check_branch
          %427 = sbr.rel (%p425) target = $region64
        $region63: #{decoder_block_pallas.1} parent=51 // pred_region
          %p428 = scmp.lt.s32.totalorder %s24, 1
          %s429 = scalar_select %p428, %s24, 1
          %s430 = scalar_lea.vmem %s2, %s429
        $region64: #{decoder_block_pallas.1} parent=51 // pred_fallthru
          _
      $region52: #{decoder_block_pallas.1} parent=5 // pred_fallthru
        _
      %p431 = scmp.le.s32.totalorder 1, %s24
      %p432 = scmp.lt.s32.totalorder %s24, 3
      %p433 = pnand %p431, %p432
      %p434 = pneg %p433
      // Predicated region
      $region65: #{decoder_block_pallas.1} parent=5 // pred_check
        _
      $region66: #{decoder_block_pallas.1} parent=5 // pred_check_branch
        %436 = sbr.rel (%p433) target = $region68
      $region67: #{decoder_block_pallas.1} parent=5 // pred_region
        %s437 = ssub.s32 %s24, 1
        // Predicated region
        $region69: #{decoder_block_pallas.1} parent=67 // pred_check
          %p438 = pneg %p165
        $region70: #{decoder_block_pallas.1} parent=67 // pred_check_branch
          %440 = sbr.rel (%p438) target = $region72
        $region71: #{decoder_block_pallas.1} parent=67 // pred_region
          %441 = dma.done [#allocation3], 256
        $region72: #{decoder_block_pallas.1} parent=67 // pred_fallthru
          _
        // Predicated region
        $region73: #{decoder_block_pallas.1} parent=67 // pred_check
          %p442 = pneg %p186
        $region74: #{decoder_block_pallas.1} parent=67 // pred_check_branch
          %444 = sbr.rel (%p442) target = $region76
        $region75: #{decoder_block_pallas.1} parent=67 // pred_region
          %445 = dma.done [#allocation6], 256
        $region76: #{decoder_block_pallas.1} parent=67 // pred_fallthru
          _
        // Predicated region
        $region77: #{decoder_block_pallas.1} parent=67 // pred_check
          %p446 = pneg %p207
        $region78: #{decoder_block_pallas.1} parent=67 // pred_check_branch
          %448 = sbr.rel (%p446) target = $region80
        $region79: #{decoder_block_pallas.1} parent=67 // pred_region
          %449 = dma.done [#allocation6], 256
        $region80: #{decoder_block_pallas.1} parent=67 // pred_fallthru
          _
        // Predicated region
        $region81: #{decoder_block_pallas.1} parent=67 // pred_check
          %p450 = pneg %p228
        $region82: #{decoder_block_pallas.1} parent=67 // pred_check_branch
          %452 = sbr.rel (%p450) target = $region84
        $region83: #{decoder_block_pallas.1} parent=67 // pred_region
          %453 = dma.done [#allocation9], 256
        $region84: #{decoder_block_pallas.1} parent=67 // pred_fallthru
          _
        // Predicated region
        $region85: #{decoder_block_pallas.1} parent=67 // pred_check
          %p454 = pneg %p291
        $region86: #{decoder_block_pallas.1} parent=67 // pred_check_branch
          %456 = sbr.rel (%p454) target = $region88
        $region87: #{decoder_block_pallas.1} parent=67 // pred_region
          %457 = dma.done [#allocation9], 128
        $region88: #{decoder_block_pallas.1} parent=67 // pred_fallthru
          _
        %p458 = scmp.lt.s32.totalorder %s29, 1
        %s459 = scalar_select %p458, %s29, 1
        %s460 = smul.addr %s459, 8
        %s461 = scalar_lea.vmem %s0, %s460
        %p462 = pneg %p50
        %p463 = pneg %p47
        %p464 = scmp.lt.s32.totalorder %s29, 1
        %s465 = scalar_select %p464, %s29, 1
        %s466 = smul.addr %s465, 8
        %s467 = scalar_lea.vmem %s1, %s466
        %p468 = pneg %p76
        %p469 = pneg %p73
        %p470 = scmp.lt.s32.totalorder %s29, 1
        %s471 = scalar_select %p470, %s29, 1
        %s472 = scalar_lea.vmem %s2, %s471
        %p473 = pneg %p102
        %p474 = pneg %p99
        %p475 = pneg %p123
        %p476 = pneg %p120
        %p477 = pneg %p144
        %p478 = pneg %p141
        %p479 = pneg %p165
        %p480 = pneg %p162
        %p481 = pneg %p186
        %p482 = pneg %p183
        %p483 = pneg %p207
        %p484 = pneg %p204
        %p485 = pneg %p228
        %p486 = pneg %p225
        %p487 = pneg %p249
        %p488 = pneg %p246
        %p489 = pneg %p270
        %p490 = pneg %p267
        %p491 = pneg %p291
        %p492 = pneg %p288
        %p493 = pneg %p317
        %p494 = pneg %p314
        %s495 = sand.u32 %s304, 1
        %s496 = scalar_lea.sflag [#allocation4], %s495
        %s497 = sand.u32 %s304, 1
        %s498 = smul.addr %s497, 8
        %s499 = scalar_lea.vmem [#allocation11], %s498
        %p500 = scmp.lt.s32.totalorder %s29, 1
        %s501 = scalar_select %p500, %s29, 1
        %s502 = smul.addr %s501, 8
        %s503 = scalar_lea.vmem %s0, %s502
        %p504 = scmp.lt.s32.totalorder %s29, 1
        %s505 = scalar_select %p504, %s29, 1
        %s506 = smul.addr %s505, 8
        %s507 = scalar_lea.vmem %s1, %s506
        %p508 = scmp.lt.s32.totalorder %s29, 1
        %s509 = scalar_select %p508, %s29, 1
        %s510 = scalar_lea.vmem %s2, %s509
        %v512 = vld [vmem:[%s503] sm:$0xff]
        %v513 = vld [vmem:[%s507] sm:$0xff]
        %v514 = vld [vmem:[#allocation10] sm:$0x7f]
        %v515 = vpack.c.bf16 %v512, %v512
        %v516 = vld [vmem:[%s3] sm:$0xf]
        %v517 = vld [vmem:[%s3 + $0x4] sm:$0xf]
        %v518 = vld [vmem:[%s3 + $0x8] sm:$0xf]
        %v519 = vld [vmem:[%s3 + $0xc] sm:$0xf]
        %v524 = vunpack.c.l.b16 %v516
        %v525 = vunpack.c.l.b16 %v517
        %v526 = vunpack.c.l.b16 %v518
        %v527 = vunpack.c.l.b16 %v519
        %v528 = vpack.c.b16 %v525, %v524
        %v529 = vpack.c.b16 %v527, %v526
        %vm532 = vcmask 261120
        %v534 = vsel %vm532, %v515, 0
        %536 = vmatprep.subr.bf16.mxu0 0
        %537 = vmatpush1.bf16.msra.mxu0 %v528
        %538 = vmatprep.subr.bf16.mxu0 0
        %539 = vmatpush1.bf16.msra.mxu0 %v529
        %540 = vmatprep.subr.bf16.mxu0 0
        %541 = vmatpush1.bf16.msra.mxu0 0
        %542 = vmatprep.subr.bf16.mxu0 0
        %543 = vmatpush1.bf16.msra.mxu0 0
        %544 = vmatprep.subr.bf16.mxu0 0
        %545 = vmatpush1.bf16.msra.mxu0 0
        %546 = vmatprep.subr.bf16.mxu0 0
        %547 = vmatpush1.bf16.msra.mxu0 0
        %548 = vmatprep.subr.bf16.mxu0 0
        %549 = vmatpush1.bf16.msra.mxu0 0
        %550 = vmatprep.subr.bf16.mxu0 0
        %551 = vmatpush1.bf16.msra.mxu0 0
        %552 = vmatprep.subr.bf16.mxu0 0
        %553 = vmatpush1.bf16.msra.mxu0 0
        %554 = vmatprep.subr.bf16.mxu0 0
        %555 = vmatpush1.bf16.msra.mxu0 0
        %556 = vmatprep.subr.bf16.mxu0 0
        %557 = vmatpush1.bf16.msra.mxu0 0
        %558 = vmatprep.subr.bf16.mxu0 0
        %559 = vmatpush1.bf16.msra.mxu0 0
        %560 = vmatprep.subr.bf16.mxu0 0
        %561 = vmatpush1.bf16.msra.mxu0 0
        %562 = vmatprep.subr.bf16.mxu0 0
        %563 = vmatpush1.bf16.msra.mxu0 0
        %564 = vmatprep.subr.bf16.mxu0 0
        %565 = vmatpush1.bf16.msra.mxu0 0
        %566 = vmatprep.subr.bf16.mxu0 0
        %567 = vmatpush1.bf16.msra.mxu0 0
        %568 = vmatprep.mubr.bf16.mxu0 0
        %569 = vmatmul.mubr.bf16.gmra.mrb[0].mxu0 %v534
        %v570 = vpop.f32.mrb[0].mxu0
        %v571 = vadd.f32 0.0, %v570
        %v572 = vpop.f32.mrb[0].mxu0
        %v573 = vpop.f32.mrb[0].mxu0
        %v574 = vpop.f32.mrb[0].mxu0
        %575 = vdwg.mxu0
        %v576 = vlaneseq
        %v577 = vshrl.u32 %v576, 7
        %v578 = vlaneseq
        %v579 = vand.u32 %v578, 127
        %vm580 = vcmp.le.s32.totalorder %v579, %v577
        %v581 = vsel %vm580, 0.0, -1000000.0
        %583 = vrot.lane.b32.xlu0 %v571, 120
        %v584 = vpop.permute.xlu0 %583
        %586 = vrot.lane.b32.xlu0 %v571, 112
        %v587 = vpop.permute.xlu0 %586
        %589 = vrot.lane.b32.xlu0 %v571, 104
        %v590 = vpop.permute.xlu0 %589
        %v592 = vcombine.low %v571, %v587
        %v593 = vcombine.high %v571, %v587
        %v595 = vunpack.c.l.s4 1983009808
        %v596 = vunpack.c.0.s8 %v595
        %v597 = vlaneseq
        %v598 = vshrl.u32 %v597, 7
        %v599 = vsub.s32 %v596, %v598
        %v600 = vrot.slane %v592, %v599
        %v602 = vunpack.c.l.s4 1983009808
        %v603 = vunpack.c.0.s8 %v602
        %v604 = vlaneseq
        %v605 = vshrl.u32 %v604, 7
        %v606 = vsub.s32 %v603, %v605
        %v607 = vrot.slane %v593, %v606
        %v608 = vcombine.low %v584, %v590
        %v609 = vcombine.high %v584, %v590
        %v611 = vunpack.c.l.s4 1983009808
        %v612 = vunpack.c.0.s8 %v611
        %v613 = vlaneseq
        %v614 = vshrl.u32 %v613, 7
        %v615 = vsub.s32 %v612, %v614
        %v616 = vrot.slane %v608, %v615
        %v618 = vunpack.c.l.s4 1983009808
        %v619 = vunpack.c.0.s8 %v618
        %v620 = vlaneseq
        %v621 = vshrl.u32 %v620, 7
        %v622 = vsub.s32 %v619, %v621
        %v623 = vrot.slane %v609, %v622
        %v624 = vcombine.low %v600, %v616
        %v625 = vcombine.high %v600, %v616
        %v627 = vunpack.c.l.s4 1934713408
        %v628 = vunpack.c.0.s8 %v627
        %v629 = vlaneseq
        %v630 = vshrl.u32 %v629, 7
        %v631 = vsub.s32 %v628, %v630
        %v632 = vrot.slane %v624, %v631
        %v634 = vunpack.c.l.s4 1934713408
        %v635 = vunpack.c.0.s8 %v634
        %v636 = vlaneseq
        %v637 = vshrl.u32 %v636, 7
        %v638 = vsub.s32 %v635, %v637
        %v639 = vrot.slane %v625, %v638
        %v640 = vcombine.low %v607, %v623
        %v641 = vcombine.high %v607, %v623
        %v643 = vunpack.c.l.s4 1934713408
        %v644 = vunpack.c.0.s8 %v643
        %v645 = vlaneseq
        %v646 = vshrl.u32 %v645, 7
        %v647 = vsub.s32 %v644, %v646
        %v648 = vrot.slane %v640, %v647
        %v650 = vunpack.c.l.s4 1934713408
        %v651 = vunpack.c.0.s8 %v650
        %v652 = vlaneseq
        %v653 = vshrl.u32 %v652, 7
        %v654 = vsub.s32 %v651, %v653
        %v655 = vrot.slane %v641, %v654
        %v656 = vcombine.high %v632, 0.0
        %v657 = vcombine.high %v639, 0.0
        %v658 = vcombine.high %v648, 0.0
        %v659 = vcombine.high %v655, 0.0
        %v660 = vpack.c.bf16 %v632, %v632
        %v661 = vpack.c.bf16 %v656, %v656
        %v662 = vpack.c.bf16 %v639, %v639
        %v663 = vpack.c.bf16 %v657, %v657
        %v664 = vpack.c.bf16 %v648, %v648
        %v665 = vpack.c.bf16 %v658, %v658
        %v666 = vpack.c.bf16 %v655, %v655
        %v667 = vpack.c.bf16 %v659, %v659
        %668 = vrot.lane.b32.xlu0 %v571, 96
        %v669 = vpop.permute.xlu0 %668
        %670 = vrot.lane.b32.xlu0 %v584, 96
        %v671 = vpop.permute.xlu0 %670
        %672 = vrot.lane.b32.xlu0 %v587, 96
        %v673 = vpop.permute.xlu0 %672
        %674 = vrot.lane.b32.xlu0 %v590, 96
        %v675 = vpop.permute.xlu0 %674
        %v680 = vcombine.low %v669, %v673
        %v681 = vcombine.high %v669, %v673
        %v683 = vunpack.c.l.s4 1983009808
        %v684 = vunpack.c.0.s8 %v683
        %v685 = vlaneseq
        %v686 = vshrl.u32 %v685, 7
        %v687 = vsub.s32 %v684, %v686
        %v688 = vrot.slane %v680, %v687
        %v690 = vunpack.c.l.s4 1983009808
        %v691 = vunpack.c.0.s8 %v690
        %v692 = vlaneseq
        %v693 = vshrl.u32 %v692, 7
        %v694 = vsub.s32 %v691, %v693
        %v695 = vrot.slane %v681, %v694
        %v696 = vcombine.low %v671, %v675
        %v697 = vcombine.high %v671, %v675
        %v699 = vunpack.c.l.s4 1983009808
        %v700 = vunpack.c.0.s8 %v699
        %v701 = vlaneseq
        %v702 = vshrl.u32 %v701, 7
        %v703 = vsub.s32 %v700, %v702
        %v704 = vrot.slane %v696, %v703
        %v706 = vunpack.c.l.s4 1983009808
        %v707 = vunpack.c.0.s8 %v706
        %v708 = vlaneseq
        %v709 = vshrl.u32 %v708, 7
        %v710 = vsub.s32 %v707, %v709
        %v711 = vrot.slane %v697, %v710
        %v712 = vcombine.low %v688, %v704
        %v713 = vcombine.high %v688, %v704
        %v715 = vunpack.c.l.s4 1934713408
        %v716 = vunpack.c.0.s8 %v715
        %v717 = vlaneseq
        %v718 = vshrl.u32 %v717, 7
        %v719 = vsub.s32 %v716, %v718
        %v720 = vrot.slane %v712, %v719
        %v722 = vunpack.c.l.s4 1934713408
        %v723 = vunpack.c.0.s8 %v722
        %v724 = vlaneseq
        %v725 = vshrl.u32 %v724, 7
        %v726 = vsub.s32 %v723, %v725
        %v727 = vrot.slane %v713, %v726
        %v728 = vcombine.low %v695, %v711
        %v729 = vcombine.high %v695, %v711
        %v731 = vunpack.c.l.s4 1934713408
        %v732 = vunpack.c.0.s8 %v731
        %v733 = vlaneseq
        %v734 = vshrl.u32 %v733, 7
        %v735 = vsub.s32 %v732, %v734
        %v736 = vrot.slane %v728, %v735
        %v738 = vunpack.c.l.s4 1934713408
        %v739 = vunpack.c.0.s8 %v738
        %v740 = vlaneseq
        %v741 = vshrl.u32 %v740, 7
        %v742 = vsub.s32 %v739, %v741
        %v743 = vrot.slane %v729, %v742
        %v744 = vcombine.high %v720, 0.0
        %v745 = vcombine.high %v727, 0.0
        %v746 = vcombine.high %v736, 0.0
        %v747 = vcombine.high %v743, 0.0
        %v748 = vpack.c.bf16 %v720, %v720
        %v749 = vpack.c.bf16 %v744, %v744
        %v750 = vpack.c.bf16 %v727, %v727
        %v751 = vpack.c.bf16 %v745, %v745
        %v752 = vpack.c.bf16 %v736, %v736
        %v753 = vpack.c.bf16 %v746, %v746
        %v754 = vpack.c.bf16 %v743, %v743
        %v755 = vpack.c.bf16 %v747, %v747
        %756 = vrot.lane.b32.xlu0 %v571, 64
        %v757 = vpop.permute.xlu0 %756
        %758 = vrot.lane.b32.xlu0 %v584, 64
        %v759 = vpop.permute.xlu0 %758
        %760 = vrot.lane.b32.xlu0 %v587, 64
        %v761 = vpop.permute.xlu0 %760
        %762 = vrot.lane.b32.xlu0 %v590, 64
        %v763 = vpop.permute.xlu0 %762
        %v768 = vcombine.low %v757, %v761
        %v769 = vcombine.high %v757, %v761
        %v771 = vunpack.c.l.s4 1983009808
        %v772 = vunpack.c.0.s8 %v771
        %v773 = vlaneseq
        %v774 = vshrl.u32 %v773, 7
        %v775 = vsub.s32 %v772, %v774
        %v776 = vrot.slane %v768, %v775
        %v778 = vunpack.c.l.s4 1983009808
        %v779 = vunpack.c.0.s8 %v778
        %v780 = vlaneseq
        %v781 = vshrl.u32 %v780, 7
        %v782 = vsub.s32 %v779, %v781
        %v783 = vrot.slane %v769, %v782
        %v784 = vcombine.low %v759, %v763
        %v785 = vcombine.high %v759, %v763
        %v787 = vunpack.c.l.s4 1983009808
        %v788 = vunpack.c.0.s8 %v787
        %v789 = vlaneseq
        %v790 = vshrl.u32 %v789, 7
        %v791 = vsub.s32 %v788, %v790
        %v792 = vrot.slane %v784, %v791
        %v794 = vunpack.c.l.s4 1983009808
        %v795 = vunpack.c.0.s8 %v794
        %v796 = vlaneseq
        %v797 = vshrl.u32 %v796, 7
        %v798 = vsub.s32 %v795, %v797
        %v799 = vrot.slane %v785, %v798
        %v800 = vcombine.low %v776, %v792
        %v801 = vcombine.high %v776, %v792
        %v803 = vunpack.c.l.s4 1934713408
        %v804 = vunpack.c.0.s8 %v803
        %v805 = vlaneseq
        %v806 = vshrl.u32 %v805, 7
        %v807 = vsub.s32 %v804, %v806
        %v808 = vrot.slane %v800, %v807
        %v810 = vunpack.c.l.s4 1934713408
        %v811 = vunpack.c.0.s8 %v810
        %v812 = vlaneseq
        %v813 = vshrl.u32 %v812, 7
        %v814 = vsub.s32 %v811, %v813
        %v815 = vrot.slane %v801, %v814
        %v816 = vcombine.low %v783, %v799
        %v817 = vcombine.high %v783, %v799
        %v819 = vunpack.c.l.s4 1934713408
        %v820 = vunpack.c.0.s8 %v819
        %v821 = vlaneseq
        %v822 = vshrl.u32 %v821, 7
        %v823 = vsub.s32 %v820, %v822
        %v824 = vrot.slane %v816, %v823
        %v826 = vunpack.c.l.s4 1934713408
        %v827 = vunpack.c.0.s8 %v826
        %v828 = vlaneseq
        %v829 = vshrl.u32 %v828, 7
        %v830 = vsub.s32 %v827, %v829
        %v831 = vrot.slane %v817, %v830
        %v832 = vcombine.high %v808, 0.0
        %v833 = vcombine.high %v815, 0.0
        %v834 = vcombine.high %v824, 0.0
        %v835 = vcombine.high %v831, 0.0
        %v836 = vpack.c.bf16 %v808, %v808
        %v837 = vpack.c.bf16 %v832, %v832
        %v838 = vpack.c.bf16 %v815, %v815
        %v839 = vpack.c.bf16 %v833, %v833
        %v840 = vpack.c.bf16 %v824, %v824
        %v841 = vpack.c.bf16 %v834, %v834
        %v842 = vpack.c.bf16 %v831, %v831
        %v843 = vpack.c.bf16 %v835, %v835
        %v844 = vcombine.low %v660, %v664
        %v846 = vunpack.c.l.s4 1983009808
        %v847 = vunpack.c.0.s8 %v846
        %v848 = vlaneseq
        %v849 = vshrl.u32 %v848, 7
        %v850 = vsub.s32 %v847, %v849
        %v851 = vrot.slane %v844, %v850
        %v852 = vcombine.low %v662, %v666
        %v854 = vunpack.c.l.s4 1983009808
        %v855 = vunpack.c.0.s8 %v854
        %v856 = vlaneseq
        %v857 = vshrl.u32 %v856, 7
        %v858 = vsub.s32 %v855, %v857
        %v859 = vrot.slane %v852, %v858
        %v860 = vcombine.low %v851, %v859
        %v862 = vunpack.c.l.s4 1934713408
        %v863 = vunpack.c.0.s8 %v862
        %v864 = vlaneseq
        %v865 = vshrl.u32 %v864, 7
        %v866 = vsub.s32 %v863, %v865
        %v867 = vrot.slane %v860, %v866
        %v868 = vcombine.high %v867, 0
        %v869 = vcombine.low %v661, %v665
        %v871 = vunpack.c.l.s4 1983009808
        %v872 = vunpack.c.0.s8 %v871
        %v873 = vlaneseq
        %v874 = vshrl.u32 %v873, 7
        %v875 = vsub.s32 %v872, %v874
        %v876 = vrot.slane %v869, %v875
        %v877 = vcombine.low %v663, %v667
        %v879 = vunpack.c.l.s4 1983009808
        %v880 = vunpack.c.0.s8 %v879
        %v881 = vlaneseq
        %v882 = vshrl.u32 %v881, 7
        %v883 = vsub.s32 %v880, %v882
        %v884 = vrot.slane %v877, %v883
        %v885 = vcombine.low %v876, %v884
        %v887 = vunpack.c.l.s4 1934713408
        %v888 = vunpack.c.0.s8 %v887
        %v889 = vlaneseq
        %v890 = vshrl.u32 %v889, 7
        %v891 = vsub.s32 %v888, %v890
        %v892 = vrot.slane %v885, %v891
        %v893 = vcombine.high %v892, 0
        %v896 = vpack.i.b16 %v892, %v867
        %v897 = vshrl.u32 %v867, 16
        %v898 = vshrl.u32 %v892, 16
        %v899 = vpack.i.b16 %v898, %v897
        %v902 = vpack.i.b16 %v893, %v868
        %v903 = vshrl.u32 %v868, 16
        %v904 = vshrl.u32 %v893, 16
        %v905 = vpack.i.b16 %v904, %v903
        %906 = vxpose.xlu0.c.b16.start [1/8] %v748, 128
        %907 = vxpose.xlu0.c.b16.cont [2/8] 0, 128
        %908 = vxpose.xlu0.c.b16.cont [3/8] 0, 128
        %909 = vxpose.xlu0.c.b16.cont [4/8] 0, 128
        %910 = vxpose.xlu0.c.b16.cont [5/8] 0, 128
        %911 = vxpose.xlu0.c.b16.cont [6/8] 0, 128
        %912 = vxpose.xlu0.c.b16.cont [7/8] 0, 128
        %913 = vxpose.xlu0.c.b16.end [8/8] 0, 128
        %v914 = vpop.trf.xlu0
        %v915 = vpop.trf.xlu0
        %v916 = vpop.trf.xlu0
        %v917 = vpop.trf.xlu0
        %v918 = vpop.trf.xlu0
        %v919 = vpop.trf.xlu0
        %v920 = vpop.trf.xlu0
        %v921 = vpop.trf.xlu0
        %922 = vxpose.xlu0.c.b16.start [1/8] %v749, 128
        %923 = vxpose.xlu0.c.b16.cont [2/8] 0, 128
        %924 = vxpose.xlu0.c.b16.cont [3/8] 0, 128
        %925 = vxpose.xlu0.c.b16.cont [4/8] 0, 128
        %926 = vxpose.xlu0.c.b16.cont [5/8] 0, 128
        %927 = vxpose.xlu0.c.b16.cont [6/8] 0, 128
        %928 = vxpose.xlu0.c.b16.cont [7/8] 0, 128
        %929 = vxpose.xlu0.c.b16.end [8/8] 0, 128
        %v930 = vpop.trf.xlu0
        %v931 = vpop.trf.xlu0
        %v932 = vpop.trf.xlu0
        %v933 = vpop.trf.xlu0
        %v934 = vpop.trf.xlu0
        %v935 = vpop.trf.xlu0
        %v936 = vpop.trf.xlu0
        %v937 = vpop.trf.xlu0
        %938 = vxpose.xlu0.c.b16.start [1/8] %v750, 128
        %939 = vxpose.xlu0.c.b16.cont [2/8] 0, 128
        %940 = vxpose.xlu0.c.b16.cont [3/8] 0, 128
        %941 = vxpose.xlu0.c.b16.cont [4/8] 0, 128
        %942 = vxpose.xlu0.c.b16.cont [5/8] 0, 128
        %943 = vxpose.xlu0.c.b16.cont [6/8] 0, 128
        %944 = vxpose.xlu0.c.b16.cont [7/8] 0, 128
        %945 = vxpose.xlu0.c.b16.end [8/8] 0, 128
        %v946 = vpop.trf.xlu0
        %v947 = vpop.trf.xlu0
        %v948 = vpop.trf.xlu0
        %v949 = vpop.trf.xlu0
        %v950 = vpop.trf.xlu0
        %v951 = vpop.trf.xlu0
        %v952 = vpop.trf.xlu0
        %v953 = vpop.trf.xlu0
        %954 = vxpose.xlu0.c.b16.start [1/8] %v751, 128
        %955 = vxpose.xlu0.c.b16.cont [2/8] 0, 128
        %956 = vxpose.xlu0.c.b16.cont [3/8] 0, 128
        %957 = vxpose.xlu0.c.b16.cont [4/8] 0, 128
        %958 = vxpose.xlu0.c.b16.cont [5/8] 0, 128
        %959 = vxpose.xlu0.c.b16.cont [6/8] 0, 128
        %960 = vxpose.xlu0.c.b16.cont [7/8] 0, 128
        %961 = vxpose.xlu0.c.b16.end [8/8] 0, 128
        %v962 = vpop.trf.xlu0
        %v963 = vpop.trf.xlu0
        %v964 = vpop.trf.xlu0
        %v965 = vpop.trf.xlu0
        %v966 = vpop.trf.xlu0
        %v967 = vpop.trf.xlu0
        %v968 = vpop.trf.xlu0
        %v969 = vpop.trf.xlu0
        %970 = vxpose.xlu0.c.b16.start [1/8] %v752, 128
        %971 = vxpose.xlu0.c.b16.cont [2/8] 0, 128
        %972 = vxpose.xlu0.c.b16.cont [3/8] 0, 128
        %973 = vxpose.xlu0.c.b16.cont [4/8] 0, 128
        %974 = vxpose.xlu0.c.b16.cont [5/8] 0, 128
        %975 = vxpose.xlu0.c.b16.cont [6/8] 0, 128
        %976 = vxpose.xlu0.c.b16.cont [7/8] 0, 128
        %977 = vxpose.xlu0.c.b16.end [8/8] 0, 128
        %v978 = vpop.trf.xlu0
        %v979 = vpop.trf.xlu0
        %v980 = vpop.trf.xlu0
        %v981 = vpop.trf.xlu0
        %v982 = vpop.trf.xlu0
        %v983 = vpop.trf.xlu0
        %v984 = vpop.trf.xlu0
        %v985 = vpop.trf.xlu0
        %986 = vxpose.xlu0.c.b16.start [1/8] %v753, 128
        %987 = vxpose.xlu0.c.b16.cont [2/8] 0, 128
        %988 = vxpose.xlu0.c.b16.cont [3/8] 0, 128
        %989 = vxpose.xlu0.c.b16.cont [4/8] 0, 128
        %990 = vxpose.xlu0.c.b16.cont [5/8] 0, 128
        %991 = vxpose.xlu0.c.b16.cont [6/8] 0, 128
        %992 = vxpose.xlu0.c.b16.cont [7/8] 0, 128
        %993 = vxpose.xlu0.c.b16.end [8/8] 0, 128
        %v994 = vpop.trf.xlu0
        %v995 = vpop.trf.xlu0
        %v996 = vpop.trf.xlu0
        %v997 = vpop.trf.xlu0
        %v998 = vpop.trf.xlu0
        %v999 = vpop.trf.xlu0
        %v1000 = vpop.trf.xlu0
        %v1001 = vpop.trf.xlu0
        %1002 = vxpose.xlu0.c.b16.start [1/8] %v754, 128
        %1003 = vxpose.xlu0.c.b16.cont [2/8] 0, 128
        %1004 = vxpose.xlu0.c.b16.cont [3/8] 0, 128
        %1005 = vxpose.xlu0.c.b16.cont [4/8] 0, 128
        %1006 = vxpose.xlu0.c.b16.cont [5/8] 0, 128
        %1007 = vxpose.xlu0.c.b16.cont [6/8] 0, 128
        %1008 = vxpose.xlu0.c.b16.cont [7/8] 0, 128
        %1009 = vxpose.xlu0.c.b16.end [8/8] 0, 128
        %v1010 = vpop.trf.xlu0
        %v1011 = vpop.trf.xlu0
        %v1012 = vpop.trf.xlu0
        %v1013 = vpop.trf.xlu0
        %v1014 = vpop.trf.xlu0
        %v1015 = vpop.trf.xlu0
        %v1016 = vpop.trf.xlu0
        %v1017 = vpop.trf.xlu0
        %1018 = vxpose.xlu0.c.b16.start [1/8] %v755, 128
        %1019 = vxpose.xlu0.c.b16.cont [2/8] 0, 128
        %1020 = vxpose.xlu0.c.b16.cont [3/8] 0, 128
        %1021 = vxpose.xlu0.c.b16.cont [4/8] 0, 128
        %1022 = vxpose.xlu0.c.b16.cont [5/8] 0, 128
        %1023 = vxpose.xlu0.c.b16.cont [6/8] 0, 128
        %1024 = vxpose.xlu0.c.b16.cont [7/8] 0, 128
        %1025 = vxpose.xlu0.c.b16.end [8/8] 0, 128
        %v1026 = vpop.trf.xlu0
        %v1027 = vpop.trf.xlu0
        %v1028 = vpop.trf.xlu0
        %v1029 = vpop.trf.xlu0
        %v1030 = vpop.trf.xlu0
        %v1031 = vpop.trf.xlu0
        %v1032 = vpop.trf.xlu0
        %v1033 = vpop.trf.xlu0
        %v1034 = vcombine.low %v914, %v978
        %v1036 = vunpack.c.l.s4 1983009808
        %v1037 = vunpack.c.0.s8 %v1036
        %v1038 = vlaneseq
        %v1039 = vshrl.u32 %v1038, 7
        %v1040 = vsub.s32 %v1037, %v1039
        %v1041 = vrot.slane %v1034, %v1040
        %v1042 = vcombine.low %v946, %v1010
        %v1044 = vunpack.c.l.s4 1983009808
        %v1045 = vunpack.c.0.s8 %v1044
        %v1046 = vlaneseq
        %v1047 = vshrl.u32 %v1046, 7
        %v1048 = vsub.s32 %v1045, %v1047
        %v1049 = vrot.slane %v1042, %v1048
        %v1050 = vcombine.low %v1041, %v1049
        %v1051 = vcombine.high %v1041, %v1049
        %v1053 = vunpack.c.l.s4 1934713408
        %v1054 = vunpack.c.0.s8 %v1053
        %v1055 = vlaneseq
        %v1056 = vshrl.u32 %v1055, 7
        %v1057 = vsub.s32 %v1054, %v1056
        %v1058 = vrot.slane %v1050, %v1057
        %v1060 = vunpack.c.l.s4 1934713408
        %v1061 = vunpack.c.0.s8 %v1060
        %v1062 = vlaneseq
        %v1063 = vshrl.u32 %v1062, 7
        %v1064 = vsub.s32 %v1061, %v1063
        %v1065 = vrot.slane %v1051, %v1064
        %v1066 = vcombine.high %v1058, 0
        %v1067 = vcombine.high %v1065, 0
        %v1068 = vcombine.low %v930, %v994
        %v1070 = vunpack.c.l.s4 1983009808
        %v1071 = vunpack.c.0.s8 %v1070
        %v1072 = vlaneseq
        %v1073 = vshrl.u32 %v1072, 7
        %v1074 = vsub.s32 %v1071, %v1073
        %v1075 = vrot.slane %v1068, %v1074
        %v1076 = vcombine.low %v962, %v1026
        %v1078 = vunpack.c.l.s4 1983009808
        %v1079 = vunpack.c.0.s8 %v1078
        %v1080 = vlaneseq
        %v1081 = vshrl.u32 %v1080, 7
        %v1082 = vsub.s32 %v1079, %v1081
        %v1083 = vrot.slane %v1076, %v1082
        %v1084 = vcombine.low %v1075, %v1083
        %v1085 = vcombine.high %v1075, %v1083
        %v1087 = vunpack.c.l.s4 1934713408
        %v1088 = vunpack.c.0.s8 %v1087
        %v1089 = vlaneseq
        %v1090 = vshrl.u32 %v1089, 7
        %v1091 = vsub.s32 %v1088, %v1090
        %v1092 = vrot.slane %v1084, %v1091
        %v1094 = vunpack.c.l.s4 1934713408
        %v1095 = vunpack.c.0.s8 %v1094
        %v1096 = vlaneseq
        %v1097 = vshrl.u32 %v1096, 7
        %v1098 = vsub.s32 %v1095, %v1097
        %v1099 = vrot.slane %v1085, %v1098
        %v1100 = vcombine.high %v1092, 0
        %v1101 = vcombine.high %v1099, 0
        %v1104 = vpack.i.b16 %v1092, %v1058
        %v1106 = vshrl.u32 %v1058, 16
        %v1107 = vshrl.u32 %v1092, 16
        %v1108 = vpack.i.b16 %v1107, %v1106
        %v1112 = vpack.i.b16 %v1100, %v1066
        %v1114 = vshrl.u32 %v1066, 16
        %v1115 = vshrl.u32 %v1100, 16
        %v1116 = vpack.i.b16 %v1115, %v1114
        %v1120 = vpack.i.b16 %v1099, %v1065
        %v1122 = vshrl.u32 %v1065, 16
        %v1123 = vshrl.u32 %v1099, 16
        %v1124 = vpack.i.b16 %v1123, %v1122
        %v1128 = vpack.i.b16 %v1101, %v1067
        %v1130 = vshrl.u32 %v1067, 16
        %v1131 = vshrl.u32 %v1101, 16
        %v1132 = vpack.i.b16 %v1131, %v1130
        %1134 = vxpose.xlu0.c.b16.start [1/8] %v1104, 128
        %1135 = vxpose.xlu0.c.b16.cont [2/8] 0, 128
        %1136 = vxpose.xlu0.c.b16.cont [3/8] 0, 128
        %1137 = vxpose.xlu0.c.b16.cont [4/8] 0, 128
        %1138 = vxpose.xlu0.c.b16.cont [5/8] 0, 128
        %1139 = vxpose.xlu0.c.b16.cont [6/8] 0, 128
        %1140 = vxpose.xlu0.c.b16.cont [7/8] 0, 128
        %1141 = vxpose.xlu0.c.b16.end [8/8] 0, 128
        %v1142 = vpop.trf.xlu0
        %v1143 = vpop.trf.xlu0
        %v1144 = vpop.trf.xlu0
        %v1145 = vpop.trf.xlu0
        %v1146 = vpop.trf.xlu0
        %v1147 = vpop.trf.xlu0
        %v1148 = vpop.trf.xlu0
        %v1149 = vpop.trf.xlu0
        %1150 = vxpose.xlu0.c.b16.start [1/8] %v1108, 128
        %1151 = vxpose.xlu0.c.b16.cont [2/8] 0, 128
        %1152 = vxpose.xlu0.c.b16.cont [3/8] 0, 128
        %1153 = vxpose.xlu0.c.b16.cont [4/8] 0, 128
        %1154 = vxpose.xlu0.c.b16.cont [5/8] 0, 128
        %1155 = vxpose.xlu0.c.b16.cont [6/8] 0, 128
        %1156 = vxpose.xlu0.c.b16.cont [7/8] 0, 128
        %1157 = vxpose.xlu0.c.b16.end [8/8] 0, 128
        %v1158 = vpop.trf.xlu0
        %v1159 = vpop.trf.xlu0
        %v1160 = vpop.trf.xlu0
        %v1161 = vpop.trf.xlu0
        %v1162 = vpop.trf.xlu0
        %v1163 = vpop.trf.xlu0
        %v1164 = vpop.trf.xlu0
        %v1165 = vpop.trf.xlu0
        %1166 = vxpose.xlu0.c.b16.start [1/8] %v1112, 128
        %1167 = vxpose.xlu0.c.b16.cont [2/8] 0, 128
        %1168 = vxpose.xlu0.c.b16.cont [3/8] 0, 128
        %1169 = vxpose.xlu0.c.b16.cont [4/8] 0, 128
        %1170 = vxpose.xlu0.c.b16.cont [5/8] 0, 128
        %1171 = vxpose.xlu0.c.b16.cont [6/8] 0, 128
        %1172 = vxpose.xlu0.c.b16.cont [7/8] 0, 128
        %1173 = vxpose.xlu0.c.b16.end [8/8] 0, 128
        %v1174 = vpop.trf.xlu0
        %v1175 = vpop.trf.xlu0
        %v1176 = vpop.trf.xlu0
        %v1177 = vpop.trf.xlu0
        %v1178 = vpop.trf.xlu0
        %v1179 = vpop.trf.xlu0
        %v1180 = vpop.trf.xlu0
        %v1181 = vpop.trf.xlu0
        %1182 = vxpose.xlu0.c.b16.start [1/8] %v1116, 128
        %1183 = vxpose.xlu0.c.b16.cont [2/8] 0, 128
        %1184 = vxpose.xlu0.c.b16.cont [3/8] 0, 128
        %1185 = vxpose.xlu0.c.b16.cont [4/8] 0, 128
        %1186 = vxpose.xlu0.c.b16.cont [5/8] 0, 128
        %1187 = vxpose.xlu0.c.b16.cont [6/8] 0, 128
        %1188 = vxpose.xlu0.c.b16.cont [7/8] 0, 128
        %1189 = vxpose.xlu0.c.b16.end [8/8] 0, 128
        %v1190 = vpop.trf.xlu0
        %v1191 = vpop.trf.xlu0
        %v1192 = vpop.trf.xlu0
        %v1193 = vpop.trf.xlu0
        %v1194 = vpop.trf.xlu0
        %v1195 = vpop.trf.xlu0
        %v1196 = vpop.trf.xlu0
        %v1197 = vpop.trf.xlu0
        %1198 = vxpose.xlu0.c.b16.start [1/8] %v1120, 128
        %1199 = vxpose.xlu0.c.b16.cont [2/8] 0, 128
        %1200 = vxpose.xlu0.c.b16.cont [3/8] 0, 128
        %1201 = vxpose.xlu0.c.b16.cont [4/8] 0, 128
        %1202 = vxpose.xlu0.c.b16.cont [5/8] 0, 128
        %1203 = vxpose.xlu0.c.b16.cont [6/8] 0, 128
        %1204 = vxpose.xlu0.c.b16.cont [7/8] 0, 128
        %1205 = vxpose.xlu0.c.b16.end [8/8] 0, 128
        %v1206 = vpop.trf.xlu0
        %v1207 = vpop.trf.xlu0
        %v1208 = vpop.trf.xlu0
        %v1209 = vpop.trf.xlu0
        %v1210 = vpop.trf.xlu0
        %v1211 = vpop.trf.xlu0
        %v1212 = vpop.trf.xlu0
        %v1213 = vpop.trf.xlu0
        %1214 = vxpose.xlu0.c.b16.start [1/8] %v1124, 128
        %1215 = vxpose.xlu0.c.b16.cont [2/8] 0, 128
        %1216 = vxpose.xlu0.c.b16.cont [3/8] 0, 128
        %1217 = vxpose.xlu0.c.b16.cont [4/8] 0, 128
        %1218 = vxpose.xlu0.c.b16.cont [5/8] 0, 128
        %1219 = vxpose.xlu0.c.b16.cont [6/8] 0, 128
        %1220 = vxpose.xlu0.c.b16.cont [7/8] 0, 128
        %1221 = vxpose.xlu0.c.b16.end [8/8] 0, 128
        %v1222 = vpop.trf.xlu0
        %v1223 = vpop.trf.xlu0
        %v1224 = vpop.trf.xlu0
        %v1225 = vpop.trf.xlu0
        %v1226 = vpop.trf.xlu0
        %v1227 = vpop.trf.xlu0
        %v1228 = vpop.trf.xlu0
        %v1229 = vpop.trf.xlu0
        %1230 = vxpose.xlu0.c.b16.start [1/8] %v1128, 128
        %1231 = vxpose.xlu0.c.b16.cont [2/8] 0, 128
        %1232 = vxpose.xlu0.c.b16.cont [3/8] 0, 128
        %1233 = vxpose.xlu0.c.b16.cont [4/8] 0, 128
        %1234 = vxpose.xlu0.c.b16.cont [5/8] 0, 128
        %1235 = vxpose.xlu0.c.b16.cont [6/8] 0, 128
        %1236 = vxpose.xlu0.c.b16.cont [7/8] 0, 128
        %1237 = vxpose.xlu0.c.b16.end [8/8] 0, 128
        %v1238 = vpop.trf.xlu0
        %v1239 = vpop.trf.xlu0
        %v1240 = vpop.trf.xlu0
        %v1241 = vpop.trf.xlu0
        %v1242 = vpop.trf.xlu0
        %v1243 = vpop.trf.xlu0
        %v1244 = vpop.trf.xlu0
        %v1245 = vpop.trf.xlu0
        %1246 = vxpose.xlu0.c.b16.start [1/8] %v1132, 128
        %1247 = vxpose.xlu0.c.b16.cont [2/8] 0, 128
        %1248 = vxpose.xlu0.c.b16.cont [3/8] 0, 128
        %1249 = vxpose.xlu0.c.b16.cont [4/8] 0, 128
        %1250 = vxpose.xlu0.c.b16.cont [5/8] 0, 128
        %1251 = vxpose.xlu0.c.b16.cont [6/8] 0, 128
        %1252 = vxpose.xlu0.c.b16.cont [7/8] 0, 128
        %1253 = vxpose.xlu0.c.b16.end [8/8] 0, 128
        %v1254 = vpop.trf.xlu0
        %v1255 = vpop.trf.xlu0
        %v1256 = vpop.trf.xlu0
        %v1257 = vpop.trf.xlu0
        %v1258 = vpop.trf.xlu0
        %v1259 = vpop.trf.xlu0
        %v1260 = vpop.trf.xlu0
        %v1261 = vpop.trf.xlu0
        %v1262 = vcombine.low %v1142, %v1206
        %v1264 = vunpack.c.l.s4 1983009808
        %v1265 = vunpack.c.0.s8 %v1264
        %v1266 = vlaneseq
        %v1267 = vshrl.u32 %v1266, 7
        %v1268 = vsub.s32 %v1265, %v1267
        %v1269 = vrot.slane %v1262, %v1268
        %v1270 = vcombine.low %v1174, %v1238
        %v1272 = vunpack.c.l.s4 1983009808
        %v1273 = vunpack.c.0.s8 %v1272
        %v1274 = vlaneseq
        %v1275 = vshrl.u32 %v1274, 7
        %v1276 = vsub.s32 %v1273, %v1275
        %v1277 = vrot.slane %v1270, %v1276
        %v1278 = vcombine.low %v1269, %v1277
        %v1280 = vunpack.c.l.s4 1934713408
        %v1281 = vunpack.c.0.s8 %v1280
        %v1282 = vlaneseq
        %v1283 = vshrl.u32 %v1282, 7
        %v1284 = vsub.s32 %v1281, %v1283
        %v1285 = vrot.slane %v1278, %v1284
        %v1286 = vcombine.high %v1285, 0
        %v1287 = vcombine.low %v1158, %v1222
        %v1289 = vunpack.c.l.s4 1983009808
        %v1290 = vunpack.c.0.s8 %v1289
        %v1291 = vlaneseq
        %v1292 = vshrl.u32 %v1291, 7
        %v1293 = vsub.s32 %v1290, %v1292
        %v1294 = vrot.slane %v1287, %v1293
        %v1295 = vcombine.low %v1190, %v1254
        %v1297 = vunpack.c.l.s4 1983009808
        %v1298 = vunpack.c.0.s8 %v1297
        %v1299 = vlaneseq
        %v1300 = vshrl.u32 %v1299, 7
        %v1301 = vsub.s32 %v1298, %v1300
        %v1302 = vrot.slane %v1295, %v1301
        %v1303 = vcombine.low %v1294, %v1302
        %v1305 = vunpack.c.l.s4 1934713408
        %v1306 = vunpack.c.0.s8 %v1305
        %v1307 = vlaneseq
        %v1308 = vshrl.u32 %v1307, 7
        %v1309 = vsub.s32 %v1306, %v1308
        %v1310 = vrot.slane %v1303, %v1309
        %v1311 = vcombine.high %v1310, 0
        %v1314 = vpack.i.b16 %v1310, %v1285
        %v1315 = vshrl.u32 %v1285, 16
        %v1316 = vshrl.u32 %v1310, 16
        %v1317 = vpack.i.b16 %v1316, %v1315
        %v1320 = vpack.i.b16 %v1311, %v1286
        %v1321 = vshrl.u32 %v1286, 16
        %v1322 = vshrl.u32 %v1311, 16
        %v1323 = vpack.i.b16 %v1322, %v1321
        %vm1324 = vcmask 64512
        %v1326 = vsel %vm1324, %v896, 0
        %vm1328 = vcmask 1043456
        %v1330 = vsel %vm1328, %v1314, 0
        %1332 = vmatprep.subr.bf16.mxu0 0
        %1333 = vmatpush1.bf16.msra.mxu0 %v1330
        %1334 = vmatprep.subr.bf16.mxu0 0
        %1335 = vmatpush1.bf16.msra.mxu0 0
        %1336 = vmatprep.subr.bf16.mxu0 0
        %1337 = vmatpush1.bf16.msra.mxu0 0
        %1338 = vmatprep.subr.bf16.mxu0 0
        %1339 = vmatpush1.bf16.msra.mxu0 0
        %1340 = vmatprep.subr.bf16.mxu0 0
        %1341 = vmatpush1.bf16.msra.mxu0 0
        %1342 = vmatprep.subr.bf16.mxu0 0
        %1343 = vmatpush1.bf16.msra.mxu0 0
        %1344 = vmatprep.subr.bf16.mxu0 0
        %1345 = vmatpush1.bf16.msra.mxu0 0
        %1346 = vmatprep.subr.bf16.mxu0 0
        %1347 = vmatpush1.bf16.msra.mxu0 0
        %1348 = vmatprep.subr.bf16.mxu0 0
        %1349 = vmatpush1.bf16.msra.mxu0 0
        %1350 = vmatprep.subr.bf16.mxu0 0
        %1351 = vmatpush1.bf16.msra.mxu0 0
        %1352 = vmatprep.subr.bf16.mxu0 0
        %1353 = vmatpush1.bf16.msra.mxu0 0
        %1354 = vmatprep.subr.bf16.mxu0 0
        %1355 = vmatpush1.bf16.msra.mxu0 0
        %1356 = vmatprep.subr.bf16.mxu0 0
        %1357 = vmatpush1.bf16.msra.mxu0 0
        %1358 = vmatprep.subr.bf16.mxu0 0
        %1359 = vmatpush1.bf16.msra.mxu0 0
        %1360 = vmatprep.subr.bf16.mxu0 0
        %1361 = vmatpush1.bf16.msra.mxu0 0
        %1362 = vmatprep.subr.bf16.mxu0 0
        %1363 = vmatpush1.bf16.msra.mxu0 0
        %1364 = vmatprep.mubr.bf16.mxu0 0
        %1365 = vmatmul.mubr.bf16.gmra.mrb[0].mxu0 %v1326
        %v1366 = vpop.f32.mrb[0].mxu0
        %v1367 = vadd.f32 0.0, %v1366
        %v1368 = vpop.f32.mrb[0].mxu0
        %v1369 = vpop.f32.mrb[0].mxu0
        %v1370 = vpop.f32.mrb[0].mxu0
        %1371 = vdwg.mxu0
        %v1373 = vsel %vm1324, %v899, 0
        %v1376 = vsel %vm1328, %v1317, 0
        %1378 = vmatprep.subr.bf16.mxu0 0
        %1379 = vmatpush1.bf16.msra.mxu0 %v1376
        %1380 = vmatprep.subr.bf16.mxu0 0
        %1381 = vmatpush1.bf16.msra.mxu0 0
        %1382 = vmatprep.subr.bf16.mxu0 0
        %1383 = vmatpush1.bf16.msra.mxu0 0
        %1384 = vmatprep.subr.bf16.mxu0 0
        %1385 = vmatpush1.bf16.msra.mxu0 0
        %1386 = vmatprep.subr.bf16.mxu0 0
        %1387 = vmatpush1.bf16.msra.mxu0 0
        %1388 = vmatprep.subr.bf16.mxu0 0
        %1389 = vmatpush1.bf16.msra.mxu0 0
        %1390 = vmatprep.subr.bf16.mxu0 0
        %1391 = vmatpush1.bf16.msra.mxu0 0
        %1392 = vmatprep.subr.bf16.mxu0 0
        %1393 = vmatpush1.bf16.msra.mxu0 0
        %1394 = vmatprep.subr.bf16.mxu0 0
        %1395 = vmatpush1.bf16.msra.mxu0 0
        %1396 = vmatprep.subr.bf16.mxu0 0
        %1397 = vmatpush1.bf16.msra.mxu0 0
        %1398 = vmatprep.subr.bf16.mxu0 0
        %1399 = vmatpush1.bf16.msra.mxu0 0
        %1400 = vmatprep.subr.bf16.mxu0 0
        %1401 = vmatpush1.bf16.msra.mxu0 0
        %1402 = vmatprep.subr.bf16.mxu0 0
        %1403 = vmatpush1.bf16.msra.mxu0 0
        %1404 = vmatprep.subr.bf16.mxu0 0
        %1405 = vmatpush1.bf16.msra.mxu0 0
        %1406 = vmatprep.subr.bf16.mxu0 0
        %1407 = vmatpush1.bf16.msra.mxu0 0
        %1408 = vmatprep.subr.bf16.mxu0 0
        %1409 = vmatpush1.bf16.msra.mxu0 0
        %1410 = vmatprep.mubr.bf16.mxu0 0
        %1411 = vmatmul.mubr.bf16.gmra.mrb[0].mxu0 %v1373
        %v1412 = vpop.f32.mrb[0].mxu0
        %v1413 = vadd.f32 0.0, %v1412
        %v1414 = vpop.f32.mrb[0].mxu0
        %v1415 = vpop.f32.mrb[0].mxu0
        %v1416 = vpop.f32.mrb[0].mxu0
        %1417 = vdwg.mxu0
        %v1419 = vsel %vm1324, %v902, 0
        %v1422 = vsel %vm1328, %v1320, 0
        %1424 = vmatprep.subr.bf16.mxu0 0
        %1425 = vmatpush1.bf16.msra.mxu0 %v1422
        %1426 = vmatprep.subr.bf16.mxu0 0
        %1427 = vmatpush1.bf16.msra.mxu0 0
        %1428 = vmatprep.subr.bf16.mxu0 0
        %1429 = vmatpush1.bf16.msra.mxu0 0
        %1430 = vmatprep.subr.bf16.mxu0 0
        %1431 = vmatpush1.bf16.msra.mxu0 0
        %1432 = vmatprep.subr.bf16.mxu0 0
        %1433 = vmatpush1.bf16.msra.mxu0 0
        %1434 = vmatprep.subr.bf16.mxu0 0
        %1435 = vmatpush1.bf16.msra.mxu0 0
        %1436 = vmatprep.subr.bf16.mxu0 0
        %1437 = vmatpush1.bf16.msra.mxu0 0
        %1438 = vmatprep.subr.bf16.mxu0 0
        %1439 = vmatpush1.bf16.msra.mxu0 0
        %1440 = vmatprep.subr.bf16.mxu0 0
        %1441 = vmatpush1.bf16.msra.mxu0 0
        %1442 = vmatprep.subr.bf16.mxu0 0
        %1443 = vmatpush1.bf16.msra.mxu0 0
        %1444 = vmatprep.subr.bf16.mxu0 0
        %1445 = vmatpush1.bf16.msra.mxu0 0
        %1446 = vmatprep.subr.bf16.mxu0 0
        %1447 = vmatpush1.bf16.msra.mxu0 0
        %1448 = vmatprep.subr.bf16.mxu0 0
        %1449 = vmatpush1.bf16.msra.mxu0 0
        %1450 = vmatprep.subr.bf16.mxu0 0
        %1451 = vmatpush1.bf16.msra.mxu0 0
        %1452 = vmatprep.subr.bf16.mxu0 0
        %1453 = vmatpush1.bf16.msra.mxu0 0
        %1454 = vmatprep.subr.bf16.mxu0 0
        %1455 = vmatpush1.bf16.msra.mxu0 0
        %1456 = vmatprep.mubr.bf16.mxu0 0
        %1457 = vmatmul.mubr.bf16.gmra.mrb[0].mxu0 %v1419
        %v1458 = vpop.f32.mrb[0].mxu0
        %v1459 = vadd.f32 0.0, %v1458
        %v1460 = vpop.f32.mrb[0].mxu0
        %v1461 = vpop.f32.mrb[0].mxu0
        %v1462 = vpop.f32.mrb[0].mxu0
        %1463 = vdwg.mxu0
        %v1465 = vsel %vm1324, %v905, 0
        %v1468 = vsel %vm1328, %v1323, 0
        %1470 = vmatprep.subr.bf16.mxu0 0
        %1471 = vmatpush1.bf16.msra.mxu0 %v1468
        %1472 = vmatprep.subr.bf16.mxu0 0
        %1473 = vmatpush1.bf16.msra.mxu0 0
        %1474 = vmatprep.subr.bf16.mxu0 0
        %1475 = vmatpush1.bf16.msra.mxu0 0
        %1476 = vmatprep.subr.bf16.mxu0 0
        %1477 = vmatpush1.bf16.msra.mxu0 0
        %1478 = vmatprep.subr.bf16.mxu0 0
        %1479 = vmatpush1.bf16.msra.mxu0 0
        %1480 = vmatprep.subr.bf16.mxu0 0
        %1481 = vmatpush1.bf16.msra.mxu0 0
        %1482 = vmatprep.subr.bf16.mxu0 0
        %1483 = vmatpush1.bf16.msra.mxu0 0
        %1484 = vmatprep.subr.bf16.mxu0 0
        %1485 = vmatpush1.bf16.msra.mxu0 0
        %1486 = vmatprep.subr.bf16.mxu0 0
        %1487 = vmatpush1.bf16.msra.mxu0 0
        %1488 = vmatprep.subr.bf16.mxu0 0
        %1489 = vmatpush1.bf16.msra.mxu0 0
        %1490 = vmatprep.subr.bf16.mxu0 0
        %1491 = vmatpush1.bf16.msra.mxu0 0
        %1492 = vmatprep.subr.bf16.mxu0 0
        %1493 = vmatpush1.bf16.msra.mxu0 0
        %1494 = vmatprep.subr.bf16.mxu0 0
        %1495 = vmatpush1.bf16.msra.mxu0 0
        %1496 = vmatprep.subr.bf16.mxu0 0
        %1497 = vmatpush1.bf16.msra.mxu0 0
        %1498 = vmatprep.subr.bf16.mxu0 0
        %1499 = vmatpush1.bf16.msra.mxu0 0
        %1500 = vmatprep.subr.bf16.mxu0 0
        %1501 = vmatpush1.bf16.msra.mxu0 0
        %1502 = vmatprep.mubr.bf16.mxu0 0
        %1503 = vmatmul.mubr.bf16.gmra.mrb[0].mxu0 %v1465
        %v1504 = vpop.f32.mrb[0].mxu0
        %v1505 = vadd.f32 0.0, %v1504
        %v1506 = vpop.f32.mrb[0].mxu0
        %v1507 = vpop.f32.mrb[0].mxu0
        %v1508 = vpop.f32.mrb[0].mxu0
        %1509 = vdwg.mxu0
        %v1510 = vmul.f32 %v1367, 0.35355338
        %v1511 = vmul.f32 %v1413, 0.35355338
        %v1512 = vmul.f32 %v1459, 0.35355338
        %v1513 = vmul.f32 %v1505, 0.35355338
        %v1514 = vadd.f32 %v1510, %v581
        %v1515 = vadd.f32 %v1511, %v581
        %v1516 = vadd.f32 %v1512, %v581
        %v1517 = vadd.f32 %v1513, %v581
        %v1518 = vsel %vm1324, %v1514, -inf
        %1519 = vmax.xlane.f32.xlu0 %v1518
        %v1520 = vpop.xlane.xlu0 %1519
        %v1521 = vsel %vm1324, %v1515, -inf
        %1522 = vmax.xlane.f32.xlu0 %v1521
        %v1523 = vpop.xlane.xlu0 %1522
        %v1524 = vsel %vm1324, %v1516, -inf
        %1525 = vmax.xlane.f32.xlu0 %v1524
        %v1526 = vpop.xlane.xlu0 %1525
        %v1527 = vsel %vm1324, %v1517, -inf
        %1528 = vmax.xlane.f32.xlu0 %v1527
        %v1529 = vpop.xlane.xlu0 %1528
        %v1530 = vsub.f32 %v1514, %v1520
        %v1531 = vsub.f32 %v1515, %v1523
        %v1532 = vsub.f32 %v1516, %v1526
        %v1533 = vsub.f32 %v1517, %v1529
        %v1534 = vmul.f32 %v1530, 1.442695
        %v1535 = vpow.pop %v1534
        %v1536 = vmul.f32 %v1531, 1.442695
        %v1537 = vpow.pop %v1536
        %v1538 = vmul.f32 %v1532, 1.442695
        %v1539 = vpow.pop %v1538
        %v1540 = vmul.f32 %v1533, 1.442695
        %v1541 = vpow.pop %v1540
        %v1542 = vsel %vm1324, %v1535, 0.0
        %1543 = vadd.xlane.f32.xlu0 %v1542
        %v1544 = vpop.xlane.xlu0 %1543
        %v1545 = vsel %vm1324, %v1537, 0.0
        %1546 = vadd.xlane.f32.xlu0 %v1545
        %v1547 = vpop.xlane.xlu0 %1546
        %v1548 = vsel %vm1324, %v1539, 0.0
        %1549 = vadd.xlane.f32.xlu0 %v1548
        %v1550 = vpop.xlane.xlu0 %1549
        %v1551 = vsel %vm1324, %v1541, 0.0
        %1552 = vadd.xlane.f32.xlu0 %v1551
        %v1553 = vpop.xlane.xlu0 %1552
        %v1554 = vrcp.pop %v1544
        %v1555 = vrcp.pop %v1547
        %v1556 = vrcp.pop %v1550
        %v1557 = vrcp.pop %v1553
        %v1558 = vmul.f32 %v1535, %v1554
        %v1559 = vmul.f32 %v1537, %v1555
        %v1560 = vmul.f32 %v1539, %v1556
        %v1561 = vmul.f32 %v1541, %v1557
        %v1562 = vpack.c.bf16 %v1558, %v1558
        %v1563 = vpack.c.bf16 %v1559, %v1559
        %v1564 = vpack.c.bf16 %v1560, %v1560
        %v1565 = vpack.c.bf16 %v1561, %v1561
        %1566 = vxpose.xlu0.c.b16.start [1/8] %v836, 128
        %1567 = vxpose.xlu0.c.b16.cont [2/8] 0, 128
        %1568 = vxpose.xlu0.c.b16.cont [3/8] 0, 128
        %1569 = vxpose.xlu0.c.b16.cont [4/8] 0, 128
        %1570 = vxpose.xlu0.c.b16.cont [5/8] 0, 128
        %1571 = vxpose.xlu0.c.b16.cont [6/8] 0, 128
        %1572 = vxpose.xlu0.c.b16.cont [7/8] 0, 128
        %1573 = vxpose.xlu0.c.b16.end [8/8] 0, 128
        %v1574 = vpop.trf.xlu0
        %v1575 = vpop.trf.xlu0
        %v1576 = vpop.trf.xlu0
        %v1577 = vpop.trf.xlu0
        %v1578 = vpop.trf.xlu0
        %v1579 = vpop.trf.xlu0
        %v1580 = vpop.trf.xlu0
        %v1581 = vpop.trf.xlu0
        %1582 = vxpose.xlu0.c.b16.start [1/8] %v837, 128
        %1583 = vxpose.xlu0.c.b16.cont [2/8] 0, 128
        %1584 = vxpose.xlu0.c.b16.cont [3/8] 0, 128
        %1585 = vxpose.xlu0.c.b16.cont [4/8] 0, 128
        %1586 = vxpose.xlu0.c.b16.cont [5/8] 0, 128
        %1587 = vxpose.xlu0.c.b16.cont [6/8] 0, 128
        %1588 = vxpose.xlu0.c.b16.cont [7/8] 0, 128
        %1589 = vxpose.xlu0.c.b16.end [8/8] 0, 128
        %v1590 = vpop.trf.xlu0
        %v1591 = vpop.trf.xlu0
        %v1592 = vpop.trf.xlu0
        %v1593 = vpop.trf.xlu0
        %v1594 = vpop.trf.xlu0
        %v1595 = vpop.trf.xlu0
        %v1596 = vpop.trf.xlu0
        %v1597 = vpop.trf.xlu0
        %1598 = vxpose.xlu0.c.b16.start [1/8] %v838, 128
        %1599 = vxpose.xlu0.c.b16.cont [2/8] 0, 128
        %1600 = vxpose.xlu0.c.b16.cont [3/8] 0, 128
        %1601 = vxpose.xlu0.c.b16.cont [4/8] 0, 128
        %1602 = vxpose.xlu0.c.b16.cont [5/8] 0, 128
        %1603 = vxpose.xlu0.c.b16.cont [6/8] 0, 128
        %1604 = vxpose.xlu0.c.b16.cont [7/8] 0, 128
        %1605 = vxpose.xlu0.c.b16.end [8/8] 0, 128
        %v1606 = vpop.trf.xlu0
        %v1607 = vpop.trf.xlu0
        %v1608 = vpop.trf.xlu0
        %v1609 = vpop.trf.xlu0
        %v1610 = vpop.trf.xlu0
        %v1611 = vpop.trf.xlu0
        %v1612 = vpop.trf.xlu0
        %v1613 = vpop.trf.xlu0
        %1614 = vxpose.xlu0.c.b16.start [1/8] %v839, 128
        %1615 = vxpose.xlu0.c.b16.cont [2/8] 0, 128
        %1616 = vxpose.xlu0.c.b16.cont [3/8] 0, 128
        %1617 = vxpose.xlu0.c.b16.cont [4/8] 0, 128
        %1618 = vxpose.xlu0.c.b16.cont [5/8] 0, 128
        %1619 = vxpose.xlu0.c.b16.cont [6/8] 0, 128
        %1620 = vxpose.xlu0.c.b16.cont [7/8] 0, 128
        %1621 = vxpose.xlu0.c.b16.end [8/8] 0, 128
        %v1622 = vpop.trf.xlu0
        %v1623 = vpop.trf.xlu0
        %v1624 = vpop.trf.xlu0
        %v1625 = vpop.trf.xlu0
        %v1626 = vpop.trf.xlu0
        %v1627 = vpop.trf.xlu0
        %v1628 = vpop.trf.xlu0
        %v1629 = vpop.trf.xlu0
        %1630 = vxpose.xlu0.c.b16.start [1/8] %v840, 128
        %1631 = vxpose.xlu0.c.b16.cont [2/8] 0, 128
        %1632 = vxpose.xlu0.c.b16.cont [3/8] 0, 128
        %1633 = vxpose.xlu0.c.b16.cont [4/8] 0, 128
        %1634 = vxpose.xlu0.c.b16.cont [5/8] 0, 128
        %1635 = vxpose.xlu0.c.b16.cont [6/8] 0, 128
        %1636 = vxpose.xlu0.c.b16.cont [7/8] 0, 128
        %1637 = vxpose.xlu0.c.b16.end [8/8] 0, 128
        %v1638 = vpop.trf.xlu0
        %v1639 = vpop.trf.xlu0
        %v1640 = vpop.trf.xlu0
        %v1641 = vpop.trf.xlu0
        %v1642 = vpop.trf.xlu0
        %v1643 = vpop.trf.xlu0
        %v1644 = vpop.trf.xlu0
        %v1645 = vpop.trf.xlu0
        %1646 = vxpose.xlu0.c.b16.start [1/8] %v841, 128
        %1647 = vxpose.xlu0.c.b16.cont [2/8] 0, 128
        %1648 = vxpose.xlu0.c.b16.cont [3/8] 0, 128
        %1649 = vxpose.xlu0.c.b16.cont [4/8] 0, 128
        %1650 = vxpose.xlu0.c.b16.cont [5/8] 0, 128
        %1651 = vxpose.xlu0.c.b16.cont [6/8] 0, 128
        %1652 = vxpose.xlu0.c.b16.cont [7/8] 0, 128
        %1653 = vxpose.xlu0.c.b16.end [8/8] 0, 128
        %v1654 = vpop.trf.xlu0
        %v1655 = vpop.trf.xlu0
        %v1656 = vpop.trf.xlu0
        %v1657 = vpop.trf.xlu0
        %v1658 = vpop.trf.xlu0
        %v1659 = vpop.trf.xlu0
        %v1660 = vpop.trf.xlu0
        %v1661 = vpop.trf.xlu0
        %1662 = vxpose.xlu0.c.b16.start [1/8] %v842, 128
        %1663 = vxpose.xlu0.c.b16.cont [2/8] 0, 128
        %1664 = vxpose.xlu0.c.b16.cont [3/8] 0, 128
        %1665 = vxpose.xlu0.c.b16.cont [4/8] 0, 128
        %1666 = vxpose.xlu0.c.b16.cont [5/8] 0, 128
        %1667 = vxpose.xlu0.c.b16.cont [6/8] 0, 128
        %1668 = vxpose.xlu0.c.b16.cont [7/8] 0, 128
        %1669 = vxpose.xlu0.c.b16.end [8/8] 0, 128
        %v1670 = vpop.trf.xlu0
        %v1671 = vpop.trf.xlu0
        %v1672 = vpop.trf.xlu0
        %v1673 = vpop.trf.xlu0
        %v1674 = vpop.trf.xlu0
        %v1675 = vpop.trf.xlu0
        %v1676 = vpop.trf.xlu0
        %v1677 = vpop.trf.xlu0
        %1678 = vxpose.xlu0.c.b16.start [1/8] %v843, 128
        %1679 = vxpose.xlu0.c.b16.cont [2/8] 0, 128
        %1680 = vxpose.xlu0.c.b16.cont [3/8] 0, 128
        %1681 = vxpose.xlu0.c.b16.cont [4/8] 0, 128
        %1682 = vxpose.xlu0.c.b16.cont [5/8] 0, 128
        %1683 = vxpose.xlu0.c.b16.cont [6/8] 0, 128
        %1684 = vxpose.xlu0.c.b16.cont [7/8] 0, 128
        %1685 = vxpose.xlu0.c.b16.end [8/8] 0, 128
        %v1686 = vpop.trf.xlu0
        %v1687 = vpop.trf.xlu0
        %v1688 = vpop.trf.xlu0
        %v1689 = vpop.trf.xlu0
        %v1690 = vpop.trf.xlu0
        %v1691 = vpop.trf.xlu0
        %v1692 = vpop.trf.xlu0
        %v1693 = vpop.trf.xlu0
        %v1694 = vcombine.low %v1574, %v1638
        %v1696 = vunpack.c.l.s4 1983009808
        %v1697 = vunpack.c.0.s8 %v1696
        %v1698 = vlaneseq
        %v1699 = vshrl.u32 %v1698, 7
        %v1700 = vsub.s32 %v1697, %v1699
        %v1701 = vrot.slane %v1694, %v1700
        %v1702 = vcombine.low %v1606, %v1670
        %v1704 = vunpack.c.l.s4 1983009808
        %v1705 = vunpack.c.0.s8 %v1704
        %v1706 = vlaneseq
        %v1707 = vshrl.u32 %v1706, 7
        %v1708 = vsub.s32 %v1705, %v1707
        %v1709 = vrot.slane %v1702, %v1708
        %v1710 = vcombine.low %v1701, %v1709
        %v1711 = vcombine.high %v1701, %v1709
        %v1713 = vunpack.c.l.s4 1934713408
        %v1714 = vunpack.c.0.s8 %v1713
        %v1715 = vlaneseq
        %v1716 = vshrl.u32 %v1715, 7
        %v1717 = vsub.s32 %v1714, %v1716
        %v1718 = vrot.slane %v1710, %v1717
        %v1720 = vunpack.c.l.s4 1934713408
        %v1721 = vunpack.c.0.s8 %v1720
        %v1722 = vlaneseq
        %v1723 = vshrl.u32 %v1722, 7
        %v1724 = vsub.s32 %v1721, %v1723
        %v1725 = vrot.slane %v1711, %v1724
        %v1726 = vcombine.high %v1718, 0
        %v1727 = vcombine.high %v1725, 0
        %v1728 = vcombine.low %v1590, %v1654
        %v1730 = vunpack.c.l.s4 1983009808
        %v1731 = vunpack.c.0.s8 %v1730
        %v1732 = vlaneseq
        %v1733 = vshrl.u32 %v1732, 7
        %v1734 = vsub.s32 %v1731, %v1733
        %v1735 = vrot.slane %v1728, %v1734
        %v1736 = vcombine.low %v1622, %v1686
        %v1738 = vunpack.c.l.s4 1983009808
        %v1739 = vunpack.c.0.s8 %v1738
        %v1740 = vlaneseq
        %v1741 = vshrl.u32 %v1740, 7
        %v1742 = vsub.s32 %v1739, %v1741
        %v1743 = vrot.slane %v1736, %v1742
        %v1744 = vcombine.low %v1735, %v1743
        %v1745 = vcombine.high %v1735, %v1743
        %v1747 = vunpack.c.l.s4 1934713408
        %v1748 = vunpack.c.0.s8 %v1747
        %v1749 = vlaneseq
        %v1750 = vshrl.u32 %v1749, 7
        %v1751 = vsub.s32 %v1748, %v1750
        %v1752 = vrot.slane %v1744, %v1751
        %v1754 = vunpack.c.l.s4 1934713408
        %v1755 = vunpack.c.0.s8 %v1754
        %v1756 = vlaneseq
        %v1757 = vshrl.u32 %v1756, 7
        %v1758 = vsub.s32 %v1755, %v1757
        %v1759 = vrot.slane %v1745, %v1758
        %v1760 = vcombine.high %v1752, 0
        %v1761 = vcombine.high %v1759, 0
        %v1764 = vpack.i.b16 %v1752, %v1718
        %v1766 = vshrl.u32 %v1718, 16
        %v1767 = vshrl.u32 %v1752, 16
        %v1768 = vpack.i.b16 %v1767, %v1766
        %v1772 = vpack.i.b16 %v1760, %v1726
        %v1774 = vshrl.u32 %v1726, 16
        %v1775 = vshrl.u32 %v1760, 16
        %v1776 = vpack.i.b16 %v1775, %v1774
        %v1780 = vpack.i.b16 %v1759, %v1725
        %v1782 = vshrl.u32 %v1725, 16
        %v1783 = vshrl.u32 %v1759, 16
        %v1784 = vpack.i.b16 %v1783, %v1782
        %v1788 = vpack.i.b16 %v1761, %v1727
        %v1790 = vshrl.u32 %v1727, 16
        %v1791 = vshrl.u32 %v1761, 16
        %v1792 = vpack.i.b16 %v1791, %v1790
        %1794 = vxpose.xlu0.c.b16.start [1/8] %v1764, 128
        %1795 = vxpose.xlu0.c.b16.cont [2/8] 0, 128
        %1796 = vxpose.xlu0.c.b16.cont [3/8] 0, 128
        %1797 = vxpose.xlu0.c.b16.cont [4/8] 0, 128
        %1798 = vxpose.xlu0.c.b16.cont [5/8] 0, 128
        %1799 = vxpose.xlu0.c.b16.cont [6/8] 0, 128
        %1800 = vxpose.xlu0.c.b16.cont [7/8] 0, 128
        %1801 = vxpose.xlu0.c.b16.end [8/8] 0, 128
        %v1802 = vpop.trf.xlu0
        %v1803 = vpop.trf.xlu0
        %v1804 = vpop.trf.xlu0
        %v1805 = vpop.trf.xlu0
        %v1806 = vpop.trf.xlu0
        %v1807 = vpop.trf.xlu0
        %v1808 = vpop.trf.xlu0
        %v1809 = vpop.trf.xlu0
        %1810 = vxpose.xlu0.c.b16.start [1/8] %v1768, 128
        %1811 = vxpose.xlu0.c.b16.cont [2/8] 0, 128
        %1812 = vxpose.xlu0.c.b16.cont [3/8] 0, 128
        %1813 = vxpose.xlu0.c.b16.cont [4/8] 0, 128
        %1814 = vxpose.xlu0.c.b16.cont [5/8] 0, 128
        %1815 = vxpose.xlu0.c.b16.cont [6/8] 0, 128
        %1816 = vxpose.xlu0.c.b16.cont [7/8] 0, 128
        %1817 = vxpose.xlu0.c.b16.end [8/8] 0, 128
        %v1818 = vpop.trf.xlu0
        %v1819 = vpop.trf.xlu0
        %v1820 = vpop.trf.xlu0
        %v1821 = vpop.trf.xlu0
        %v1822 = vpop.trf.xlu0
        %v1823 = vpop.trf.xlu0
        %v1824 = vpop.trf.xlu0
        %v1825 = vpop.trf.xlu0
        %1826 = vxpose.xlu0.c.b16.start [1/8] %v1772, 128
        %1827 = vxpose.xlu0.c.b16.cont [2/8] 0, 128
        %1828 = vxpose.xlu0.c.b16.cont [3/8] 0, 128
        %1829 = vxpose.xlu0.c.b16.cont [4/8] 0, 128
        %1830 = vxpose.xlu0.c.b16.cont [5/8] 0, 128
        %1831 = vxpose.xlu0.c.b16.cont [6/8] 0, 128
        %1832 = vxpose.xlu0.c.b16.cont [7/8] 0, 128
        %1833 = vxpose.xlu0.c.b16.end [8/8] 0, 128
        %v1834 = vpop.trf.xlu0
        %v1835 = vpop.trf.xlu0
        %v1836 = vpop.trf.xlu0
        %v1837 = vpop.trf.xlu0
        %v1838 = vpop.trf.xlu0
        %v1839 = vpop.trf.xlu0
        %v1840 = vpop.trf.xlu0
        %v1841 = vpop.trf.xlu0
        %1842 = vxpose.xlu0.c.b16.start [1/8] %v1776, 128
        %1843 = vxpose.xlu0.c.b16.cont [2/8] 0, 128
        %1844 = vxpose.xlu0.c.b16.cont [3/8] 0, 128
        %1845 = vxpose.xlu0.c.b16.cont [4/8] 0, 128
        %1846 = vxpose.xlu0.c.b16.cont [5/8] 0, 128
        %1847 = vxpose.xlu0.c.b16.cont [6/8] 0, 128
        %1848 = vxpose.xlu0.c.b16.cont [7/8] 0, 128
        %1849 = vxpose.xlu0.c.b16.end [8/8] 0, 128
        %v1850 = vpop.trf.xlu0
        %v1851 = vpop.trf.xlu0
        %v1852 = vpop.trf.xlu0
        %v1853 = vpop.trf.xlu0
        %v1854 = vpop.trf.xlu0
        %v1855 = vpop.trf.xlu0
        %v1856 = vpop.trf.xlu0
        %v1857 = vpop.trf.xlu0
        %1858 = vxpose.xlu0.c.b16.start [1/8] %v1780, 128
        %1859 = vxpose.xlu0.c.b16.cont [2/8] 0, 128
        %1860 = vxpose.xlu0.c.b16.cont [3/8] 0, 128
        %1861 = vxpose.xlu0.c.b16.cont [4/8] 0, 128
        %1862 = vxpose.xlu0.c.b16.cont [5/8] 0, 128
        %1863 = vxpose.xlu0.c.b16.cont [6/8] 0, 128
        %1864 = vxpose.xlu0.c.b16.cont [7/8] 0, 128
        %1865 = vxpose.xlu0.c.b16.end [8/8] 0, 128
        %v1866 = vpop.trf.xlu0
        %v1867 = vpop.trf.xlu0
        %v1868 = vpop.trf.xlu0
        %v1869 = vpop.trf.xlu0
        %v1870 = vpop.trf.xlu0
        %v1871 = vpop.trf.xlu0
        %v1872 = vpop.trf.xlu0
        %v1873 = vpop.trf.xlu0
        %1874 = vxpose.xlu0.c.b16.start [1/8] %v1784, 128
        %1875 = vxpose.xlu0.c.b16.cont [2/8] 0, 128
        %1876 = vxpose.xlu0.c.b16.cont [3/8] 0, 128
        %1877 = vxpose.xlu0.c.b16.cont [4/8] 0, 128
        %1878 = vxpose.xlu0.c.b16.cont [5/8] 0, 128
        %1879 = vxpose.xlu0.c.b16.cont [6/8] 0, 128
        %1880 = vxpose.xlu0.c.b16.cont [7/8] 0, 128
        %1881 = vxpose.xlu0.c.b16.end [8/8] 0, 128
        %v1882 = vpop.trf.xlu0
        %v1883 = vpop.trf.xlu0
        %v1884 = vpop.trf.xlu0
        %v1885 = vpop.trf.xlu0
        %v1886 = vpop.trf.xlu0
        %v1887 = vpop.trf.xlu0
        %v1888 = vpop.trf.xlu0
        %v1889 = vpop.trf.xlu0
        %1890 = vxpose.xlu0.c.b16.start [1/8] %v1788, 128
        %1891 = vxpose.xlu0.c.b16.cont [2/8] 0, 128
        %1892 = vxpose.xlu0.c.b16.cont [3/8] 0, 128
        %1893 = vxpose.xlu0.c.b16.cont [4/8] 0, 128
        %1894 = vxpose.xlu0.c.b16.cont [5/8] 0, 128
        %1895 = vxpose.xlu0.c.b16.cont [6/8] 0, 128
        %1896 = vxpose.xlu0.c.b16.cont [7/8] 0, 128
        %1897 = vxpose.xlu0.c.b16.end [8/8] 0, 128
        %v1898 = vpop.trf.xlu0
        %v1899 = vpop.trf.xlu0
        %v1900 = vpop.trf.xlu0
        %v1901 = vpop.trf.xlu0
        %v1902 = vpop.trf.xlu0
        %v1903 = vpop.trf.xlu0
        %v1904 = vpop.trf.xlu0
        %v1905 = vpop.trf.xlu0
        %1906 = vxpose.xlu0.c.b16.start [1/8] %v1792, 128
        %1907 = vxpose.xlu0.c.b16.cont [2/8] 0, 128
        %1908 = vxpose.xlu0.c.b16.cont [3/8] 0, 128
        %1909 = vxpose.xlu0.c.b16.cont [4/8] 0, 128
        %1910 = vxpose.xlu0.c.b16.cont [5/8] 0, 128
        %1911 = vxpose.xlu0.c.b16.cont [6/8] 0, 128
        %1912 = vxpose.xlu0.c.b16.cont [7/8] 0, 128
        %1913 = vxpose.xlu0.c.b16.end [8/8] 0, 128
        %v1914 = vpop.trf.xlu0
        %v1915 = vpop.trf.xlu0
        %v1916 = vpop.trf.xlu0
        %v1917 = vpop.trf.xlu0
        %v1918 = vpop.trf.xlu0
        %v1919 = vpop.trf.xlu0
        %v1920 = vpop.trf.xlu0
        %v1921 = vpop.trf.xlu0
        %v1922 = vcombine.low %v1802, %v1866
        %v1924 = vunpack.c.l.s4 1983009808
        %v1925 = vunpack.c.0.s8 %v1924
        %v1926 = vlaneseq
        %v1927 = vshrl.u32 %v1926, 7
        %v1928 = vsub.s32 %v1925, %v1927
        %v1929 = vrot.slane %v1922, %v1928
        %v1930 = vcombine.low %v1834, %v1898
        %v1932 = vunpack.c.l.s4 1983009808
        %v1933 = vunpack.c.0.s8 %v1932
        %v1934 = vlaneseq
        %v1935 = vshrl.u32 %v1934, 7
        %v1936 = vsub.s32 %v1933, %v1935
        %v1937 = vrot.slane %v1930, %v1936
        %v1938 = vcombine.low %v1929, %v1937
        %v1940 = vunpack.c.l.s4 1934713408
        %v1941 = vunpack.c.0.s8 %v1940
        %v1942 = vlaneseq
        %v1943 = vshrl.u32 %v1942, 7
        %v1944 = vsub.s32 %v1941, %v1943
        %v1945 = vrot.slane %v1938, %v1944
        %v1946 = vcombine.high %v1945, 0
        %v1947 = vcombine.low %v1818, %v1882
        %v1949 = vunpack.c.l.s4 1983009808
        %v1950 = vunpack.c.0.s8 %v1949
        %v1951 = vlaneseq
        %v1952 = vshrl.u32 %v1951, 7
        %v1953 = vsub.s32 %v1950, %v1952
        %v1954 = vrot.slane %v1947, %v1953
        %v1955 = vcombine.low %v1850, %v1914
        %v1957 = vunpack.c.l.s4 1983009808
        %v1958 = vunpack.c.0.s8 %v1957
        %v1959 = vlaneseq
        %v1960 = vshrl.u32 %v1959, 7
        %v1961 = vsub.s32 %v1958, %v1960
        %v1962 = vrot.slane %v1955, %v1961
        %v1963 = vcombine.low %v1954, %v1962
        %v1965 = vunpack.c.l.s4 1934713408
        %v1966 = vunpack.c.0.s8 %v1965
        %v1967 = vlaneseq
        %v1968 = vshrl.u32 %v1967, 7
        %v1969 = vsub.s32 %v1966, %v1968
        %v1970 = vrot.slane %v1963, %v1969
        %v1971 = vcombine.high %v1970, 0
        %v1974 = vpack.i.b16 %v1970, %v1945
        %v1975 = vshrl.u32 %v1945, 16
        %v1976 = vshrl.u32 %v1970, 16
        %v1977 = vpack.i.b16 %v1976, %v1975
        %v1980 = vpack.i.b16 %v1971, %v1946
        %v1981 = vshrl.u32 %v1946, 16
        %v1982 = vshrl.u32 %v1971, 16
        %v1983 = vpack.i.b16 %v1982, %v1981
        %v1985 = vsel %vm1324, %v1974, 0
        %v1988 = vsel %vm1324, %v1562, 0
        %1990 = vmatprep.subr.bf16.mxu0 0
        %1991 = vmatpush1.bf16.xpose.msra.mxu0 %v1988
        %1992 = vmatprep.subr.bf16.mxu0 0
        %1993 = vmatpush1.bf16.xpose.msra.mxu0 0
        %1994 = vmatprep.subr.bf16.mxu0 0
        %1995 = vmatpush1.bf16.xpose.msra.mxu0 0
        %1996 = vmatprep.subr.bf16.mxu0 0
        %1997 = vmatpush1.bf16.xpose.msra.mxu0 0
        %1998 = vmatprep.subr.bf16.mxu0 0
        %1999 = vmatpush1.bf16.xpose.msra.mxu0 0
        %2000 = vmatprep.subr.bf16.mxu0 0
        %2001 = vmatpush1.bf16.xpose.msra.mxu0 0
        %2002 = vmatprep.subr.bf16.mxu0 0
        %2003 = vmatpush1.bf16.xpose.msra.mxu0 0
        %2004 = vmatprep.subr.bf16.mxu0 0
        %2005 = vmatpush1.bf16.xpose.msra.mxu0 0
        %2006 = vmatprep.subr.bf16.mxu0 0
        %2007 = vmatpush1.bf16.xpose.msra.mxu0 0
        %2008 = vmatprep.subr.bf16.mxu0 0
        %2009 = vmatpush1.bf16.xpose.msra.mxu0 0
        %2010 = vmatprep.subr.bf16.mxu0 0
        %2011 = vmatpush1.bf16.xpose.msra.mxu0 0
        %2012 = vmatprep.subr.bf16.mxu0 0
        %2013 = vmatpush1.bf16.xpose.msra.mxu0 0
        %2014 = vmatprep.subr.bf16.mxu0 0
        %2015 = vmatpush1.bf16.xpose.msra.mxu0 0
        %2016 = vmatprep.subr.bf16.mxu0 0
        %2017 = vmatpush1.bf16.xpose.msra.mxu0 0
        %2018 = vmatprep.subr.bf16.mxu0 0
        %2019 = vmatpush1.bf16.xpose.msra.mxu0 0
        %2020 = vmatprep.subr.bf16.mxu0 0
        %2021 = vmatpush1.bf16.xpose.msra.mxu0 0
        %2022 = vmatprep.mubr.bf16.mxu0 0
        %2023 = vmatmul.mubr.bf16.gmra.mrb[0].mxu0 %v1985
        %v2024 = vpop.f32.mrb[0].mxu0
        %v2025 = vadd.f32 0.0, %v2024
        %v2026 = vpop.f32.mrb[0].mxu0
        %v2027 = vpop.f32.mrb[0].mxu0
        %v2028 = vpop.f32.mrb[0].mxu0
        %2029 = vdwg.mxu0
        %v2031 = vsel %vm1324, %v1977, 0
        %v2034 = vsel %vm1324, %v1563, 0
        %2036 = vmatprep.subr.bf16.mxu0 0
        %2037 = vmatpush1.bf16.xpose.msra.mxu0 %v2034
        %2038 = vmatprep.subr.bf16.mxu0 0
        %2039 = vmatpush1.bf16.xpose.msra.mxu0 0
        %2040 = vmatprep.subr.bf16.mxu0 0
        %2041 = vmatpush1.bf16.xpose.msra.mxu0 0
        %2042 = vmatprep.subr.bf16.mxu0 0
        %2043 = vmatpush1.bf16.xpose.msra.mxu0 0
        %2044 = vmatprep.subr.bf16.mxu0 0
        %2045 = vmatpush1.bf16.xpose.msra.mxu0 0
        %2046 = vmatprep.subr.bf16.mxu0 0
        %2047 = vmatpush1.bf16.xpose.msra.mxu0 0
        %2048 = vmatprep.subr.bf16.mxu0 0
        %2049 = vmatpush1.bf16.xpose.msra.mxu0 0
        %2050 = vmatprep.subr.bf16.mxu0 0
        %2051 = vmatpush1.bf16.xpose.msra.mxu0 0
        %2052 = vmatprep.subr.bf16.mxu0 0
        %2053 = vmatpush1.bf16.xpose.msra.mxu0 0
        %2054 = vmatprep.subr.bf16.mxu0 0
        %2055 = vmatpush1.bf16.xpose.msra.mxu0 0
        %2056 = vmatprep.subr.bf16.mxu0 0
        %2057 = vmatpush1.bf16.xpose.msra.mxu0 0
        %2058 = vmatprep.subr.bf16.mxu0 0
        %2059 = vmatpush1.bf16.xpose.msra.mxu0 0
        %2060 = vmatprep.subr.bf16.mxu0 0
        %2061 = vmatpush1.bf16.xpose.msra.mxu0 0
        %2062 = vmatprep.subr.bf16.mxu0 0
        %2063 = vmatpush1.bf16.xpose.msra.mxu0 0
        %2064 = vmatprep.subr.bf16.mxu0 0
        %2065 = vmatpush1.bf16.xpose.msra.mxu0 0
        %2066 = vmatprep.subr.bf16.mxu0 0
        %2067 = vmatpush1.bf16.xpose.msra.mxu0 0
        %2068 = vmatprep.mubr.bf16.mxu0 0
        %2069 = vmatmul.mubr.bf16.gmra.mrb[0].mxu0 %v2031
        %v2070 = vpop.f32.mrb[0].mxu0
        %v2071 = vadd.f32 0.0, %v2070
        %v2072 = vpop.f32.mrb[0].mxu0
        %v2073 = vpop.f32.mrb[0].mxu0
        %v2074 = vpop.f32.mrb[0].mxu0
        %2075 = vdwg.mxu0
        %v2077 = vsel %vm1324, %v1980, 0
        %v2080 = vsel %vm1324, %v1564, 0
        %2082 = vmatprep.subr.bf16.mxu0 0
        %2083 = vmatpush1.bf16.xpose.msra.mxu0 %v2080
        %2084 = vmatprep.subr.bf16.mxu0 0
        %2085 = vmatpush1.bf16.xpose.msra.mxu0 0
        %2086 = vmatprep.subr.bf16.mxu0 0
        %2087 = vmatpush1.bf16.xpose.msra.mxu0 0
        %2088 = vmatprep.subr.bf16.mxu0 0
        %2089 = vmatpush1.bf16.xpose.msra.mxu0 0
        %2090 = vmatprep.subr.bf16.mxu0 0
        %2091 = vmatpush1.bf16.xpose.msra.mxu0 0
        %2092 = vmatprep.subr.bf16.mxu0 0
        %2093 = vmatpush1.bf16.xpose.msra.mxu0 0
        %2094 = vmatprep.subr.bf16.mxu0 0
        %2095 = vmatpush1.bf16.xpose.msra.mxu0 0
        %2096 = vmatprep.subr.bf16.mxu0 0
        %2097 = vmatpush1.bf16.xpose.msra.mxu0 0
        %2098 = vmatprep.subr.bf16.mxu0 0
        %2099 = vmatpush1.bf16.xpose.msra.mxu0 0
        %2100 = vmatprep.subr.bf16.mxu0 0
        %2101 = vmatpush1.bf16.xpose.msra.mxu0 0
        %2102 = vmatprep.subr.bf16.mxu0 0
        %2103 = vmatpush1.bf16.xpose.msra.mxu0 0
        %2104 = vmatprep.subr.bf16.mxu0 0
        %2105 = vmatpush1.bf16.xpose.msra.mxu0 0
        %2106 = vmatprep.subr.bf16.mxu0 0
        %2107 = vmatpush1.bf16.xpose.msra.mxu0 0
        %2108 = vmatprep.subr.bf16.mxu0 0
        %2109 = vmatpush1.bf16.xpose.msra.mxu0 0
        %2110 = vmatprep.subr.bf16.mxu0 0
        %2111 = vmatpush1.bf16.xpose.msra.mxu0 0
        %2112 = vmatprep.subr.bf16.mxu0 0
        %2113 = vmatpush1.bf16.xpose.msra.mxu0 0
        %2114 = vmatprep.mubr.bf16.mxu0 0
        %2115 = vmatmul.mubr.bf16.gmra.mrb[0].mxu0 %v2077
        %v2116 = vpop.f32.mrb[0].mxu0
        %v2117 = vadd.f32 0.0, %v2116
        %v2118 = vpop.f32.mrb[0].mxu0
        %v2119 = vpop.f32.mrb[0].mxu0
        %v2120 = vpop.f32.mrb[0].mxu0
        %2121 = vdwg.mxu0
        %v2123 = vsel %vm1324, %v1983, 0
        %v2126 = vsel %vm1324, %v1565, 0
        %2128 = vmatprep.subr.bf16.mxu0 0
        %2129 = vmatpush1.bf16.xpose.msra.mxu0 %v2126
        %2130 = vmatprep.subr.bf16.mxu0 0
        %2131 = vmatpush1.bf16.xpose.msra.mxu0 0
        %2132 = vmatprep.subr.bf16.mxu0 0
        %2133 = vmatpush1.bf16.xpose.msra.mxu0 0
        %2134 = vmatprep.subr.bf16.mxu0 0
        %2135 = vmatpush1.bf16.xpose.msra.mxu0 0
        %2136 = vmatprep.subr.bf16.mxu0 0
        %2137 = vmatpush1.bf16.xpose.msra.mxu0 0
        %2138 = vmatprep.subr.bf16.mxu0 0
        %2139 = vmatpush1.bf16.xpose.msra.mxu0 0
        %2140 = vmatprep.subr.bf16.mxu0 0
        %2141 = vmatpush1.bf16.xpose.msra.mxu0 0
        %2142 = vmatprep.subr.bf16.mxu0 0
        %2143 = vmatpush1.bf16.xpose.msra.mxu0 0
        %2144 = vmatprep.subr.bf16.mxu0 0
        %2145 = vmatpush1.bf16.xpose.msra.mxu0 0
        %2146 = vmatprep.subr.bf16.mxu0 0
        %2147 = vmatpush1.bf16.xpose.msra.mxu0 0
        %2148 = vmatprep.subr.bf16.mxu0 0
        %2149 = vmatpush1.bf16.xpose.msra.mxu0 0
        %2150 = vmatprep.subr.bf16.mxu0 0
        %2151 = vmatpush1.bf16.xpose.msra.mxu0 0
        %2152 = vmatprep.subr.bf16.mxu0 0
        %2153 = vmatpush1.bf16.xpose.msra.mxu0 0
        %2154 = vmatprep.subr.bf16.mxu0 0
        %2155 = vmatpush1.bf16.xpose.msra.mxu0 0
        %2156 = vmatprep.subr.bf16.mxu0 0
        %2157 = vmatpush1.bf16.xpose.msra.mxu0 0
        %2158 = vmatprep.subr.bf16.mxu0 0
        %2159 = vmatpush1.bf16.xpose.msra.mxu0 0
        %2160 = vmatprep.mubr.bf16.mxu0 0
        %2161 = vmatmul.mubr.bf16.gmra.mrb[0].mxu0 %v2123
        %v2162 = vpop.f32.mrb[0].mxu0
        %v2163 = vadd.f32 0.0, %v2162
        %v2164 = vpop.f32.mrb[0].mxu0
        %v2165 = vpop.f32.mrb[0].mxu0
        %v2166 = vpop.f32.mrb[0].mxu0
        %2167 = vdwg.mxu0
        %2168 = vxpose.xlu0.b32.start [1/16] %v2025, 128
        %2169 = vxpose.xlu0.b32.cont [2/16] 0.0, 128
        %2170 = vxpose.xlu0.b32.cont [3/16] 0.0, 128
        %2171 = vxpose.xlu0.b32.cont [4/16] 0.0, 128
        %2172 = vxpose.xlu0.b32.cont [5/16] 0.0, 128
        %2173 = vxpose.xlu0.b32.cont [6/16] 0.0, 128
        %2174 = vxpose.xlu0.b32.cont [7/16] 0.0, 128
        %2175 = vxpose.xlu0.b32.cont [8/16] 0.0, 128
        %2176 = vxpose.xlu0.b32.cont [9/16] 0.0, 128
        %2177 = vxpose.xlu0.b32.cont [10/16] 0.0, 128
        %2178 = vxpose.xlu0.b32.cont [11/16] 0.0, 128
        %2179 = vxpose.xlu0.b32.cont [12/16] 0.0, 128
        %2180 = vxpose.xlu0.b32.cont [13/16] 0.0, 128
        %2181 = vxpose.xlu0.b32.cont [14/16] 0.0, 128
        %2182 = vxpose.xlu0.b32.cont [15/16] 0.0, 128
        %2183 = vxpose.xlu0.b32.end [16/16] 0.0, 128
        %v2184 = vpop.trf.xlu0
        %v2185 = vpop.trf.xlu0
        %v2186 = vpop.trf.xlu0
        %v2187 = vpop.trf.xlu0
        %v2188 = vpop.trf.xlu0
        %v2189 = vpop.trf.xlu0
        %v2190 = vpop.trf.xlu0
        %v2191 = vpop.trf.xlu0
        %v2192 = vpop.trf.xlu0
        %v2193 = vpop.trf.xlu0
        %v2194 = vpop.trf.xlu0
        %v2195 = vpop.trf.xlu0
        %v2196 = vpop.trf.xlu0
        %v2197 = vpop.trf.xlu0
        %v2198 = vpop.trf.xlu0
        %v2199 = vpop.trf.xlu0
        %2200 = vxpose.xlu0.b32.start [1/16] %v2071, 128
        %2201 = vxpose.xlu0.b32.cont [2/16] 0.0, 128
        %2202 = vxpose.xlu0.b32.cont [3/16] 0.0, 128
        %2203 = vxpose.xlu0.b32.cont [4/16] 0.0, 128
        %2204 = vxpose.xlu0.b32.cont [5/16] 0.0, 128
        %2205 = vxpose.xlu0.b32.cont [6/16] 0.0, 128
        %2206 = vxpose.xlu0.b32.cont [7/16] 0.0, 128
        %2207 = vxpose.xlu0.b32.cont [8/16] 0.0, 128
        %2208 = vxpose.xlu0.b32.cont [9/16] 0.0, 128
        %2209 = vxpose.xlu0.b32.cont [10/16] 0.0, 128
        %2210 = vxpose.xlu0.b32.cont [11/16] 0.0, 128
        %2211 = vxpose.xlu0.b32.cont [12/16] 0.0, 128
        %2212 = vxpose.xlu0.b32.cont [13/16] 0.0, 128
        %2213 = vxpose.xlu0.b32.cont [14/16] 0.0, 128
        %2214 = vxpose.xlu0.b32.cont [15/16] 0.0, 128
        %2215 = vxpose.xlu0.b32.end [16/16] 0.0, 128
        %v2216 = vpop.trf.xlu0
        %v2217 = vpop.trf.xlu0
        %v2218 = vpop.trf.xlu0
        %v2219 = vpop.trf.xlu0
        %v2220 = vpop.trf.xlu0
        %v2221 = vpop.trf.xlu0
        %v2222 = vpop.trf.xlu0
        %v2223 = vpop.trf.xlu0
        %v2224 = vpop.trf.xlu0
        %v2225 = vpop.trf.xlu0
        %v2226 = vpop.trf.xlu0
        %v2227 = vpop.trf.xlu0
        %v2228 = vpop.trf.xlu0
        %v2229 = vpop.trf.xlu0
        %v2230 = vpop.trf.xlu0
        %v2231 = vpop.trf.xlu0
        %2232 = vxpose.xlu0.b32.start [1/16] %v2117, 128
        %2233 = vxpose.xlu0.b32.cont [2/16] 0.0, 128
        %2234 = vxpose.xlu0.b32.cont [3/16] 0.0, 128
        %2235 = vxpose.xlu0.b32.cont [4/16] 0.0, 128
        %2236 = vxpose.xlu0.b32.cont [5/16] 0.0, 128
        %2237 = vxpose.xlu0.b32.cont [6/16] 0.0, 128
        %2238 = vxpose.xlu0.b32.cont [7/16] 0.0, 128
        %2239 = vxpose.xlu0.b32.cont [8/16] 0.0, 128
        %2240 = vxpose.xlu0.b32.cont [9/16] 0.0, 128
        %2241 = vxpose.xlu0.b32.cont [10/16] 0.0, 128
        %2242 = vxpose.xlu0.b32.cont [11/16] 0.0, 128
        %2243 = vxpose.xlu0.b32.cont [12/16] 0.0, 128
        %2244 = vxpose.xlu0.b32.cont [13/16] 0.0, 128
        %2245 = vxpose.xlu0.b32.cont [14/16] 0.0, 128
        %2246 = vxpose.xlu0.b32.cont [15/16] 0.0, 128
        %2247 = vxpose.xlu0.b32.end [16/16] 0.0, 128
        %v2248 = vpop.trf.xlu0
        %v2249 = vpop.trf.xlu0
        %v2250 = vpop.trf.xlu0
        %v2251 = vpop.trf.xlu0
        %v2252 = vpop.trf.xlu0
        %v2253 = vpop.trf.xlu0
        %v2254 = vpop.trf.xlu0
        %v2255 = vpop.trf.xlu0
        %v2256 = vpop.trf.xlu0
        %v2257 = vpop.trf.xlu0
        %v2258 = vpop.trf.xlu0
        %v2259 = vpop.trf.xlu0
        %v2260 = vpop.trf.xlu0
        %v2261 = vpop.trf.xlu0
        %v2262 = vpop.trf.xlu0
        %v2263 = vpop.trf.xlu0
        %2264 = vxpose.xlu0.b32.start [1/16] %v2163, 128
        %2265 = vxpose.xlu0.b32.cont [2/16] 0.0, 128
        %2266 = vxpose.xlu0.b32.cont [3/16] 0.0, 128
        %2267 = vxpose.xlu0.b32.cont [4/16] 0.0, 128
        %2268 = vxpose.xlu0.b32.cont [5/16] 0.0, 128
        %2269 = vxpose.xlu0.b32.cont [6/16] 0.0, 128
        %2270 = vxpose.xlu0.b32.cont [7/16] 0.0, 128
        %2271 = vxpose.xlu0.b32.cont [8/16] 0.0, 128
        %2272 = vxpose.xlu0.b32.cont [9/16] 0.0, 128
        %2273 = vxpose.xlu0.b32.cont [10/16] 0.0, 128
        %2274 = vxpose.xlu0.b32.cont [11/16] 0.0, 128
        %2275 = vxpose.xlu0.b32.cont [12/16] 0.0, 128
        %2276 = vxpose.xlu0.b32.cont [13/16] 0.0, 128
        %2277 = vxpose.xlu0.b32.cont [14/16] 0.0, 128
        %2278 = vxpose.xlu0.b32.cont [15/16] 0.0, 128
        %2279 = vxpose.xlu0.b32.end [16/16] 0.0, 128
        %v2280 = vpop.trf.xlu0
        %v2281 = vpop.trf.xlu0
        %v2282 = vpop.trf.xlu0
        %v2283 = vpop.trf.xlu0
        %v2284 = vpop.trf.xlu0
        %v2285 = vpop.trf.xlu0
        %v2286 = vpop.trf.xlu0
        %v2287 = vpop.trf.xlu0
        %v2288 = vpop.trf.xlu0
        %v2289 = vpop.trf.xlu0
        %v2290 = vpop.trf.xlu0
        %v2291 = vpop.trf.xlu0
        %v2292 = vpop.trf.xlu0
        %v2293 = vpop.trf.xlu0
        %v2294 = vpop.trf.xlu0
        %v2295 = vpop.trf.xlu0
        %v2296 = vcombine.low %v2184, %v2248
        %v2297 = vcombine.high %v2184, %v2248
        %v2299 = vunpack.c.l.s4 1983009808
        %v2300 = vunpack.c.0.s8 %v2299
        %v2301 = vlaneseq
        %v2302 = vshrl.u32 %v2301, 7
        %v2303 = vsub.s32 %v2300, %v2302
        %v2304 = vrot.slane %v2296, %v2303
        %v2306 = vunpack.c.l.s4 1983009808
        %v2307 = vunpack.c.0.s8 %v2306
        %v2308 = vlaneseq
        %v2309 = vshrl.u32 %v2308, 7
        %v2310 = vsub.s32 %v2307, %v2309
        %v2311 = vrot.slane %v2297, %v2310
        %v2312 = vcombine.low %v2216, %v2280
        %v2313 = vcombine.high %v2216, %v2280
        %v2315 = vunpack.c.l.s4 1983009808
        %v2316 = vunpack.c.0.s8 %v2315
        %v2317 = vlaneseq
        %v2318 = vshrl.u32 %v2317, 7
        %v2319 = vsub.s32 %v2316, %v2318
        %v2320 = vrot.slane %v2312, %v2319
        %v2322 = vunpack.c.l.s4 1983009808
        %v2323 = vunpack.c.0.s8 %v2322
        %v2324 = vlaneseq
        %v2325 = vshrl.u32 %v2324, 7
        %v2326 = vsub.s32 %v2323, %v2325
        %v2327 = vrot.slane %v2313, %v2326
        %v2328 = vcombine.low %v2304, %v2320
        %v2329 = vcombine.high %v2304, %v2320
        %v2331 = vunpack.c.l.s4 1934713408
        %v2332 = vunpack.c.0.s8 %v2331
        %v2333 = vlaneseq
        %v2334 = vshrl.u32 %v2333, 7
        %v2335 = vsub.s32 %v2332, %v2334
        %v2336 = vrot.slane %v2328, %v2335
        %v2338 = vunpack.c.l.s4 1934713408
        %v2339 = vunpack.c.0.s8 %v2338
        %v2340 = vlaneseq
        %v2341 = vshrl.u32 %v2340, 7
        %v2342 = vsub.s32 %v2339, %v2341
        %v2343 = vrot.slane %v2329, %v2342
        %v2344 = vcombine.low %v2311, %v2327
        %v2345 = vcombine.high %v2311, %v2327
        %v2347 = vunpack.c.l.s4 1934713408
        %v2348 = vunpack.c.0.s8 %v2347
        %v2349 = vlaneseq
        %v2350 = vshrl.u32 %v2349, 7
        %v2351 = vsub.s32 %v2348, %v2350
        %v2352 = vrot.slane %v2344, %v2351
        %v2354 = vunpack.c.l.s4 1934713408
        %v2355 = vunpack.c.0.s8 %v2354
        %v2356 = vlaneseq
        %v2357 = vshrl.u32 %v2356, 7
        %v2358 = vsub.s32 %v2355, %v2357
        %v2359 = vrot.slane %v2345, %v2358
        %v2360 = vcombine.high %v2336, 0.0
        %v2361 = vcombine.high %v2343, 0.0
        %v2362 = vcombine.high %v2352, 0.0
        %v2363 = vcombine.high %v2359, 0.0
        %v2364 = vcombine.low %v2336, %v2343
        %v2366 = vunpack.c.l.s4 1983009808
        %v2367 = vunpack.c.0.s8 %v2366
        %v2368 = vlaneseq
        %v2369 = vshrl.u32 %v2368, 7
        %v2370 = vsub.s32 %v2367, %v2369
        %v2371 = vrot.slane %v2364, %v2370
        %v2372 = vcombine.low %v2360, %v2361
        %v2374 = vunpack.c.l.s4 1983009808
        %v2375 = vunpack.c.0.s8 %v2374
        %v2376 = vlaneseq
        %v2377 = vshrl.u32 %v2376, 7
        %v2378 = vsub.s32 %v2375, %v2377
        %v2379 = vrot.slane %v2372, %v2378
        %v2380 = vcombine.low %v2352, %v2359
        %v2382 = vunpack.c.l.s4 1983009808
        %v2383 = vunpack.c.0.s8 %v2382
        %v2384 = vlaneseq
        %v2385 = vshrl.u32 %v2384, 7
        %v2386 = vsub.s32 %v2383, %v2385
        %v2387 = vrot.slane %v2380, %v2386
        %v2388 = vcombine.low %v2362, %v2363
        %v2390 = vunpack.c.l.s4 1983009808
        %v2391 = vunpack.c.0.s8 %v2390
        %v2392 = vlaneseq
        %v2393 = vshrl.u32 %v2392, 7
        %v2394 = vsub.s32 %v2391, %v2393
        %v2395 = vrot.slane %v2388, %v2394
        %v2396 = vcombine.low %v2371, %v2379
        %v2397 = vcombine.high %v2371, %v2379
        %v2399 = vunpack.c.l.s4 1934713408
        %v2400 = vunpack.c.0.s8 %v2399
        %v2401 = vlaneseq
        %v2402 = vshrl.u32 %v2401, 7
        %v2403 = vsub.s32 %v2400, %v2402
        %v2404 = vrot.slane %v2396, %v2403
        %v2406 = vunpack.c.l.s4 1934713408
        %v2407 = vunpack.c.0.s8 %v2406
        %v2408 = vlaneseq
        %v2409 = vshrl.u32 %v2408, 7
        %v2410 = vsub.s32 %v2407, %v2409
        %v2411 = vrot.slane %v2397, %v2410
        %v2412 = vcombine.low %v2387, %v2395
        %v2413 = vcombine.high %v2387, %v2395
        %v2415 = vunpack.c.l.s4 1934713408
        %v2416 = vunpack.c.0.s8 %v2415
        %v2417 = vlaneseq
        %v2418 = vshrl.u32 %v2417, 7
        %v2419 = vsub.s32 %v2416, %v2418
        %v2420 = vrot.slane %v2412, %v2419
        %v2422 = vunpack.c.l.s4 1934713408
        %v2423 = vunpack.c.0.s8 %v2422
        %v2424 = vlaneseq
        %v2425 = vshrl.u32 %v2424, 7
        %v2426 = vsub.s32 %v2423, %v2425
        %v2427 = vrot.slane %v2413, %v2426
        %v2428 = vcombine.low %v2404, %v2420
        %v2429 = vcombine.high %v2404, %v2420
        %v2430 = vcombine.low %v2411, %v2427
        %v2431 = vcombine.high %v2411, %v2427
        %2433 = vrot.lane.b32.xlu0 %v2429, 8
        %v2434 = vpop.permute.xlu0 %2433
        %2437 = vrot.lane.b32.xlu0 %v2430, 16
        %v2438 = vpop.permute.xlu0 %2437
        %2441 = vrot.lane.b32.xlu0 %v2431, 24
        %v2442 = vpop.permute.xlu0 %2441
        %v2444 = vsel %vm1324, %v2428, %v2434
        %vm2445 = vcmask 130048
        %v2446 = vsel %vm2445, %v2444, %v2438
        %vm2447 = vcmask 195584
        %v2448 = vsel %vm2447, %v2446, %v2442
        %v2449 = vpack.c.bf16 %v2448, %v2448
        %v2450 = vld [vmem:[%s4] sm:$0xf]
        %v2451 = vld [vmem:[%s4 + $0x4] sm:$0xf]
        %v2452 = vld [vmem:[%s4 + $0x8] sm:$0xf]
        %v2453 = vld [vmem:[%s4 + $0xc] sm:$0xf]
        %v2458 = vunpack.c.l.b16 %v2450
        %v2459 = vunpack.c.l.b16 %v2451
        %v2460 = vunpack.c.l.b16 %v2452
        %v2461 = vunpack.c.l.b16 %v2453
        %v2462 = vpack.c.b16 %v2459, %v2458
        %v2463 = vpack.c.b16 %v2461, %v2460
        %v2467 = vsel %vm532, %v2449, 0
        %2469 = vmatprep.subr.bf16.mxu0 0
        %2470 = vmatpush1.bf16.msra.mxu0 %v2462
        %2471 = vmatprep.subr.bf16.mxu0 0
        %2472 = vmatpush1.bf16.msra.mxu0 %v2463
        %2473 = vmatprep.subr.bf16.mxu0 0
        %2474 = vmatpush1.bf16.msra.mxu0 0
        %2475 = vmatprep.subr.bf16.mxu0 0
        %2476 = vmatpush1.bf16.msra.mxu0 0
        %2477 = vmatprep.subr.bf16.mxu0 0
        %2478 = vmatpush1.bf16.msra.mxu0 0
        %2479 = vmatprep.subr.bf16.mxu0 0
        %2480 = vmatpush1.bf16.msra.mxu0 0
        %2481 = vmatprep.subr.bf16.mxu0 0
        %2482 = vmatpush1.bf16.msra.mxu0 0
        %2483 = vmatprep.subr.bf16.mxu0 0
        %2484 = vmatpush1.bf16.msra.mxu0 0
        %2485 = vmatprep.subr.bf16.mxu0 0
        %2486 = vmatpush1.bf16.msra.mxu0 0
        %2487 = vmatprep.subr.bf16.mxu0 0
        %2488 = vmatpush1.bf16.msra.mxu0 0
        %2489 = vmatprep.subr.bf16.mxu0 0
        %2490 = vmatpush1.bf16.msra.mxu0 0
        %2491 = vmatprep.subr.bf16.mxu0 0
        %2492 = vmatpush1.bf16.msra.mxu0 0
        %2493 = vmatprep.subr.bf16.mxu0 0
        %2494 = vmatpush1.bf16.msra.mxu0 0
        %2495 = vmatprep.subr.bf16.mxu0 0
        %2496 = vmatpush1.bf16.msra.mxu0 0
        %2497 = vmatprep.subr.bf16.mxu0 0
        %2498 = vmatpush1.bf16.msra.mxu0 0
        %2499 = vmatprep.subr.bf16.mxu0 0
        %2500 = vmatpush1.bf16.msra.mxu0 0
        %2501 = vmatprep.mubr.bf16.mxu0 0
        %2502 = vmatmul.mubr.bf16.gmra.mrb[0].mxu0 %v2467
        %v2503 = vpop.f32.mrb[0].mxu0
        %v2504 = vadd.f32 0.0, %v2503
        %v2505 = vpop.f32.mrb[0].mxu0
        %v2506 = vpop.f32.mrb[0].mxu0
        %v2507 = vpop.f32.mrb[0].mxu0
        %2508 = vdwg.mxu0
        %v2509 = vadd.f32 %v512, %v2504
        %v2510 = vsel %vm532, %v2509, 0.0
        %2511 = vadd.xlane.f32.xlu0 %v2510
        %v2512 = vpop.xlane.xlu0 %2511
        %v2513 = vrcp.pop 32.0
        %v2514 = vmul.f32 %v2512, %v2513
        %v2515 = vsub.f32 %v2509, %v2514
        %v2516 = vmul.f32 %v2515, %v2515
        %v2517 = vsel %vm532, %v2516, 0.0
        %2518 = vadd.xlane.f32.xlu0 %v2517
        %v2519 = vpop.xlane.xlu0 %2518
        %v2520 = vmul.f32 %v2519, %v2513
        %v2521 = vadd.f32 %v2520, 1e-05
        %v2522 = vrsqrt.pop %v2521
        %v2523 = vmul.f32 %v2515, %v2522
        %v2524 = vlaneseq
        %v2525 = vshrl.u32 %v2524, 7
        %v2526 = vsub.s32 0, %v2525
        %v2527 = vrot.slane %v514, %v2526
        %v2528 = vmul.f32 %v2523, %v2527
        %v2529 = vlaneseq
        %v2530 = vshrl.u32 %v2529, 7
        %v2531 = vsub.s32 1, %v2530
        %v2532 = vrot.slane %v514, %v2531
        %v2533 = vadd.f32 %v2528, %v2532
        %v2534 = vpack.c.bf16 %v2533, %v2533
        %v2535 = vld [vmem:[#allocation2] sm:$0xf]
        %v2536 = vld [vmem:[#allocation2 + $0x4] sm:$0xf]
        %v2537 = vld [vmem:[#allocation2 + $0x8] sm:$0xf]
        %v2538 = vld [vmem:[#allocation2 + $0xc] sm:$0xf]
        %v2543 = vunpack.c.l.b16 %v2535
        %v2544 = vunpack.c.l.b16 %v2536
        %v2545 = vunpack.c.l.b16 %v2537
        %v2546 = vunpack.c.l.b16 %v2538
        %v2547 = vpack.c.b16 %v2544, %v2543
        %v2548 = vpack.c.b16 %v2546, %v2545
        %v2552 = vsel %vm532, %v2534, 0
        %2554 = vmatprep.subr.bf16.mxu0 0
        %2555 = vmatpush1.bf16.msra.mxu0 %v2547
        %2556 = vmatprep.subr.bf16.mxu0 0
        %2557 = vmatpush1.bf16.msra.mxu0 %v2548
        %2558 = vmatprep.subr.bf16.mxu0 0
        %2559 = vmatpush1.bf16.msra.mxu0 0
        %2560 = vmatprep.subr.bf16.mxu0 0
        %2561 = vmatpush1.bf16.msra.mxu0 0
        %2562 = vmatprep.subr.bf16.mxu0 0
        %2563 = vmatpush1.bf16.msra.mxu0 0
        %2564 = vmatprep.subr.bf16.mxu0 0
        %2565 = vmatpush1.bf16.msra.mxu0 0
        %2566 = vmatprep.subr.bf16.mxu0 0
        %2567 = vmatpush1.bf16.msra.mxu0 0
        %2568 = vmatprep.subr.bf16.mxu0 0
        %2569 = vmatpush1.bf16.msra.mxu0 0
        %2570 = vmatprep.subr.bf16.mxu0 0
        %2571 = vmatpush1.bf16.msra.mxu0 0
        %2572 = vmatprep.subr.bf16.mxu0 0
        %2573 = vmatpush1.bf16.msra.mxu0 0
        %2574 = vmatprep.subr.bf16.mxu0 0
        %2575 = vmatpush1.bf16.msra.mxu0 0
        %2576 = vmatprep.subr.bf16.mxu0 0
        %2577 = vmatpush1.bf16.msra.mxu0 0
        %2578 = vmatprep.subr.bf16.mxu0 0
        %2579 = vmatpush1.bf16.msra.mxu0 0
        %2580 = vmatprep.subr.bf16.mxu0 0
        %2581 = vmatpush1.bf16.msra.mxu0 0
        %2582 = vmatprep.subr.bf16.mxu0 0
        %2583 = vmatpush1.bf16.msra.mxu0 0
        %2584 = vmatprep.subr.bf16.mxu0 0
        %2585 = vmatpush1.bf16.msra.mxu0 0
        %2586 = vmatprep.mubr.bf16.mxu0 0
        %2587 = vmatmul.mubr.bf16.gmra.mrb[0].mxu0 %v2552
        %v2588 = vpop.f32.mrb[0].mxu0
        %v2589 = vadd.f32 0.0, %v2588
        %v2590 = vpop.f32.mrb[0].mxu0
        %v2591 = vpop.f32.mrb[0].mxu0
        %v2592 = vpop.f32.mrb[0].mxu0
        %2593 = vdwg.mxu0
        %v2594 = vpack.c.bf16 %v513, %v513
        %v2595 = vld [vmem:[#allocation5] sm:$0xf]
        %v2596 = vld [vmem:[#allocation5 + $0x4] sm:$0xf]
        %v2597 = vld [vmem:[#allocation5 + $0x8] sm:$0xf]
        %v2598 = vld [vmem:[#allocation5 + $0xc] sm:$0xf]
        %v2603 = vunpack.c.l.b16 %v2595
        %v2604 = vunpack.c.l.b16 %v2596
        %v2605 = vunpack.c.l.b16 %v2597
        %v2606 = vunpack.c.l.b16 %v2598
        %v2607 = vpack.c.b16 %v2604, %v2603
        %v2608 = vpack.c.b16 %v2606, %v2605
        %v2612 = vsel %vm532, %v2594, 0
        %2614 = vmatprep.subr.bf16.mxu0 0
        %2615 = vmatpush1.bf16.msra.mxu0 %v2607
        %2616 = vmatprep.subr.bf16.mxu0 0
        %2617 = vmatpush1.bf16.msra.mxu0 %v2608
        %2618 = vmatprep.subr.bf16.mxu0 0
        %2619 = vmatpush1.bf16.msra.mxu0 0
        %2620 = vmatprep.subr.bf16.mxu0 0
        %2621 = vmatpush1.bf16.msra.mxu0 0
        %2622 = vmatprep.subr.bf16.mxu0 0
        %2623 = vmatpush1.bf16.msra.mxu0 0
        %2624 = vmatprep.subr.bf16.mxu0 0
        %2625 = vmatpush1.bf16.msra.mxu0 0
        %2626 = vmatprep.subr.bf16.mxu0 0
        %2627 = vmatpush1.bf16.msra.mxu0 0
        %2628 = vmatprep.subr.bf16.mxu0 0
        %2629 = vmatpush1.bf16.msra.mxu0 0
        %2630 = vmatprep.subr.bf16.mxu0 0
        %2631 = vmatpush1.bf16.msra.mxu0 0
        %2632 = vmatprep.subr.bf16.mxu0 0
        %2633 = vmatpush1.bf16.msra.mxu0 0
        %2634 = vmatprep.subr.bf16.mxu0 0
        %2635 = vmatpush1.bf16.msra.mxu0 0
        %2636 = vmatprep.subr.bf16.mxu0 0
        %2637 = vmatpush1.bf16.msra.mxu0 0
        %2638 = vmatprep.subr.bf16.mxu0 0
        %2639 = vmatpush1.bf16.msra.mxu0 0
        %2640 = vmatprep.subr.bf16.mxu0 0
        %2641 = vmatpush1.bf16.msra.mxu0 0
        %2642 = vmatprep.subr.bf16.mxu0 0
        %2643 = vmatpush1.bf16.msra.mxu0 0
        %2644 = vmatprep.subr.bf16.mxu0 0
        %2645 = vmatpush1.bf16.msra.mxu0 0
        %2646 = vmatprep.mubr.bf16.mxu0 0
        %2647 = vmatmul.mubr.bf16.gmra.mrb[0].mxu0 %v2612
        %v2648 = vpop.f32.mrb[0].mxu0
        %v2649 = vadd.f32 0.0, %v2648
        %v2650 = vpop.f32.mrb[0].mxu0
        %v2651 = vpop.f32.mrb[0].mxu0
        %v2652 = vpop.f32.mrb[0].mxu0
        %2653 = vdwg.mxu0
        %v2654 = vld [vmem:[%s510] sm:$0x1]
        %2656 = vrot.lane.b32.xlu0 %v2589, 120
        %v2657 = vpop.permute.xlu0 %2656
        %2659 = vrot.lane.b32.xlu0 %v2589, 112
        %v2660 = vpop.permute.xlu0 %2659
        %2662 = vrot.lane.b32.xlu0 %v2589, 104
        %v2663 = vpop.permute.xlu0 %2662
        %v2665 = vcombine.low %v2589, %v2660
        %v2666 = vcombine.high %v2589, %v2660
        %v2668 = vunpack.c.l.s4 1983009808
        %v2669 = vunpack.c.0.s8 %v2668
        %v2670 = vlaneseq
        %v2671 = vshrl.u32 %v2670, 7
        %v2672 = vsub.s32 %v2669, %v2671
        %v2673 = vrot.slane %v2665, %v2672
        %v2675 = vunpack.c.l.s4 1983009808
        %v2676 = vunpack.c.0.s8 %v2675
        %v2677 = vlaneseq
        %v2678 = vshrl.u32 %v2677, 7
        %v2679 = vsub.s32 %v2676, %v2678
        %v2680 = vrot.slane %v2666, %v2679
        %v2681 = vcombine.low %v2657, %v2663
        %v2682 = vcombine.high %v2657, %v2663
        %v2684 = vunpack.c.l.s4 1983009808
        %v2685 = vunpack.c.0.s8 %v2684
        %v2686 = vlaneseq
        %v2687 = vshrl.u32 %v2686, 7
        %v2688 = vsub.s32 %v2685, %v2687
        %v2689 = vrot.slane %v2681, %v2688
        %v2691 = vunpack.c.l.s4 1983009808
        %v2692 = vunpack.c.0.s8 %v2691
        %v2693 = vlaneseq
        %v2694 = vshrl.u32 %v2693, 7
        %v2695 = vsub.s32 %v2692, %v2694
        %v2696 = vrot.slane %v2682, %v2695
        %v2697 = vcombine.low %v2673, %v2689
        %v2698 = vcombine.high %v2673, %v2689
        %v2700 = vunpack.c.l.s4 1934713408
        %v2701 = vunpack.c.0.s8 %v2700
        %v2702 = vlaneseq
        %v2703 = vshrl.u32 %v2702, 7
        %v2704 = vsub.s32 %v2701, %v2703
        %v2705 = vrot.slane %v2697, %v2704
        %v2707 = vunpack.c.l.s4 1934713408
        %v2708 = vunpack.c.0.s8 %v2707
        %v2709 = vlaneseq
        %v2710 = vshrl.u32 %v2709, 7
        %v2711 = vsub.s32 %v2708, %v2710
        %v2712 = vrot.slane %v2698, %v2711
        %v2713 = vcombine.low %v2680, %v2696
        %v2714 = vcombine.high %v2680, %v2696
        %v2716 = vunpack.c.l.s4 1934713408
        %v2717 = vunpack.c.0.s8 %v2716
        %v2718 = vlaneseq
        %v2719 = vshrl.u32 %v2718, 7
        %v2720 = vsub.s32 %v2717, %v2719
        %v2721 = vrot.slane %v2713, %v2720
        %v2723 = vunpack.c.l.s4 1934713408
        %v2724 = vunpack.c.0.s8 %v2723
        %v2725 = vlaneseq
        %v2726 = vshrl.u32 %v2725, 7
        %v2727 = vsub.s32 %v2724, %v2726
        %v2728 = vrot.slane %v2714, %v2727
        %v2729 = vcombine.high %v2705, 0.0
        %v2730 = vcombine.high %v2712, 0.0
        %v2731 = vcombine.high %v2721, 0.0
        %v2732 = vcombine.high %v2728, 0.0
        %v2733 = vpack.c.bf16 %v2705, %v2705
        %v2734 = vpack.c.bf16 %v2729, %v2729
        %v2735 = vpack.c.bf16 %v2712, %v2712
        %v2736 = vpack.c.bf16 %v2730, %v2730
        %v2737 = vpack.c.bf16 %v2721, %v2721
        %v2738 = vpack.c.bf16 %v2731, %v2731
        %v2739 = vpack.c.bf16 %v2728, %v2728
        %v2740 = vpack.c.bf16 %v2732, %v2732
        %2742 = vrot.lane.b32.xlu0 %v2649, 120
        %v2743 = vpop.permute.xlu0 %2742
        %2745 = vrot.lane.b32.xlu0 %v2649, 112
        %v2746 = vpop.permute.xlu0 %2745
        %2748 = vrot.lane.b32.xlu0 %v2649, 104
        %v2749 = vpop.permute.xlu0 %2748
        %v2751 = vcombine.low %v2649, %v2746
        %v2752 = vcombine.high %v2649, %v2746
        %v2754 = vunpack.c.l.s4 1983009808
        %v2755 = vunpack.c.0.s8 %v2754
        %v2756 = vlaneseq
        %v2757 = vshrl.u32 %v2756, 7
        %v2758 = vsub.s32 %v2755, %v2757
        %v2759 = vrot.slane %v2751, %v2758
        %v2761 = vunpack.c.l.s4 1983009808
        %v2762 = vunpack.c.0.s8 %v2761
        %v2763 = vlaneseq
        %v2764 = vshrl.u32 %v2763, 7
        %v2765 = vsub.s32 %v2762, %v2764
        %v2766 = vrot.slane %v2752, %v2765
        %v2767 = vcombine.low %v2743, %v2749
        %v2768 = vcombine.high %v2743, %v2749
        %v2770 = vunpack.c.l.s4 1983009808
        %v2771 = vunpack.c.0.s8 %v2770
        %v2772 = vlaneseq
        %v2773 = vshrl.u32 %v2772, 7
        %v2774 = vsub.s32 %v2771, %v2773
        %v2775 = vrot.slane %v2767, %v2774
        %v2777 = vunpack.c.l.s4 1983009808
        %v2778 = vunpack.c.0.s8 %v2777
        %v2779 = vlaneseq
        %v2780 = vshrl.u32 %v2779, 7
        %v2781 = vsub.s32 %v2778, %v2780
        %v2782 = vrot.slane %v2768, %v2781
        %v2783 = vcombine.low %v2759, %v2775
        %v2784 = vcombine.high %v2759, %v2775
        %v2786 = vunpack.c.l.s4 1934713408
        %v2787 = vunpack.c.0.s8 %v2786
        %v2788 = vlaneseq
        %v2789 = vshrl.u32 %v2788, 7
        %v2790 = vsub.s32 %v2787, %v2789
        %v2791 = vrot.slane %v2783, %v2790
        %v2793 = vunpack.c.l.s4 1934713408
        %v2794 = vunpack.c.0.s8 %v2793
        %v2795 = vlaneseq
        %v2796 = vshrl.u32 %v2795, 7
        %v2797 = vsub.s32 %v2794, %v2796
        %v2798 = vrot.slane %v2784, %v2797
        %v2799 = vcombine.low %v2766, %v2782
        %v2800 = vcombine.high %v2766, %v2782
        %v2802 = vunpack.c.l.s4 1934713408
        %v2803 = vunpack.c.0.s8 %v2802
        %v2804 = vlaneseq
        %v2805 = vshrl.u32 %v2804, 7
        %v2806 = vsub.s32 %v2803, %v2805
        %v2807 = vrot.slane %v2799, %v2806
        %v2809 = vunpack.c.l.s4 1934713408
        %v2810 = vunpack.c.0.s8 %v2809
        %v2811 = vlaneseq
        %v2812 = vshrl.u32 %v2811, 7
        %v2813 = vsub.s32 %v2810, %v2812
        %v2814 = vrot.slane %v2800, %v2813
        %v2815 = vcombine.high %v2791, 0.0
        %v2816 = vcombine.high %v2798, 0.0
        %v2817 = vcombine.high %v2807, 0.0
        %v2818 = vcombine.high %v2814, 0.0
        %v2819 = vpack.c.bf16 %v2791, %v2791
        %v2820 = vpack.c.bf16 %v2815, %v2815
        %v2821 = vpack.c.bf16 %v2798, %v2798
        %v2822 = vpack.c.bf16 %v2816, %v2816
        %v2823 = vpack.c.bf16 %v2807, %v2807
        %v2824 = vpack.c.bf16 %v2817, %v2817
        %v2825 = vpack.c.bf16 %v2814, %v2814
        %v2826 = vpack.c.bf16 %v2818, %v2818
        %2827 = vrot.lane.b32.xlu0 %v2649, 96
        %v2828 = vpop.permute.xlu0 %2827
        %2829 = vrot.lane.b32.xlu0 %v2743, 96
        %v2830 = vpop.permute.xlu0 %2829
        %2831 = vrot.lane.b32.xlu0 %v2746, 96
        %v2832 = vpop.permute.xlu0 %2831
        %2833 = vrot.lane.b32.xlu0 %v2749, 96
        %v2834 = vpop.permute.xlu0 %2833
        %v2839 = vcombine.low %v2828, %v2832
        %v2840 = vcombine.high %v2828, %v2832
        %v2842 = vunpack.c.l.s4 1983009808
        %v2843 = vunpack.c.0.s8 %v2842
        %v2844 = vlaneseq
        %v2845 = vshrl.u32 %v2844, 7
        %v2846 = vsub.s32 %v2843, %v2845
        %v2847 = vrot.slane %v2839, %v2846
        %v2849 = vunpack.c.l.s4 1983009808
        %v2850 = vunpack.c.0.s8 %v2849
        %v2851 = vlaneseq
        %v2852 = vshrl.u32 %v2851, 7
        %v2853 = vsub.s32 %v2850, %v2852
        %v2854 = vrot.slane %v2840, %v2853
        %v2855 = vcombine.low %v2830, %v2834
        %v2856 = vcombine.high %v2830, %v2834
        %v2858 = vunpack.c.l.s4 1983009808
        %v2859 = vunpack.c.0.s8 %v2858
        %v2860 = vlaneseq
        %v2861 = vshrl.u32 %v2860, 7
        %v2862 = vsub.s32 %v2859, %v2861
        %v2863 = vrot.slane %v2855, %v2862
        %v2865 = vunpack.c.l.s4 1983009808
        %v2866 = vunpack.c.0.s8 %v2865
        %v2867 = vlaneseq
        %v2868 = vshrl.u32 %v2867, 7
        %v2869 = vsub.s32 %v2866, %v2868
        %v2870 = vrot.slane %v2856, %v2869
        %v2871 = vcombine.low %v2847, %v2863
        %v2872 = vcombine.high %v2847, %v2863
        %v2874 = vunpack.c.l.s4 1934713408
        %v2875 = vunpack.c.0.s8 %v2874
        %v2876 = vlaneseq
        %v2877 = vshrl.u32 %v2876, 7
        %v2878 = vsub.s32 %v2875, %v2877
        %v2879 = vrot.slane %v2871, %v2878
        %v2881 = vunpack.c.l.s4 1934713408
        %v2882 = vunpack.c.0.s8 %v2881
        %v2883 = vlaneseq
        %v2884 = vshrl.u32 %v2883, 7
        %v2885 = vsub.s32 %v2882, %v2884
        %v2886 = vrot.slane %v2872, %v2885
        %v2887 = vcombine.low %v2854, %v2870
        %v2888 = vcombine.high %v2854, %v2870
        %v2890 = vunpack.c.l.s4 1934713408
        %v2891 = vunpack.c.0.s8 %v2890
        %v2892 = vlaneseq
        %v2893 = vshrl.u32 %v2892, 7
        %v2894 = vsub.s32 %v2891, %v2893
        %v2895 = vrot.slane %v2887, %v2894
        %v2897 = vunpack.c.l.s4 1934713408
        %v2898 = vunpack.c.0.s8 %v2897
        %v2899 = vlaneseq
        %v2900 = vshrl.u32 %v2899, 7
        %v2901 = vsub.s32 %v2898, %v2900
        %v2902 = vrot.slane %v2888, %v2901
        %v2903 = vcombine.high %v2879, 0.0
        %v2904 = vcombine.high %v2886, 0.0
        %v2905 = vcombine.high %v2895, 0.0
        %v2906 = vcombine.high %v2902, 0.0
        %v2907 = vpack.c.bf16 %v2879, %v2879
        %v2908 = vpack.c.bf16 %v2903, %v2903
        %v2909 = vpack.c.bf16 %v2886, %v2886
        %v2910 = vpack.c.bf16 %v2904, %v2904
        %v2911 = vpack.c.bf16 %v2895, %v2895
        %v2912 = vpack.c.bf16 %v2905, %v2905
        %v2913 = vpack.c.bf16 %v2902, %v2902
        %v2914 = vpack.c.bf16 %v2906, %v2906
        %v2915 = vcombine.low %v2733, %v2737
        %v2917 = vunpack.c.l.s4 1983009808
        %v2918 = vunpack.c.0.s8 %v2917
        %v2919 = vlaneseq
        %v2920 = vshrl.u32 %v2919, 7
        %v2921 = vsub.s32 %v2918, %v2920
        %v2922 = vrot.slane %v2915, %v2921
        %v2923 = vcombine.low %v2735, %v2739
        %v2925 = vunpack.c.l.s4 1983009808
        %v2926 = vunpack.c.0.s8 %v2925
        %v2927 = vlaneseq
        %v2928 = vshrl.u32 %v2927, 7
        %v2929 = vsub.s32 %v2926, %v2928
        %v2930 = vrot.slane %v2923, %v2929
        %v2931 = vcombine.low %v2922, %v2930
        %v2933 = vunpack.c.l.s4 1934713408
        %v2934 = vunpack.c.0.s8 %v2933
        %v2935 = vlaneseq
        %v2936 = vshrl.u32 %v2935, 7
        %v2937 = vsub.s32 %v2934, %v2936
        %v2938 = vrot.slane %v2931, %v2937
        %v2939 = vcombine.high %v2938, 0
        %v2940 = vcombine.low %v2734, %v2738
        %v2942 = vunpack.c.l.s4 1983009808
        %v2943 = vunpack.c.0.s8 %v2942
        %v2944 = vlaneseq
        %v2945 = vshrl.u32 %v2944, 7
        %v2946 = vsub.s32 %v2943, %v2945
        %v2947 = vrot.slane %v2940, %v2946
        %v2948 = vcombine.low %v2736, %v2740
        %v2950 = vunpack.c.l.s4 1983009808
        %v2951 = vunpack.c.0.s8 %v2950
        %v2952 = vlaneseq
        %v2953 = vshrl.u32 %v2952, 7
        %v2954 = vsub.s32 %v2951, %v2953
        %v2955 = vrot.slane %v2948, %v2954
        %v2956 = vcombine.low %v2947, %v2955
        %v2958 = vunpack.c.l.s4 1934713408
        %v2959 = vunpack.c.0.s8 %v2958
        %v2960 = vlaneseq
        %v2961 = vshrl.u32 %v2960, 7
        %v2962 = vsub.s32 %v2959, %v2961
        %v2963 = vrot.slane %v2956, %v2962
        %v2964 = vcombine.high %v2963, 0
        %v2967 = vpack.i.b16 %v2963, %v2938
        %v2968 = vshrl.u32 %v2938, 16
        %v2969 = vshrl.u32 %v2963, 16
        %v2970 = vpack.i.b16 %v2969, %v2968
        %v2973 = vpack.i.b16 %v2964, %v2939
        %v2974 = vshrl.u32 %v2939, 16
        %v2975 = vshrl.u32 %v2964, 16
        %v2976 = vpack.i.b16 %v2975, %v2974
        %2977 = vxpose.xlu0.c.b16.start [1/8] %v2819, 128
        %2978 = vxpose.xlu0.c.b16.cont [2/8] 0, 128
        %2979 = vxpose.xlu0.c.b16.cont [3/8] 0, 128
        %2980 = vxpose.xlu0.c.b16.cont [4/8] 0, 128
        %2981 = vxpose.xlu0.c.b16.cont [5/8] 0, 128
        %2982 = vxpose.xlu0.c.b16.cont [6/8] 0, 128
        %2983 = vxpose.xlu0.c.b16.cont [7/8] 0, 128
        %2984 = vxpose.xlu0.c.b16.end [8/8] 0, 128
        %v2985 = vpop.trf.xlu0
        %v2986 = vpop.trf.xlu0
        %v2987 = vpop.trf.xlu0
        %v2988 = vpop.trf.xlu0
        %v2989 = vpop.trf.xlu0
        %v2990 = vpop.trf.xlu0
        %v2991 = vpop.trf.xlu0
        %v2992 = vpop.trf.xlu0
        %2993 = vxpose.xlu0.c.b16.start [1/8] %v2820, 128
        %2994 = vxpose.xlu0.c.b16.cont [2/8] 0, 128
        %2995 = vxpose.xlu0.c.b16.cont [3/8] 0, 128
        %2996 = vxpose.xlu0.c.b16.cont [4/8] 0, 128
        %2997 = vxpose.xlu0.c.b16.cont [5/8] 0, 128
        %2998 = vxpose.xlu0.c.b16.cont [6/8] 0, 128
        %2999 = vxpose.xlu0.c.b16.cont [7/8] 0, 128
        %3000 = vxpose.xlu0.c.b16.end [8/8] 0, 128
        %v3001 = vpop.trf.xlu0
        %v3002 = vpop.trf.xlu0
        %v3003 = vpop.trf.xlu0
        %v3004 = vpop.trf.xlu0
        %v3005 = vpop.trf.xlu0
        %v3006 = vpop.trf.xlu0
        %v3007 = vpop.trf.xlu0
        %v3008 = vpop.trf.xlu0
        %3009 = vxpose.xlu0.c.b16.start [1/8] %v2821, 128
        %3010 = vxpose.xlu0.c.b16.cont [2/8] 0, 128
        %3011 = vxpose.xlu0.c.b16.cont [3/8] 0, 128
        %3012 = vxpose.xlu0.c.b16.cont [4/8] 0, 128
        %3013 = vxpose.xlu0.c.b16.cont [5/8] 0, 128
        %3014 = vxpose.xlu0.c.b16.cont [6/8] 0, 128
        %3015 = vxpose.xlu0.c.b16.cont [7/8] 0, 128
        %3016 = vxpose.xlu0.c.b16.end [8/8] 0, 128
        %v3017 = vpop.trf.xlu0
        %v3018 = vpop.trf.xlu0
        %v3019 = vpop.trf.xlu0
        %v3020 = vpop.trf.xlu0
        %v3021 = vpop.trf.xlu0
        %v3022 = vpop.trf.xlu0
        %v3023 = vpop.trf.xlu0
        %v3024 = vpop.trf.xlu0
        %3025 = vxpose.xlu0.c.b16.start [1/8] %v2822, 128
        %3026 = vxpose.xlu0.c.b16.cont [2/8] 0, 128
        %3027 = vxpose.xlu0.c.b16.cont [3/8] 0, 128
        %3028 = vxpose.xlu0.c.b16.cont [4/8] 0, 128
        %3029 = vxpose.xlu0.c.b16.cont [5/8] 0, 128
        %3030 = vxpose.xlu0.c.b16.cont [6/8] 0, 128
        %3031 = vxpose.xlu0.c.b16.cont [7/8] 0, 128
        %3032 = vxpose.xlu0.c.b16.end [8/8] 0, 128
        %v3033 = vpop.trf.xlu0
        %v3034 = vpop.trf.xlu0
        %v3035 = vpop.trf.xlu0
        %v3036 = vpop.trf.xlu0
        %v3037 = vpop.trf.xlu0
        %v3038 = vpop.trf.xlu0
        %v3039 = vpop.trf.xlu0
        %v3040 = vpop.trf.xlu0
        %3041 = vxpose.xlu0.c.b16.start [1/8] %v2823, 128
        %3042 = vxpose.xlu0.c.b16.cont [2/8] 0, 128
        %3043 = vxpose.xlu0.c.b16.cont [3/8] 0, 128
        %3044 = vxpose.xlu0.c.b16.cont [4/8] 0, 128
        %3045 = vxpose.xlu0.c.b16.cont [5/8] 0, 128
        %3046 = vxpose.xlu0.c.b16.cont [6/8] 0, 128
        %3047 = vxpose.xlu0.c.b16.cont [7/8] 0, 128
        %3048 = vxpose.xlu0.c.b16.end [8/8] 0, 128
        %v3049 = vpop.trf.xlu0
        %v3050 = vpop.trf.xlu0
        %v3051 = vpop.trf.xlu0
        %v3052 = vpop.trf.xlu0
        %v3053 = vpop.trf.xlu0
        %v3054 = vpop.trf.xlu0
        %v3055 = vpop.trf.xlu0
        %v3056 = vpop.trf.xlu0
        %3057 = vxpose.xlu0.c.b16.start [1/8] %v2824, 128
        %3058 = vxpose.xlu0.c.b16.cont [2/8] 0, 128
        %3059 = vxpose.xlu0.c.b16.cont [3/8] 0, 128
        %3060 = vxpose.xlu0.c.b16.cont [4/8] 0, 128
        %3061 = vxpose.xlu0.c.b16.cont [5/8] 0, 128
        %3062 = vxpose.xlu0.c.b16.cont [6/8] 0, 128
        %3063 = vxpose.xlu0.c.b16.cont [7/8] 0, 128
        %3064 = vxpose.xlu0.c.b16.end [8/8] 0, 128
        %v3065 = vpop.trf.xlu0
        %v3066 = vpop.trf.xlu0
        %v3067 = vpop.trf.xlu0
        %v3068 = vpop.trf.xlu0
        %v3069 = vpop.trf.xlu0
        %v3070 = vpop.trf.xlu0
        %v3071 = vpop.trf.xlu0
        %v3072 = vpop.trf.xlu0
        %3073 = vxpose.xlu0.c.b16.start [1/8] %v2825, 128
        %3074 = vxpose.xlu0.c.b16.cont [2/8] 0, 128
        %3075 = vxpose.xlu0.c.b16.cont [3/8] 0, 128
        %3076 = vxpose.xlu0.c.b16.cont [4/8] 0, 128
        %3077 = vxpose.xlu0.c.b16.cont [5/8] 0, 128
        %3078 = vxpose.xlu0.c.b16.cont [6/8] 0, 128
        %3079 = vxpose.xlu0.c.b16.cont [7/8] 0, 128
        %3080 = vxpose.xlu0.c.b16.end [8/8] 0, 128
        %v3081 = vpop.trf.xlu0
        %v3082 = vpop.trf.xlu0
        %v3083 = vpop.trf.xlu0
        %v3084 = vpop.trf.xlu0
        %v3085 = vpop.trf.xlu0
        %v3086 = vpop.trf.xlu0
        %v3087 = vpop.trf.xlu0
        %v3088 = vpop.trf.xlu0
        %3089 = vxpose.xlu0.c.b16.start [1/8] %v2826, 128
        %3090 = vxpose.xlu0.c.b16.cont [2/8] 0, 128
        %3091 = vxpose.xlu0.c.b16.cont [3/8] 0, 128
        %3092 = vxpose.xlu0.c.b16.cont [4/8] 0, 128
        %3093 = vxpose.xlu0.c.b16.cont [5/8] 0, 128
        %3094 = vxpose.xlu0.c.b16.cont [6/8] 0, 128
        %3095 = vxpose.xlu0.c.b16.cont [7/8] 0, 128
        %3096 = vxpose.xlu0.c.b16.end [8/8] 0, 128
        %v3097 = vpop.trf.xlu0
        %v3098 = vpop.trf.xlu0
        %v3099 = vpop.trf.xlu0
        %v3100 = vpop.trf.xlu0
        %v3101 = vpop.trf.xlu0
        %v3102 = vpop.trf.xlu0
        %v3103 = vpop.trf.xlu0
        %v3104 = vpop.trf.xlu0
        %v3105 = vcombine.low %v2985, %v3049
        %v3107 = vunpack.c.l.s4 1983009808
        %v3108 = vunpack.c.0.s8 %v3107
        %v3109 = vlaneseq
        %v3110 = vshrl.u32 %v3109, 7
        %v3111 = vsub.s32 %v3108, %v3110
        %v3112 = vrot.slane %v3105, %v3111
        %v3113 = vcombine.low %v3017, %v3081
        %v3115 = vunpack.c.l.s4 1983009808
        %v3116 = vunpack.c.0.s8 %v3115
        %v3117 = vlaneseq
        %v3118 = vshrl.u32 %v3117, 7
        %v3119 = vsub.s32 %v3116, %v3118
        %v3120 = vrot.slane %v3113, %v3119
        %v3121 = vcombine.low %v3112, %v3120
        %v3122 = vcombine.high %v3112, %v3120
        %v3124 = vunpack.c.l.s4 1934713408
        %v3125 = vunpack.c.0.s8 %v3124
        %v3126 = vlaneseq
        %v3127 = vshrl.u32 %v3126, 7
        %v3128 = vsub.s32 %v3125, %v3127
        %v3129 = vrot.slane %v3121, %v3128
        %v3131 = vunpack.c.l.s4 1934713408
        %v3132 = vunpack.c.0.s8 %v3131
        %v3133 = vlaneseq
        %v3134 = vshrl.u32 %v3133, 7
        %v3135 = vsub.s32 %v3132, %v3134
        %v3136 = vrot.slane %v3122, %v3135
        %v3137 = vcombine.high %v3129, 0
        %v3138 = vcombine.high %v3136, 0
        %v3139 = vcombine.low %v3001, %v3065
        %v3141 = vunpack.c.l.s4 1983009808
        %v3142 = vunpack.c.0.s8 %v3141
        %v3143 = vlaneseq
        %v3144 = vshrl.u32 %v3143, 7
        %v3145 = vsub.s32 %v3142, %v3144
        %v3146 = vrot.slane %v3139, %v3145
        %v3147 = vcombine.low %v3033, %v3097
        %v3149 = vunpack.c.l.s4 1983009808
        %v3150 = vunpack.c.0.s8 %v3149
        %v3151 = vlaneseq
        %v3152 = vshrl.u32 %v3151, 7
        %v3153 = vsub.s32 %v3150, %v3152
        %v3154 = vrot.slane %v3147, %v3153
        %v3155 = vcombine.low %v3146, %v3154
        %v3156 = vcombine.high %v3146, %v3154
        %v3158 = vunpack.c.l.s4 1934713408
        %v3159 = vunpack.c.0.s8 %v3158
        %v3160 = vlaneseq
        %v3161 = vshrl.u32 %v3160, 7
        %v3162 = vsub.s32 %v3159, %v3161
        %v3163 = vrot.slane %v3155, %v3162
        %v3165 = vunpack.c.l.s4 1934713408
        %v3166 = vunpack.c.0.s8 %v3165
        %v3167 = vlaneseq
        %v3168 = vshrl.u32 %v3167, 7
        %v3169 = vsub.s32 %v3166, %v3168
        %v3170 = vrot.slane %v3156, %v3169
        %v3171 = vcombine.high %v3163, 0
        %v3172 = vcombine.high %v3170, 0
        %v3175 = vpack.i.b16 %v3163, %v3129
        %v3177 = vshrl.u32 %v3129, 16
        %v3178 = vshrl.u32 %v3163, 16
        %v3179 = vpack.i.b16 %v3178, %v3177
        %v3183 = vpack.i.b16 %v3171, %v3137
        %v3185 = vshrl.u32 %v3137, 16
        %v3186 = vshrl.u32 %v3171, 16
        %v3187 = vpack.i.b16 %v3186, %v3185
        %v3191 = vpack.i.b16 %v3170, %v3136
        %v3193 = vshrl.u32 %v3136, 16
        %v3194 = vshrl.u32 %v3170, 16
        %v3195 = vpack.i.b16 %v3194, %v3193
        %v3199 = vpack.i.b16 %v3172, %v3138
        %v3201 = vshrl.u32 %v3138, 16
        %v3202 = vshrl.u32 %v3172, 16
        %v3203 = vpack.i.b16 %v3202, %v3201
        %3205 = vxpose.xlu0.c.b16.start [1/8] %v3175, 128
        %3206 = vxpose.xlu0.c.b16.cont [2/8] 0, 128
        %3207 = vxpose.xlu0.c.b16.cont [3/8] 0, 128
        %3208 = vxpose.xlu0.c.b16.cont [4/8] 0, 128
        %3209 = vxpose.xlu0.c.b16.cont [5/8] 0, 128
        %3210 = vxpose.xlu0.c.b16.cont [6/8] 0, 128
        %3211 = vxpose.xlu0.c.b16.cont [7/8] 0, 128
        %3212 = vxpose.xlu0.c.b16.end [8/8] 0, 128
        %v3213 = vpop.trf.xlu0
        %v3214 = vpop.trf.xlu0
        %v3215 = vpop.trf.xlu0
        %v3216 = vpop.trf.xlu0
        %v3217 = vpop.trf.xlu0
        %v3218 = vpop.trf.xlu0
        %v3219 = vpop.trf.xlu0
        %v3220 = vpop.trf.xlu0
        %3221 = vxpose.xlu0.c.b16.start [1/8] %v3179, 128
        %3222 = vxpose.xlu0.c.b16.cont [2/8] 0, 128
        %3223 = vxpose.xlu0.c.b16.cont [3/8] 0, 128
        %3224 = vxpose.xlu0.c.b16.cont [4/8] 0, 128
        %3225 = vxpose.xlu0.c.b16.cont [5/8] 0, 128
        %3226 = vxpose.xlu0.c.b16.cont [6/8] 0, 128
        %3227 = vxpose.xlu0.c.b16.cont [7/8] 0, 128
        %3228 = vxpose.xlu0.c.b16.end [8/8] 0, 128
        %v3229 = vpop.trf.xlu0
        %v3230 = vpop.trf.xlu0
        %v3231 = vpop.trf.xlu0
        %v3232 = vpop.trf.xlu0
        %v3233 = vpop.trf.xlu0
        %v3234 = vpop.trf.xlu0
        %v3235 = vpop.trf.xlu0
        %v3236 = vpop.trf.xlu0
        %3237 = vxpose.xlu0.c.b16.start [1/8] %v3183, 128
        %3238 = vxpose.xlu0.c.b16.cont [2/8] 0, 128
        %3239 = vxpose.xlu0.c.b16.cont [3/8] 0, 128
        %3240 = vxpose.xlu0.c.b16.cont [4/8] 0, 128
        %3241 = vxpose.xlu0.c.b16.cont [5/8] 0, 128
        %3242 = vxpose.xlu0.c.b16.cont [6/8] 0, 128
        %3243 = vxpose.xlu0.c.b16.cont [7/8] 0, 128
        %3244 = vxpose.xlu0.c.b16.end [8/8] 0, 128
        %v3245 = vpop.trf.xlu0
        %v3246 = vpop.trf.xlu0
        %v3247 = vpop.trf.xlu0
        %v3248 = vpop.trf.xlu0
        %v3249 = vpop.trf.xlu0
        %v3250 = vpop.trf.xlu0
        %v3251 = vpop.trf.xlu0
        %v3252 = vpop.trf.xlu0
        %3253 = vxpose.xlu0.c.b16.start [1/8] %v3187, 128
        %3254 = vxpose.xlu0.c.b16.cont [2/8] 0, 128
        %3255 = vxpose.xlu0.c.b16.cont [3/8] 0, 128
        %3256 = vxpose.xlu0.c.b16.cont [4/8] 0, 128
        %3257 = vxpose.xlu0.c.b16.cont [5/8] 0, 128
        %3258 = vxpose.xlu0.c.b16.cont [6/8] 0, 128
        %3259 = vxpose.xlu0.c.b16.cont [7/8] 0, 128
        %3260 = vxpose.xlu0.c.b16.end [8/8] 0, 128
        %v3261 = vpop.trf.xlu0
        %v3262 = vpop.trf.xlu0
        %v3263 = vpop.trf.xlu0
        %v3264 = vpop.trf.xlu0
        %v3265 = vpop.trf.xlu0
        %v3266 = vpop.trf.xlu0
        %v3267 = vpop.trf.xlu0
        %v3268 = vpop.trf.xlu0
        %3269 = vxpose.xlu0.c.b16.start [1/8] %v3191, 128
        %3270 = vxpose.xlu0.c.b16.cont [2/8] 0, 128
        %3271 = vxpose.xlu0.c.b16.cont [3/8] 0, 128
        %3272 = vxpose.xlu0.c.b16.cont [4/8] 0, 128
        %3273 = vxpose.xlu0.c.b16.cont [5/8] 0, 128
        %3274 = vxpose.xlu0.c.b16.cont [6/8] 0, 128
        %3275 = vxpose.xlu0.c.b16.cont [7/8] 0, 128
        %3276 = vxpose.xlu0.c.b16.end [8/8] 0, 128
        %v3277 = vpop.trf.xlu0
        %v3278 = vpop.trf.xlu0
        %v3279 = vpop.trf.xlu0
        %v3280 = vpop.trf.xlu0
        %v3281 = vpop.trf.xlu0
        %v3282 = vpop.trf.xlu0
        %v3283 = vpop.trf.xlu0
        %v3284 = vpop.trf.xlu0
        %3285 = vxpose.xlu0.c.b16.start [1/8] %v3195, 128
        %3286 = vxpose.xlu0.c.b16.cont [2/8] 0, 128
        %3287 = vxpose.xlu0.c.b16.cont [3/8] 0, 128
        %3288 = vxpose.xlu0.c.b16.cont [4/8] 0, 128
        %3289 = vxpose.xlu0.c.b16.cont [5/8] 0, 128
        %3290 = vxpose.xlu0.c.b16.cont [6/8] 0, 128
        %3291 = vxpose.xlu0.c.b16.cont [7/8] 0, 128
        %3292 = vxpose.xlu0.c.b16.end [8/8] 0, 128
        %v3293 = vpop.trf.xlu0
        %v3294 = vpop.trf.xlu0
        %v3295 = vpop.trf.xlu0
        %v3296 = vpop.trf.xlu0
        %v3297 = vpop.trf.xlu0
        %v3298 = vpop.trf.xlu0
        %v3299 = vpop.trf.xlu0
        %v3300 = vpop.trf.xlu0
        %3301 = vxpose.xlu0.c.b16.start [1/8] %v3199, 128
        %3302 = vxpose.xlu0.c.b16.cont [2/8] 0, 128
        %3303 = vxpose.xlu0.c.b16.cont [3/8] 0, 128
        %3304 = vxpose.xlu0.c.b16.cont [4/8] 0, 128
        %3305 = vxpose.xlu0.c.b16.cont [5/8] 0, 128
        %3306 = vxpose.xlu0.c.b16.cont [6/8] 0, 128
        %3307 = vxpose.xlu0.c.b16.cont [7/8] 0, 128
        %3308 = vxpose.xlu0.c.b16.end [8/8] 0, 128
        %v3309 = vpop.trf.xlu0
        %v3310 = vpop.trf.xlu0
        %v3311 = vpop.trf.xlu0
        %v3312 = vpop.trf.xlu0
        %v3313 = vpop.trf.xlu0
        %v3314 = vpop.trf.xlu0
        %v3315 = vpop.trf.xlu0
        %v3316 = vpop.trf.xlu0
        %3317 = vxpose.xlu0.c.b16.start [1/8] %v3203, 128
        %3318 = vxpose.xlu0.c.b16.cont [2/8] 0, 128
        %3319 = vxpose.xlu0.c.b16.cont [3/8] 0, 128
        %3320 = vxpose.xlu0.c.b16.cont [4/8] 0, 128
        %3321 = vxpose.xlu0.c.b16.cont [5/8] 0, 128
        %3322 = vxpose.xlu0.c.b16.cont [6/8] 0, 128
        %3323 = vxpose.xlu0.c.b16.cont [7/8] 0, 128
        %3324 = vxpose.xlu0.c.b16.end [8/8] 0, 128
        %v3325 = vpop.trf.xlu0
        %v3326 = vpop.trf.xlu0
        %v3327 = vpop.trf.xlu0
        %v3328 = vpop.trf.xlu0
        %v3329 = vpop.trf.xlu0
        %v3330 = vpop.trf.xlu0
        %v3331 = vpop.trf.xlu0
        %v3332 = vpop.trf.xlu0
        %v3333 = vcombine.low %v3213, %v3277
        %v3335 = vunpack.c.l.s4 1983009808
        %v3336 = vunpack.c.0.s8 %v3335
        %v3337 = vlaneseq
        %v3338 = vshrl.u32 %v3337, 7
        %v3339 = vsub.s32 %v3336, %v3338
        %v3340 = vrot.slane %v3333, %v3339
        %v3341 = vcombine.low %v3245, %v3309
        %v3343 = vunpack.c.l.s4 1983009808
        %v3344 = vunpack.c.0.s8 %v3343
        %v3345 = vlaneseq
        %v3346 = vshrl.u32 %v3345, 7
        %v3347 = vsub.s32 %v3344, %v3346
        %v3348 = vrot.slane %v3341, %v3347
        %v3349 = vcombine.low %v3340, %v3348
        %v3351 = vunpack.c.l.s4 1934713408
        %v3352 = vunpack.c.0.s8 %v3351
        %v3353 = vlaneseq
        %v3354 = vshrl.u32 %v3353, 7
        %v3355 = vsub.s32 %v3352, %v3354
        %v3356 = vrot.slane %v3349, %v3355
        %v3357 = vcombine.high %v3356, 0
        %v3358 = vcombine.low %v3229, %v3293
        %v3360 = vunpack.c.l.s4 1983009808
        %v3361 = vunpack.c.0.s8 %v3360
        %v3362 = vlaneseq
        %v3363 = vshrl.u32 %v3362, 7
        %v3364 = vsub.s32 %v3361, %v3363
        %v3365 = vrot.slane %v3358, %v3364
        %v3366 = vcombine.low %v3261, %v3325
        %v3368 = vunpack.c.l.s4 1983009808
        %v3369 = vunpack.c.0.s8 %v3368
        %v3370 = vlaneseq
        %v3371 = vshrl.u32 %v3370, 7
        %v3372 = vsub.s32 %v3369, %v3371
        %v3373 = vrot.slane %v3366, %v3372
        %v3374 = vcombine.low %v3365, %v3373
        %v3376 = vunpack.c.l.s4 1934713408
        %v3377 = vunpack.c.0.s8 %v3376
        %v3378 = vlaneseq
        %v3379 = vshrl.u32 %v3378, 7
        %v3380 = vsub.s32 %v3377, %v3379
        %v3381 = vrot.slane %v3374, %v3380
        %v3382 = vcombine.high %v3381, 0
        %v3385 = vpack.i.b16 %v3381, %v3356
        %v3386 = vshrl.u32 %v3356, 16
        %v3387 = vshrl.u32 %v3381, 16
        %v3388 = vpack.i.b16 %v3387, %v3386
        %v3391 = vpack.i.b16 %v3382, %v3357
        %v3392 = vshrl.u32 %v3357, 16
        %v3393 = vshrl.u32 %v3382, 16
        %v3394 = vpack.i.b16 %v3393, %v3392
        %v3396 = vsel %vm1324, %v2967, 0
        %v3399 = vsel %vm1328, %v3385, 0
        %3401 = vmatprep.subr.bf16.mxu0 0
        %3402 = vmatpush1.bf16.msra.mxu0 %v3399
        %3403 = vmatprep.subr.bf16.mxu0 0
        %3404 = vmatpush1.bf16.msra.mxu0 0
        %3405 = vmatprep.subr.bf16.mxu0 0
        %3406 = vmatpush1.bf16.msra.mxu0 0
        %3407 = vmatprep.subr.bf16.mxu0 0
        %3408 = vmatpush1.bf16.msra.mxu0 0
        %3409 = vmatprep.subr.bf16.mxu0 0
        %3410 = vmatpush1.bf16.msra.mxu0 0
        %3411 = vmatprep.subr.bf16.mxu0 0
        %3412 = vmatpush1.bf16.msra.mxu0 0
        %3413 = vmatprep.subr.bf16.mxu0 0
        %3414 = vmatpush1.bf16.msra.mxu0 0
        %3415 = vmatprep.subr.bf16.mxu0 0
        %3416 = vmatpush1.bf16.msra.mxu0 0
        %3417 = vmatprep.subr.bf16.mxu0 0
        %3418 = vmatpush1.bf16.msra.mxu0 0
        %3419 = vmatprep.subr.bf16.mxu0 0
        %3420 = vmatpush1.bf16.msra.mxu0 0
        %3421 = vmatprep.subr.bf16.mxu0 0
        %3422 = vmatpush1.bf16.msra.mxu0 0
        %3423 = vmatprep.subr.bf16.mxu0 0
        %3424 = vmatpush1.bf16.msra.mxu0 0
        %3425 = vmatprep.subr.bf16.mxu0 0
        %3426 = vmatpush1.bf16.msra.mxu0 0
        %3427 = vmatprep.subr.bf16.mxu0 0
        %3428 = vmatpush1.bf16.msra.mxu0 0
        %3429 = vmatprep.subr.bf16.mxu0 0
        %3430 = vmatpush1.bf16.msra.mxu0 0
        %3431 = vmatprep.subr.bf16.mxu0 0
        %3432 = vmatpush1.bf16.msra.mxu0 0
        %3433 = vmatprep.mubr.bf16.mxu0 0
        %3434 = vmatmul.mubr.bf16.gmra.mrb[0].mxu0 %v3396
        %v3435 = vpop.f32.mrb[0].mxu0
        %v3436 = vadd.f32 0.0, %v3435
        %v3437 = vpop.f32.mrb[0].mxu0
        %v3438 = vpop.f32.mrb[0].mxu0
        %v3439 = vpop.f32.mrb[0].mxu0
        %3440 = vdwg.mxu0
        %v3442 = vsel %vm1324, %v2970, 0
        %v3445 = vsel %vm1328, %v3388, 0
        %3447 = vmatprep.subr.bf16.mxu0 0
        %3448 = vmatpush1.bf16.msra.mxu0 %v3445
        %3449 = vmatprep.subr.bf16.mxu0 0
        %3450 = vmatpush1.bf16.msra.mxu0 0
        %3451 = vmatprep.subr.bf16.mxu0 0
        %3452 = vmatpush1.bf16.msra.mxu0 0
        %3453 = vmatprep.subr.bf16.mxu0 0
        %3454 = vmatpush1.bf16.msra.mxu0 0
        %3455 = vmatprep.subr.bf16.mxu0 0
        %3456 = vmatpush1.bf16.msra.mxu0 0
        %3457 = vmatprep.subr.bf16.mxu0 0
        %3458 = vmatpush1.bf16.msra.mxu0 0
        %3459 = vmatprep.subr.bf16.mxu0 0
        %3460 = vmatpush1.bf16.msra.mxu0 0
        %3461 = vmatprep.subr.bf16.mxu0 0
        %3462 = vmatpush1.bf16.msra.mxu0 0
        %3463 = vmatprep.subr.bf16.mxu0 0
        %3464 = vmatpush1.bf16.msra.mxu0 0
        %3465 = vmatprep.subr.bf16.mxu0 0
        %3466 = vmatpush1.bf16.msra.mxu0 0
        %3467 = vmatprep.subr.bf16.mxu0 0
        %3468 = vmatpush1.bf16.msra.mxu0 0
        %3469 = vmatprep.subr.bf16.mxu0 0
        %3470 = vmatpush1.bf16.msra.mxu0 0
        %3471 = vmatprep.subr.bf16.mxu0 0
        %3472 = vmatpush1.bf16.msra.mxu0 0
        %3473 = vmatprep.subr.bf16.mxu0 0
        %3474 = vmatpush1.bf16.msra.mxu0 0
        %3475 = vmatprep.subr.bf16.mxu0 0
        %3476 = vmatpush1.bf16.msra.mxu0 0
        %3477 = vmatprep.subr.bf16.mxu0 0
        %3478 = vmatpush1.bf16.msra.mxu0 0
        %3479 = vmatprep.mubr.bf16.mxu0 0
        %3480 = vmatmul.mubr.bf16.gmra.mrb[0].mxu0 %v3442
        %v3481 = vpop.f32.mrb[0].mxu0
        %v3482 = vadd.f32 0.0, %v3481
        %v3483 = vpop.f32.mrb[0].mxu0
        %v3484 = vpop.f32.mrb[0].mxu0
        %v3485 = vpop.f32.mrb[0].mxu0
        %3486 = vdwg.mxu0
        %v3488 = vsel %vm1324, %v2973, 0
        %v3491 = vsel %vm1328, %v3391, 0
        %3493 = vmatprep.subr.bf16.mxu0 0
        %3494 = vmatpush1.bf16.msra.mxu0 %v3491
        %3495 = vmatprep.subr.bf16.mxu0 0
        %3496 = vmatpush1.bf16.msra.mxu0 0
        %3497 = vmatprep.subr.bf16.mxu0 0
        %3498 = vmatpush1.bf16.msra.mxu0 0
        %3499 = vmatprep.subr.bf16.mxu0 0
        %3500 = vmatpush1.bf16.msra.mxu0 0
        %3501 = vmatprep.subr.bf16.mxu0 0
        %3502 = vmatpush1.bf16.msra.mxu0 0
        %3503 = vmatprep.subr.bf16.mxu0 0
        %3504 = vmatpush1.bf16.msra.mxu0 0
        %3505 = vmatprep.subr.bf16.mxu0 0
        %3506 = vmatpush1.bf16.msra.mxu0 0
        %3507 = vmatprep.subr.bf16.mxu0 0
        %3508 = vmatpush1.bf16.msra.mxu0 0
        %3509 = vmatprep.subr.bf16.mxu0 0
        %3510 = vmatpush1.bf16.msra.mxu0 0
        %3511 = vmatprep.subr.bf16.mxu0 0
        %3512 = vmatpush1.bf16.msra.mxu0 0
        %3513 = vmatprep.subr.bf16.mxu0 0
        %3514 = vmatpush1.bf16.msra.mxu0 0
        %3515 = vmatprep.subr.bf16.mxu0 0
        %3516 = vmatpush1.bf16.msra.mxu0 0
        %3517 = vmatprep.subr.bf16.mxu0 0
        %3518 = vmatpush1.bf16.msra.mxu0 0
        %3519 = vmatprep.subr.bf16.mxu0 0
        %3520 = vmatpush1.bf16.msra.mxu0 0
        %3521 = vmatprep.subr.bf16.mxu0 0
        %3522 = vmatpush1.bf16.msra.mxu0 0
        %3523 = vmatprep.subr.bf16.mxu0 0
        %3524 = vmatpush1.bf16.msra.mxu0 0
        %3525 = vmatprep.mubr.bf16.mxu0 0
        %3526 = vmatmul.mubr.bf16.gmra.mrb[0].mxu0 %v3488
        %v3527 = vpop.f32.mrb[0].mxu0
        %v3528 = vadd.f32 0.0, %v3527
        %v3529 = vpop.f32.mrb[0].mxu0
        %v3530 = vpop.f32.mrb[0].mxu0
        %v3531 = vpop.f32.mrb[0].mxu0
        %3532 = vdwg.mxu0
        %v3534 = vsel %vm1324, %v2976, 0
        %v3537 = vsel %vm1328, %v3394, 0
        %3539 = vmatprep.subr.bf16.mxu0 0
        %3540 = vmatpush1.bf16.msra.mxu0 %v3537
        %3541 = vmatprep.subr.bf16.mxu0 0
        %3542 = vmatpush1.bf16.msra.mxu0 0
        %3543 = vmatprep.subr.bf16.mxu0 0
        %3544 = vmatpush1.bf16.msra.mxu0 0
        %3545 = vmatprep.subr.bf16.mxu0 0
        %3546 = vmatpush1.bf16.msra.mxu0 0
        %3547 = vmatprep.subr.bf16.mxu0 0
        %3548 = vmatpush1.bf16.msra.mxu0 0
        %3549 = vmatprep.subr.bf16.mxu0 0
        %3550 = vmatpush1.bf16.msra.mxu0 0
        %3551 = vmatprep.subr.bf16.mxu0 0
        %3552 = vmatpush1.bf16.msra.mxu0 0
        %3553 = vmatprep.subr.bf16.mxu0 0
        %3554 = vmatpush1.bf16.msra.mxu0 0
        %3555 = vmatprep.subr.bf16.mxu0 0
        %3556 = vmatpush1.bf16.msra.mxu0 0
        %3557 = vmatprep.subr.bf16.mxu0 0
        %3558 = vmatpush1.bf16.msra.mxu0 0
        %3559 = vmatprep.subr.bf16.mxu0 0
        %3560 = vmatpush1.bf16.msra.mxu0 0
        %3561 = vmatprep.subr.bf16.mxu0 0
        %3562 = vmatpush1.bf16.msra.mxu0 0
        %3563 = vmatprep.subr.bf16.mxu0 0
        %3564 = vmatpush1.bf16.msra.mxu0 0
        %3565 = vmatprep.subr.bf16.mxu0 0
        %3566 = vmatpush1.bf16.msra.mxu0 0
        %3567 = vmatprep.subr.bf16.mxu0 0
        %3568 = vmatpush1.bf16.msra.mxu0 0
        %3569 = vmatprep.subr.bf16.mxu0 0
        %3570 = vmatpush1.bf16.msra.mxu0 0
        %3571 = vmatprep.mubr.bf16.mxu0 0
        %3572 = vmatmul.mubr.bf16.gmra.mrb[0].mxu0 %v3534
        %v3573 = vpop.f32.mrb[0].mxu0
        %v3574 = vadd.f32 0.0, %v3573
        %v3575 = vpop.f32.mrb[0].mxu0
        %v3576 = vpop.f32.mrb[0].mxu0
        %v3577 = vpop.f32.mrb[0].mxu0
        %3578 = vdwg.mxu0
        %v3579 = vmul.f32 %v3436, 0.35355338
        %v3580 = vmul.f32 %v3482, 0.35355338
        %v3581 = vmul.f32 %v3528, 0.35355338
        %v3582 = vmul.f32 %v3574, 0.35355338
        %v3584 = vlaneseq
        %v3585 = vshrl.u32 %v3584, 7
        %v3586 = vsub.s32 0, %v3585
        %v3587 = vrot.slane %v2654, %v3586
        %v3589 = vadd.f32 %v3579, %v3587
        %v3590 = vadd.f32 %v3580, %v3587
        %v3591 = vadd.f32 %v3581, %v3587
        %v3592 = vadd.f32 %v3582, %v3587
        %v3593 = vsel %vm1324, %v3589, -inf
        %3594 = vmax.xlane.f32.xlu0 %v3593
        %v3595 = vpop.xlane.xlu0 %3594
        %v3596 = vsel %vm1324, %v3590, -inf
        %3597 = vmax.xlane.f32.xlu0 %v3596
        %v3598 = vpop.xlane.xlu0 %3597
        %v3599 = vsel %vm1324, %v3591, -inf
        %3600 = vmax.xlane.f32.xlu0 %v3599
        %v3601 = vpop.xlane.xlu0 %3600
        %v3602 = vsel %vm1324, %v3592, -inf
        %3603 = vmax.xlane.f32.xlu0 %v3602
        %v3604 = vpop.xlane.xlu0 %3603
        %v3605 = vsub.f32 %v3589, %v3595
        %v3606 = vsub.f32 %v3590, %v3598
        %v3607 = vsub.f32 %v3591, %v3601
        %v3608 = vsub.f32 %v3592, %v3604
        %v3609 = vmul.f32 %v3605, 1.442695
        %v3610 = vpow.pop %v3609
        %v3611 = vmul.f32 %v3606, 1.442695
        %v3612 = vpow.pop %v3611
        %v3613 = vmul.f32 %v3607, 1.442695
        %v3614 = vpow.pop %v3613
        %v3615 = vmul.f32 %v3608, 1.442695
        %v3616 = vpow.pop %v3615
        %v3617 = vsel %vm1324, %v3610, 0.0
        %3618 = vadd.xlane.f32.xlu0 %v3617
        %v3619 = vpop.xlane.xlu0 %3618
        %v3620 = vsel %vm1324, %v3612, 0.0
        %3621 = vadd.xlane.f32.xlu0 %v3620
        %v3622 = vpop.xlane.xlu0 %3621
        %v3623 = vsel %vm1324, %v3614, 0.0
        %3624 = vadd.xlane.f32.xlu0 %v3623
        %v3625 = vpop.xlane.xlu0 %3624
        %v3626 = vsel %vm1324, %v3616, 0.0
        %3627 = vadd.xlane.f32.xlu0 %v3626
        %v3628 = vpop.xlane.xlu0 %3627
        %v3629 = vrcp.pop %v3619
        %v3630 = vrcp.pop %v3622
        %v3631 = vrcp.pop %v3625
        %v3632 = vrcp.pop %v3628
        %v3633 = vmul.f32 %v3610, %v3629
        %v3634 = vmul.f32 %v3612, %v3630
        %v3635 = vmul.f32 %v3614, %v3631
        %v3636 = vmul.f32 %v3616, %v3632
        %v3637 = vpack.c.bf16 %v3633, %v3633
        %v3638 = vpack.c.bf16 %v3634, %v3634
        %v3639 = vpack.c.bf16 %v3635, %v3635
        %v3640 = vpack.c.bf16 %v3636, %v3636
        %3641 = vxpose.xlu0.c.b16.start [1/8] %v2907, 128
        %3642 = vxpose.xlu0.c.b16.cont [2/8] 0, 128
        %3643 = vxpose.xlu0.c.b16.cont [3/8] 0, 128
        %3644 = vxpose.xlu0.c.b16.cont [4/8] 0, 128
        %3645 = vxpose.xlu0.c.b16.cont [5/8] 0, 128
        %3646 = vxpose.xlu0.c.b16.cont [6/8] 0, 128
        %3647 = vxpose.xlu0.c.b16.cont [7/8] 0, 128
        %3648 = vxpose.xlu0.c.b16.end [8/8] 0, 128
        %v3649 = vpop.trf.xlu0
        %v3650 = vpop.trf.xlu0
        %v3651 = vpop.trf.xlu0
        %v3652 = vpop.trf.xlu0
        %v3653 = vpop.trf.xlu0
        %v3654 = vpop.trf.xlu0
        %v3655 = vpop.trf.xlu0
        %v3656 = vpop.trf.xlu0
        %3657 = vxpose.xlu0.c.b16.start [1/8] %v2908, 128
        %3658 = vxpose.xlu0.c.b16.cont [2/8] 0, 128
        %3659 = vxpose.xlu0.c.b16.cont [3/8] 0, 128
        %3660 = vxpose.xlu0.c.b16.cont [4/8] 0, 128
        %3661 = vxpose.xlu0.c.b16.cont [5/8] 0, 128
        %3662 = vxpose.xlu0.c.b16.cont [6/8] 0, 128
        %3663 = vxpose.xlu0.c.b16.cont [7/8] 0, 128
        %3664 = vxpose.xlu0.c.b16.end [8/8] 0, 128
        %v3665 = vpop.trf.xlu0
        %v3666 = vpop.trf.xlu0
        %v3667 = vpop.trf.xlu0
        %v3668 = vpop.trf.xlu0
        %v3669 = vpop.trf.xlu0
        %v3670 = vpop.trf.xlu0
        %v3671 = vpop.trf.xlu0
        %v3672 = vpop.trf.xlu0
        %3673 = vxpose.xlu0.c.b16.start [1/8] %v2909, 128
        %3674 = vxpose.xlu0.c.b16.cont [2/8] 0, 128
        %3675 = vxpose.xlu0.c.b16.cont [3/8] 0, 128
        %3676 = vxpose.xlu0.c.b16.cont [4/8] 0, 128
        %3677 = vxpose.xlu0.c.b16.cont [5/8] 0, 128
        %3678 = vxpose.xlu0.c.b16.cont [6/8] 0, 128
        %3679 = vxpose.xlu0.c.b16.cont [7/8] 0, 128
        %3680 = vxpose.xlu0.c.b16.end [8/8] 0, 128
        %v3681 = vpop.trf.xlu0
        %v3682 = vpop.trf.xlu0
        %v3683 = vpop.trf.xlu0
        %v3684 = vpop.trf.xlu0
        %v3685 = vpop.trf.xlu0
        %v3686 = vpop.trf.xlu0
        %v3687 = vpop.trf.xlu0
        %v3688 = vpop.trf.xlu0
        %3689 = vxpose.xlu0.c.b16.start [1/8] %v2910, 128
        %3690 = vxpose.xlu0.c.b16.cont [2/8] 0, 128
        %3691 = vxpose.xlu0.c.b16.cont [3/8] 0, 128
        %3692 = vxpose.xlu0.c.b16.cont [4/8] 0, 128
        %3693 = vxpose.xlu0.c.b16.cont [5/8] 0, 128
        %3694 = vxpose.xlu0.c.b16.cont [6/8] 0, 128
        %3695 = vxpose.xlu0.c.b16.cont [7/8] 0, 128
        %3696 = vxpose.xlu0.c.b16.end [8/8] 0, 128
        %v3697 = vpop.trf.xlu0
        %v3698 = vpop.trf.xlu0
        %v3699 = vpop.trf.xlu0
        %v3700 = vpop.trf.xlu0
        %v3701 = vpop.trf.xlu0
        %v3702 = vpop.trf.xlu0
        %v3703 = vpop.trf.xlu0
        %v3704 = vpop.trf.xlu0
        %3705 = vxpose.xlu0.c.b16.start [1/8] %v2911, 128
        %3706 = vxpose.xlu0.c.b16.cont [2/8] 0, 128
        %3707 = vxpose.xlu0.c.b16.cont [3/8] 0, 128
        %3708 = vxpose.xlu0.c.b16.cont [4/8] 0, 128
        %3709 = vxpose.xlu0.c.b16.cont [5/8] 0, 128
        %3710 = vxpose.xlu0.c.b16.cont [6/8] 0, 128
        %3711 = vxpose.xlu0.c.b16.cont [7/8] 0, 128
        %3712 = vxpose.xlu0.c.b16.end [8/8] 0, 128
        %v3713 = vpop.trf.xlu0
        %v3714 = vpop.trf.xlu0
        %v3715 = vpop.trf.xlu0
        %v3716 = vpop.trf.xlu0
        %v3717 = vpop.trf.xlu0
        %v3718 = vpop.trf.xlu0
        %v3719 = vpop.trf.xlu0
        %v3720 = vpop.trf.xlu0
        %3721 = vxpose.xlu0.c.b16.start [1/8] %v2912, 128
        %3722 = vxpose.xlu0.c.b16.cont [2/8] 0, 128
        %3723 = vxpose.xlu0.c.b16.cont [3/8] 0, 128
        %3724 = vxpose.xlu0.c.b16.cont [4/8] 0, 128
        %3725 = vxpose.xlu0.c.b16.cont [5/8] 0, 128
        %3726 = vxpose.xlu0.c.b16.cont [6/8] 0, 128
        %3727 = vxpose.xlu0.c.b16.cont [7/8] 0, 128
        %3728 = vxpose.xlu0.c.b16.end [8/8] 0, 128
        %v3729 = vpop.trf.xlu0
        %v3730 = vpop.trf.xlu0
        %v3731 = vpop.trf.xlu0
        %v3732 = vpop.trf.xlu0
        %v3733 = vpop.trf.xlu0
        %v3734 = vpop.trf.xlu0
        %v3735 = vpop.trf.xlu0
        %v3736 = vpop.trf.xlu0
        %3737 = vxpose.xlu0.c.b16.start [1/8] %v2913, 128
        %3738 = vxpose.xlu0.c.b16.cont [2/8] 0, 128
        %3739 = vxpose.xlu0.c.b16.cont [3/8] 0, 128
        %3740 = vxpose.xlu0.c.b16.cont [4/8] 0, 128
        %3741 = vxpose.xlu0.c.b16.cont [5/8] 0, 128
        %3742 = vxpose.xlu0.c.b16.cont [6/8] 0, 128
        %3743 = vxpose.xlu0.c.b16.cont [7/8] 0, 128
        %3744 = vxpose.xlu0.c.b16.end [8/8] 0, 128
        %v3745 = vpop.trf.xlu0
        %v3746 = vpop.trf.xlu0
        %v3747 = vpop.trf.xlu0
        %v3748 = vpop.trf.xlu0
        %v3749 = vpop.trf.xlu0
        %v3750 = vpop.trf.xlu0
        %v3751 = vpop.trf.xlu0
        %v3752 = vpop.trf.xlu0
        %3753 = vxpose.xlu0.c.b16.start [1/8] %v2914, 128
        %3754 = vxpose.xlu0.c.b16.cont [2/8] 0, 128
        %3755 = vxpose.xlu0.c.b16.cont [3/8] 0, 128
        %3756 = vxpose.xlu0.c.b16.cont [4/8] 0, 128
        %3757 = vxpose.xlu0.c.b16.cont [5/8] 0, 128
        %3758 = vxpose.xlu0.c.b16.cont [6/8] 0, 128
        %3759 = vxpose.xlu0.c.b16.cont [7/8] 0, 128
        %3760 = vxpose.xlu0.c.b16.end [8/8] 0, 128
        %v3761 = vpop.trf.xlu0
        %v3762 = vpop.trf.xlu0
        %v3763 = vpop.trf.xlu0
        %v3764 = vpop.trf.xlu0
        %v3765 = vpop.trf.xlu0
        %v3766 = vpop.trf.xlu0
        %v3767 = vpop.trf.xlu0
        %v3768 = vpop.trf.xlu0
        %v3769 = vcombine.low %v3649, %v3713
        %v3771 = vunpack.c.l.s4 1983009808
        %v3772 = vunpack.c.0.s8 %v3771
        %v3773 = vlaneseq
        %v3774 = vshrl.u32 %v3773, 7
        %v3775 = vsub.s32 %v3772, %v3774
        %v3776 = vrot.slane %v3769, %v3775
        %v3777 = vcombine.low %v3681, %v3745
        %v3779 = vunpack.c.l.s4 1983009808
        %v3780 = vunpack.c.0.s8 %v3779
        %v3781 = vlaneseq
        %v3782 = vshrl.u32 %v3781, 7
        %v3783 = vsub.s32 %v3780, %v3782
        %v3784 = vrot.slane %v3777, %v3783
        %v3785 = vcombine.low %v3776, %v3784
        %v3786 = vcombine.high %v3776, %v3784
        %v3788 = vunpack.c.l.s4 1934713408
        %v3789 = vunpack.c.0.s8 %v3788
        %v3790 = vlaneseq
        %v3791 = vshrl.u32 %v3790, 7
        %v3792 = vsub.s32 %v3789, %v3791
        %v3793 = vrot.slane %v3785, %v3792
        %v3795 = vunpack.c.l.s4 1934713408
        %v3796 = vunpack.c.0.s8 %v3795
        %v3797 = vlaneseq
        %v3798 = vshrl.u32 %v3797, 7
        %v3799 = vsub.s32 %v3796, %v3798
        %v3800 = vrot.slane %v3786, %v3799
        %v3801 = vcombine.high %v3793, 0
        %v3802 = vcombine.high %v3800, 0
        %v3803 = vcombine.low %v3665, %v3729
        %v3805 = vunpack.c.l.s4 1983009808
        %v3806 = vunpack.c.0.s8 %v3805
        %v3807 = vlaneseq
        %v3808 = vshrl.u32 %v3807, 7
        %v3809 = vsub.s32 %v3806, %v3808
        %v3810 = vrot.slane %v3803, %v3809
        %v3811 = vcombine.low %v3697, %v3761
        %v3813 = vunpack.c.l.s4 1983009808
        %v3814 = vunpack.c.0.s8 %v3813
        %v3815 = vlaneseq
        %v3816 = vshrl.u32 %v3815, 7
        %v3817 = vsub.s32 %v3814, %v3816
        %v3818 = vrot.slane %v3811, %v3817
        %v3819 = vcombine.low %v3810, %v3818
        %v3820 = vcombine.high %v3810, %v3818
        %v3822 = vunpack.c.l.s4 1934713408
        %v3823 = vunpack.c.0.s8 %v3822
        %v3824 = vlaneseq
        %v3825 = vshrl.u32 %v3824, 7
        %v3826 = vsub.s32 %v3823, %v3825
        %v3827 = vrot.slane %v3819, %v3826
        %v3829 = vunpack.c.l.s4 1934713408
        %v3830 = vunpack.c.0.s8 %v3829
        %v3831 = vlaneseq
        %v3832 = vshrl.u32 %v3831, 7
        %v3833 = vsub.s32 %v3830, %v3832
        %v3834 = vrot.slane %v3820, %v3833
        %v3835 = vcombine.high %v3827, 0
        %v3836 = vcombine.high %v3834, 0
        %v3839 = vpack.i.b16 %v3827, %v3793
        %v3841 = vshrl.u32 %v3793, 16
        %v3842 = vshrl.u32 %v3827, 16
        %v3843 = vpack.i.b16 %v3842, %v3841
        %v3847 = vpack.i.b16 %v3835, %v3801
        %v3849 = vshrl.u32 %v3801, 16
        %v3850 = vshrl.u32 %v3835, 16
        %v3851 = vpack.i.b16 %v3850, %v3849
        %v3855 = vpack.i.b16 %v3834, %v3800
        %v3857 = vshrl.u32 %v3800, 16
        %v3858 = vshrl.u32 %v3834, 16
        %v3859 = vpack.i.b16 %v3858, %v3857
        %v3863 = vpack.i.b16 %v3836, %v3802
        %v3865 = vshrl.u32 %v3802, 16
        %v3866 = vshrl.u32 %v3836, 16
        %v3867 = vpack.i.b16 %v3866, %v3865
        %3869 = vxpose.xlu0.c.b16.start [1/8] %v3839, 128
        %3870 = vxpose.xlu0.c.b16.cont [2/8] 0, 128
        %3871 = vxpose.xlu0.c.b16.cont [3/8] 0, 128
        %3872 = vxpose.xlu0.c.b16.cont [4/8] 0, 128
        %3873 = vxpose.xlu0.c.b16.cont [5/8] 0, 128
        %3874 = vxpose.xlu0.c.b16.cont [6/8] 0, 128
        %3875 = vxpose.xlu0.c.b16.cont [7/8] 0, 128
        %3876 = vxpose.xlu0.c.b16.end [8/8] 0, 128
        %v3877 = vpop.trf.xlu0
        %v3878 = vpop.trf.xlu0
        %v3879 = vpop.trf.xlu0
        %v3880 = vpop.trf.xlu0
        %v3881 = vpop.trf.xlu0
        %v3882 = vpop.trf.xlu0
        %v3883 = vpop.trf.xlu0
        %v3884 = vpop.trf.xlu0
        %3885 = vxpose.xlu0.c.b16.start [1/8] %v3843, 128
        %3886 = vxpose.xlu0.c.b16.cont [2/8] 0, 128
        %3887 = vxpose.xlu0.c.b16.cont [3/8] 0, 128
        %3888 = vxpose.xlu0.c.b16.cont [4/8] 0, 128
        %3889 = vxpose.xlu0.c.b16.cont [5/8] 0, 128
        %3890 = vxpose.xlu0.c.b16.cont [6/8] 0, 128
        %3891 = vxpose.xlu0.c.b16.cont [7/8] 0, 128
        %3892 = vxpose.xlu0.c.b16.end [8/8] 0, 128
        %v3893 = vpop.trf.xlu0
        %v3894 = vpop.trf.xlu0
        %v3895 = vpop.trf.xlu0
        %v3896 = vpop.trf.xlu0
        %v3897 = vpop.trf.xlu0
        %v3898 = vpop.trf.xlu0
        %v3899 = vpop.trf.xlu0
        %v3900 = vpop.trf.xlu0
        %3901 = vxpose.xlu0.c.b16.start [1/8] %v3847, 128
        %3902 = vxpose.xlu0.c.b16.cont [2/8] 0, 128
        %3903 = vxpose.xlu0.c.b16.cont [3/8] 0, 128
        %3904 = vxpose.xlu0.c.b16.cont [4/8] 0, 128
        %3905 = vxpose.xlu0.c.b16.cont [5/8] 0, 128
        %3906 = vxpose.xlu0.c.b16.cont [6/8] 0, 128
        %3907 = vxpose.xlu0.c.b16.cont [7/8] 0, 128
        %3908 = vxpose.xlu0.c.b16.end [8/8] 0, 128
        %v3909 = vpop.trf.xlu0
        %v3910 = vpop.trf.xlu0
        %v3911 = vpop.trf.xlu0
        %v3912 = vpop.trf.xlu0
        %v3913 = vpop.trf.xlu0
        %v3914 = vpop.trf.xlu0
        %v3915 = vpop.trf.xlu0
        %v3916 = vpop.trf.xlu0
        %3917 = vxpose.xlu0.c.b16.start [1/8] %v3851, 128
        %3918 = vxpose.xlu0.c.b16.cont [2/8] 0, 128
        %3919 = vxpose.xlu0.c.b16.cont [3/8] 0, 128
        %3920 = vxpose.xlu0.c.b16.cont [4/8] 0, 128
        %3921 = vxpose.xlu0.c.b16.cont [5/8] 0, 128
        %3922 = vxpose.xlu0.c.b16.cont [6/8] 0, 128
        %3923 = vxpose.xlu0.c.b16.cont [7/8] 0, 128
        %3924 = vxpose.xlu0.c.b16.end [8/8] 0, 128
        %v3925 = vpop.trf.xlu0
        %v3926 = vpop.trf.xlu0
        %v3927 = vpop.trf.xlu0
        %v3928 = vpop.trf.xlu0
        %v3929 = vpop.trf.xlu0
        %v3930 = vpop.trf.xlu0
        %v3931 = vpop.trf.xlu0
        %v3932 = vpop.trf.xlu0
        %3933 = vxpose.xlu0.c.b16.start [1/8] %v3855, 128
        %3934 = vxpose.xlu0.c.b16.cont [2/8] 0, 128
        %3935 = vxpose.xlu0.c.b16.cont [3/8] 0, 128
        %3936 = vxpose.xlu0.c.b16.cont [4/8] 0, 128
        %3937 = vxpose.xlu0.c.b16.cont [5/8] 0, 128
        %3938 = vxpose.xlu0.c.b16.cont [6/8] 0, 128
        %3939 = vxpose.xlu0.c.b16.cont [7/8] 0, 128
        %3940 = vxpose.xlu0.c.b16.end [8/8] 0, 128
        %v3941 = vpop.trf.xlu0
        %v3942 = vpop.trf.xlu0
        %v3943 = vpop.trf.xlu0
        %v3944 = vpop.trf.xlu0
        %v3945 = vpop.trf.xlu0
        %v3946 = vpop.trf.xlu0
        %v3947 = vpop.trf.xlu0
        %v3948 = vpop.trf.xlu0
        %3949 = vxpose.xlu0.c.b16.start [1/8] %v3859, 128
        %3950 = vxpose.xlu0.c.b16.cont [2/8] 0, 128
        %3951 = vxpose.xlu0.c.b16.cont [3/8] 0, 128
        %3952 = vxpose.xlu0.c.b16.cont [4/8] 0, 128
        %3953 = vxpose.xlu0.c.b16.cont [5/8] 0, 128
        %3954 = vxpose.xlu0.c.b16.cont [6/8] 0, 128
        %3955 = vxpose.xlu0.c.b16.cont [7/8] 0, 128
        %3956 = vxpose.xlu0.c.b16.end [8/8] 0, 128
        %v3957 = vpop.trf.xlu0
        %v3958 = vpop.trf.xlu0
        %v3959 = vpop.trf.xlu0
        %v3960 = vpop.trf.xlu0
        %v3961 = vpop.trf.xlu0
        %v3962 = vpop.trf.xlu0
        %v3963 = vpop.trf.xlu0
        %v3964 = vpop.trf.xlu0
        %3965 = vxpose.xlu0.c.b16.start [1/8] %v3863, 128
        %3966 = vxpose.xlu0.c.b16.cont [2/8] 0, 128
        %3967 = vxpose.xlu0.c.b16.cont [3/8] 0, 128
        %3968 = vxpose.xlu0.c.b16.cont [4/8] 0, 128
        %3969 = vxpose.xlu0.c.b16.cont [5/8] 0, 128
        %3970 = vxpose.xlu0.c.b16.cont [6/8] 0, 128
        %3971 = vxpose.xlu0.c.b16.cont [7/8] 0, 128
        %3972 = vxpose.xlu0.c.b16.end [8/8] 0, 128
        %v3973 = vpop.trf.xlu0
        %v3974 = vpop.trf.xlu0
        %v3975 = vpop.trf.xlu0
        %v3976 = vpop.trf.xlu0
        %v3977 = vpop.trf.xlu0
        %v3978 = vpop.trf.xlu0
        %v3979 = vpop.trf.xlu0
        %v3980 = vpop.trf.xlu0
        %3981 = vxpose.xlu0.c.b16.start [1/8] %v3867, 128
        %3982 = vxpose.xlu0.c.b16.cont [2/8] 0, 128
        %3983 = vxpose.xlu0.c.b16.cont [3/8] 0, 128
        %3984 = vxpose.xlu0.c.b16.cont [4/8] 0, 128
        %3985 = vxpose.xlu0.c.b16.cont [5/8] 0, 128
        %3986 = vxpose.xlu0.c.b16.cont [6/8] 0, 128
        %3987 = vxpose.xlu0.c.b16.cont [7/8] 0, 128
        %3988 = vxpose.xlu0.c.b16.end [8/8] 0, 128
        %v3989 = vpop.trf.xlu0
        %v3990 = vpop.trf.xlu0
        %v3991 = vpop.trf.xlu0
        %v3992 = vpop.trf.xlu0
        %v3993 = vpop.trf.xlu0
        %v3994 = vpop.trf.xlu0
        %v3995 = vpop.trf.xlu0
        %v3996 = vpop.trf.xlu0
        %v3997 = vcombine.low %v3877, %v3941
        %v3999 = vunpack.c.l.s4 1983009808
        %v4000 = vunpack.c.0.s8 %v3999
        %v4001 = vlaneseq
        %v4002 = vshrl.u32 %v4001, 7
        %v4003 = vsub.s32 %v4000, %v4002
        %v4004 = vrot.slane %v3997, %v4003
        %v4005 = vcombine.low %v3909, %v3973
        %v4007 = vunpack.c.l.s4 1983009808
        %v4008 = vunpack.c.0.s8 %v4007
        %v4009 = vlaneseq
        %v4010 = vshrl.u32 %v4009, 7
        %v4011 = vsub.s32 %v4008, %v4010
        %v4012 = vrot.slane %v4005, %v4011
        %v4013 = vcombine.low %v4004, %v4012
        %v4015 = vunpack.c.l.s4 1934713408
        %v4016 = vunpack.c.0.s8 %v4015
        %v4017 = vlaneseq
        %v4018 = vshrl.u32 %v4017, 7
        %v4019 = vsub.s32 %v4016, %v4018
        %v4020 = vrot.slane %v4013, %v4019
        %v4021 = vcombine.high %v4020, 0
        %v4022 = vcombine.low %v3893, %v3957
        %v4024 = vunpack.c.l.s4 1983009808
        %v4025 = vunpack.c.0.s8 %v4024
        %v4026 = vlaneseq
        %v4027 = vshrl.u32 %v4026, 7
        %v4028 = vsub.s32 %v4025, %v4027
        %v4029 = vrot.slane %v4022, %v4028
        %v4030 = vcombine.low %v3925, %v3989
        %v4032 = vunpack.c.l.s4 1983009808
        %v4033 = vunpack.c.0.s8 %v4032
        %v4034 = vlaneseq
        %v4035 = vshrl.u32 %v4034, 7
        %v4036 = vsub.s32 %v4033, %v4035
        %v4037 = vrot.slane %v4030, %v4036
        %v4038 = vcombine.low %v4029, %v4037
        %v4040 = vunpack.c.l.s4 1934713408
        %v4041 = vunpack.c.0.s8 %v4040
        %v4042 = vlaneseq
        %v4043 = vshrl.u32 %v4042, 7
        %v4044 = vsub.s32 %v4041, %v4043
        %v4045 = vrot.slane %v4038, %v4044
        %v4046 = vcombine.high %v4045, 0
        %v4049 = vpack.i.b16 %v4045, %v4020
        %v4050 = vshrl.u32 %v4020, 16
        %v4051 = vshrl.u32 %v4045, 16
        %v4052 = vpack.i.b16 %v4051, %v4050
        %v4055 = vpack.i.b16 %v4046, %v4021
        %v4056 = vshrl.u32 %v4021, 16
        %v4057 = vshrl.u32 %v4046, 16
        %v4058 = vpack.i.b16 %v4057, %v4056
        %v4060 = vsel %vm1324, %v4049, 0
        %v4063 = vsel %vm1324, %v3637, 0
        %4065 = vmatprep.subr.bf16.mxu0 0
        %4066 = vmatpush1.bf16.xpose.msra.mxu0 %v4063
        %4067 = vmatprep.subr.bf16.mxu0 0
        %4068 = vmatpush1.bf16.xpose.msra.mxu0 0
        %4069 = vmatprep.subr.bf16.mxu0 0
        %4070 = vmatpush1.bf16.xpose.msra.mxu0 0
        %4071 = vmatprep.subr.bf16.mxu0 0
        %4072 = vmatpush1.bf16.xpose.msra.mxu0 0
        %4073 = vmatprep.subr.bf16.mxu0 0
        %4074 = vmatpush1.bf16.xpose.msra.mxu0 0
        %4075 = vmatprep.subr.bf16.mxu0 0
        %4076 = vmatpush1.bf16.xpose.msra.mxu0 0
        %4077 = vmatprep.subr.bf16.mxu0 0
        %4078 = vmatpush1.bf16.xpose.msra.mxu0 0
        %4079 = vmatprep.subr.bf16.mxu0 0
        %4080 = vmatpush1.bf16.xpose.msra.mxu0 0
        %4081 = vmatprep.subr.bf16.mxu0 0
        %4082 = vmatpush1.bf16.xpose.msra.mxu0 0
        %4083 = vmatprep.subr.bf16.mxu0 0
        %4084 = vmatpush1.bf16.xpose.msra.mxu0 0
        %4085 = vmatprep.subr.bf16.mxu0 0
        %4086 = vmatpush1.bf16.xpose.msra.mxu0 0
        %4087 = vmatprep.subr.bf16.mxu0 0
        %4088 = vmatpush1.bf16.xpose.msra.mxu0 0
        %4089 = vmatprep.subr.bf16.mxu0 0
        %4090 = vmatpush1.bf16.xpose.msra.mxu0 0
        %4091 = vmatprep.subr.bf16.mxu0 0
        %4092 = vmatpush1.bf16.xpose.msra.mxu0 0
        %4093 = vmatprep.subr.bf16.mxu0 0
        %4094 = vmatpush1.bf16.xpose.msra.mxu0 0
        %4095 = vmatprep.subr.bf16.mxu0 0
        %4096 = vmatpush1.bf16.xpose.msra.mxu0 0
        %4097 = vmatprep.mubr.bf16.mxu0 0
        %4098 = vmatmul.mubr.bf16.gmra.mrb[0].mxu0 %v4060
        %v4099 = vpop.f32.mrb[0].mxu0
        %v4100 = vadd.f32 0.0, %v4099
        %v4101 = vpop.f32.mrb[0].mxu0
        %v4102 = vpop.f32.mrb[0].mxu0
        %v4103 = vpop.f32.mrb[0].mxu0
        %4104 = vdwg.mxu0
        %v4106 = vsel %vm1324, %v4052, 0
        %v4109 = vsel %vm1324, %v3638, 0
        %4111 = vmatprep.subr.bf16.mxu0 0
        %4112 = vmatpush1.bf16.xpose.msra.mxu0 %v4109
        %4113 = vmatprep.subr.bf16.mxu0 0
        %4114 = vmatpush1.bf16.xpose.msra.mxu0 0
        %4115 = vmatprep.subr.bf16.mxu0 0
        %4116 = vmatpush1.bf16.xpose.msra.mxu0 0
        %4117 = vmatprep.subr.bf16.mxu0 0
        %4118 = vmatpush1.bf16.xpose.msra.mxu0 0
        %4119 = vmatprep.subr.bf16.mxu0 0
        %4120 = vmatpush1.bf16.xpose.msra.mxu0 0
        %4121 = vmatprep.subr.bf16.mxu0 0
        %4122 = vmatpush1.bf16.xpose.msra.mxu0 0
        %4123 = vmatprep.subr.bf16.mxu0 0
        %4124 = vmatpush1.bf16.xpose.msra.mxu0 0
        %4125 = vmatprep.subr.bf16.mxu0 0
        %4126 = vmatpush1.bf16.xpose.msra.mxu0 0
        %4127 = vmatprep.subr.bf16.mxu0 0
        %4128 = vmatpush1.bf16.xpose.msra.mxu0 0
        %4129 = vmatprep.subr.bf16.mxu0 0
        %4130 = vmatpush1.bf16.xpose.msra.mxu0 0
        %4131 = vmatprep.subr.bf16.mxu0 0
        %4132 = vmatpush1.bf16.xpose.msra.mxu0 0
        %4133 = vmatprep.subr.bf16.mxu0 0
        %4134 = vmatpush1.bf16.xpose.msra.mxu0 0
        %4135 = vmatprep.subr.bf16.mxu0 0
        %4136 = vmatpush1.bf16.xpose.msra.mxu0 0
        %4137 = vmatprep.subr.bf16.mxu0 0
        %4138 = vmatpush1.bf16.xpose.msra.mxu0 0
        %4139 = vmatprep.subr.bf16.mxu0 0
        %4140 = vmatpush1.bf16.xpose.msra.mxu0 0
        %4141 = vmatprep.subr.bf16.mxu0 0
        %4142 = vmatpush1.bf16.xpose.msra.mxu0 0
        %4143 = vmatprep.mubr.bf16.mxu0 0
        %4144 = vmatmul.mubr.bf16.gmra.mrb[0].mxu0 %v4106
        %v4145 = vpop.f32.mrb[0].mxu0
        %v4146 = vadd.f32 0.0, %v4145
        %v4147 = vpop.f32.mrb[0].mxu0
        %v4148 = vpop.f32.mrb[0].mxu0
        %v4149 = vpop.f32.mrb[0].mxu0
        %4150 = vdwg.mxu0
        %v4152 = vsel %vm1324, %v4055, 0
        %v4155 = vsel %vm1324, %v3639, 0
        %4157 = vmatprep.subr.bf16.mxu0 0
        %4158 = vmatpush1.bf16.xpose.msra.mxu0 %v4155
        %4159 = vmatprep.subr.bf16.mxu0 0
        %4160 = vmatpush1.bf16.xpose.msra.mxu0 0
        %4161 = vmatprep.subr.bf16.mxu0 0
        %4162 = vmatpush1.bf16.xpose.msra.mxu0 0
        %4163 = vmatprep.subr.bf16.mxu0 0
        %4164 = vmatpush1.bf16.xpose.msra.mxu0 0
        %4165 = vmatprep.subr.bf16.mxu0 0
        %4166 = vmatpush1.bf16.xpose.msra.mxu0 0
        %4167 = vmatprep.subr.bf16.mxu0 0
        %4168 = vmatpush1.bf16.xpose.msra.mxu0 0
        %4169 = vmatprep.subr.bf16.mxu0 0
        %4170 = vmatpush1.bf16.xpose.msra.mxu0 0
        %4171 = vmatprep.subr.bf16.mxu0 0
        %4172 = vmatpush1.bf16.xpose.msra.mxu0 0
        %4173 = vmatprep.subr.bf16.mxu0 0
        %4174 = vmatpush1.bf16.xpose.msra.mxu0 0
        %4175 = vmatprep.subr.bf16.mxu0 0
        %4176 = vmatpush1.bf16.xpose.msra.mxu0 0
        %4177 = vmatprep.subr.bf16.mxu0 0
        %4178 = vmatpush1.bf16.xpose.msra.mxu0 0
        %4179 = vmatprep.subr.bf16.mxu0 0
        %4180 = vmatpush1.bf16.xpose.msra.mxu0 0
        %4181 = vmatprep.subr.bf16.mxu0 0
        %4182 = vmatpush1.bf16.xpose.msra.mxu0 0
        %4183 = vmatprep.subr.bf16.mxu0 0
        %4184 = vmatpush1.bf16.xpose.msra.mxu0 0
        %4185 = vmatprep.subr.bf16.mxu0 0
        %4186 = vmatpush1.bf16.xpose.msra.mxu0 0
        %4187 = vmatprep.subr.bf16.mxu0 0
        %4188 = vmatpush1.bf16.xpose.msra.mxu0 0
        %4189 = vmatprep.mubr.bf16.mxu0 0
        %4190 = vmatmul.mubr.bf16.gmra.mrb[0].mxu0 %v4152
        %v4191 = vpop.f32.mrb[0].mxu0
        %v4192 = vadd.f32 0.0, %v4191
        %v4193 = vpop.f32.mrb[0].mxu0
        %v4194 = vpop.f32.mrb[0].mxu0
        %v4195 = vpop.f32.mrb[0].mxu0
        %4196 = vdwg.mxu0
        %v4198 = vsel %vm1324, %v4058, 0
        %v4201 = vsel %vm1324, %v3640, 0
        %4203 = vmatprep.subr.bf16.mxu0 0
        %4204 = vmatpush1.bf16.xpose.msra.mxu0 %v4201
        %4205 = vmatprep.subr.bf16.mxu0 0
        %4206 = vmatpush1.bf16.xpose.msra.mxu0 0
        %4207 = vmatprep.subr.bf16.mxu0 0
        %4208 = vmatpush1.bf16.xpose.msra.mxu0 0
        %4209 = vmatprep.subr.bf16.mxu0 0
        %4210 = vmatpush1.bf16.xpose.msra.mxu0 0
        %4211 = vmatprep.subr.bf16.mxu0 0
        %4212 = vmatpush1.bf16.xpose.msra.mxu0 0
        %4213 = vmatprep.subr.bf16.mxu0 0
        %4214 = vmatpush1.bf16.xpose.msra.mxu0 0
        %4215 = vmatprep.subr.bf16.mxu0 0
        %4216 = vmatpush1.bf16.xpose.msra.mxu0 0
        %4217 = vmatprep.subr.bf16.mxu0 0
        %4218 = vmatpush1.bf16.xpose.msra.mxu0 0
        %4219 = vmatprep.subr.bf16.mxu0 0
        %4220 = vmatpush1.bf16.xpose.msra.mxu0 0
        %4221 = vmatprep.subr.bf16.mxu0 0
        %4222 = vmatpush1.bf16.xpose.msra.mxu0 0
        %4223 = vmatprep.subr.bf16.mxu0 0
        %4224 = vmatpush1.bf16.xpose.msra.mxu0 0
        %4225 = vmatprep.subr.bf16.mxu0 0
        %4226 = vmatpush1.bf16.xpose.msra.mxu0 0
        %4227 = vmatprep.subr.bf16.mxu0 0
        %4228 = vmatpush1.bf16.xpose.msra.mxu0 0
        %4229 = vmatprep.subr.bf16.mxu0 0
        %4230 = vmatpush1.bf16.xpose.msra.mxu0 0
        %4231 = vmatprep.subr.bf16.mxu0 0
        %4232 = vmatpush1.bf16.xpose.msra.mxu0 0
        %4233 = vmatprep.subr.bf16.mxu0 0
        %4234 = vmatpush1.bf16.xpose.msra.mxu0 0
        %4235 = vmatprep.mubr.bf16.mxu0 0
        %4236 = vmatmul.mubr.bf16.gmra.mrb[0].mxu0 %v4198
        %v4237 = vpop.f32.mrb[0].mxu0
        %v4238 = vadd.f32 0.0, %v4237
        %v4239 = vpop.f32.mrb[0].mxu0
        %v4240 = vpop.f32.mrb[0].mxu0
        %v4241 = vpop.f32.mrb[0].mxu0
        %4242 = vdwg.mxu0
        %4243 = vxpose.xlu0.b32.start [1/16] %v4100, 128
        %4244 = vxpose.xlu0.b32.cont [2/16] 0.0, 128
        %4245 = vxpose.xlu0.b32.cont [3/16] 0.0, 128
        %4246 = vxpose.xlu0.b32.cont [4/16] 0.0, 128
        %4247 = vxpose.xlu0.b32.cont [5/16] 0.0, 128
        %4248 = vxpose.xlu0.b32.cont [6/16] 0.0, 128
        %4249 = vxpose.xlu0.b32.cont [7/16] 0.0, 128
        %4250 = vxpose.xlu0.b32.cont [8/16] 0.0, 128
        %4251 = vxpose.xlu0.b32.cont [9/16] 0.0, 128
        %4252 = vxpose.xlu0.b32.cont [10/16] 0.0, 128
        %4253 = vxpose.xlu0.b32.cont [11/16] 0.0, 128
        %4254 = vxpose.xlu0.b32.cont [12/16] 0.0, 128
        %4255 = vxpose.xlu0.b32.cont [13/16] 0.0, 128
        %4256 = vxpose.xlu0.b32.cont [14/16] 0.0, 128
        %4257 = vxpose.xlu0.b32.cont [15/16] 0.0, 128
        %4258 = vxpose.xlu0.b32.end [16/16] 0.0, 128
        %v4259 = vpop.trf.xlu0
        %v4260 = vpop.trf.xlu0
        %v4261 = vpop.trf.xlu0
        %v4262 = vpop.trf.xlu0
        %v4263 = vpop.trf.xlu0
        %v4264 = vpop.trf.xlu0
        %v4265 = vpop.trf.xlu0
        %v4266 = vpop.trf.xlu0
        %v4267 = vpop.trf.xlu0
        %v4268 = vpop.trf.xlu0
        %v4269 = vpop.trf.xlu0
        %v4270 = vpop.trf.xlu0
        %v4271 = vpop.trf.xlu0
        %v4272 = vpop.trf.xlu0
        %v4273 = vpop.trf.xlu0
        %v4274 = vpop.trf.xlu0
        %4275 = vxpose.xlu0.b32.start [1/16] %v4146, 128
        %4276 = vxpose.xlu0.b32.cont [2/16] 0.0, 128
        %4277 = vxpose.xlu0.b32.cont [3/16] 0.0, 128
        %4278 = vxpose.xlu0.b32.cont [4/16] 0.0, 128
        %4279 = vxpose.xlu0.b32.cont [5/16] 0.0, 128
        %4280 = vxpose.xlu0.b32.cont [6/16] 0.0, 128
        %4281 = vxpose.xlu0.b32.cont [7/16] 0.0, 128
        %4282 = vxpose.xlu0.b32.cont [8/16] 0.0, 128
        %4283 = vxpose.xlu0.b32.cont [9/16] 0.0, 128
        %4284 = vxpose.xlu0.b32.cont [10/16] 0.0, 128
        %4285 = vxpose.xlu0.b32.cont [11/16] 0.0, 128
        %4286 = vxpose.xlu0.b32.cont [12/16] 0.0, 128
        %4287 = vxpose.xlu0.b32.cont [13/16] 0.0, 128
        %4288 = vxpose.xlu0.b32.cont [14/16] 0.0, 128
        %4289 = vxpose.xlu0.b32.cont [15/16] 0.0, 128
        %4290 = vxpose.xlu0.b32.end [16/16] 0.0, 128
        %v4291 = vpop.trf.xlu0
        %v4292 = vpop.trf.xlu0
        %v4293 = vpop.trf.xlu0
        %v4294 = vpop.trf.xlu0
        %v4295 = vpop.trf.xlu0
        %v4296 = vpop.trf.xlu0
        %v4297 = vpop.trf.xlu0
        %v4298 = vpop.trf.xlu0
        %v4299 = vpop.trf.xlu0
        %v4300 = vpop.trf.xlu0
        %v4301 = vpop.trf.xlu0
        %v4302 = vpop.trf.xlu0
        %v4303 = vpop.trf.xlu0
        %v4304 = vpop.trf.xlu0
        %v4305 = vpop.trf.xlu0
        %v4306 = vpop.trf.xlu0
        %4307 = vxpose.xlu0.b32.start [1/16] %v4192, 128
        %4308 = vxpose.xlu0.b32.cont [2/16] 0.0, 128
        %4309 = vxpose.xlu0.b32.cont [3/16] 0.0, 128
        %4310 = vxpose.xlu0.b32.cont [4/16] 0.0, 128
        %4311 = vxpose.xlu0.b32.cont [5/16] 0.0, 128
        %4312 = vxpose.xlu0.b32.cont [6/16] 0.0, 128
        %4313 = vxpose.xlu0.b32.cont [7/16] 0.0, 128
        %4314 = vxpose.xlu0.b32.cont [8/16] 0.0, 128
        %4315 = vxpose.xlu0.b32.cont [9/16] 0.0, 128
        %4316 = vxpose.xlu0.b32.cont [10/16] 0.0, 128
        %4317 = vxpose.xlu0.b32.cont [11/16] 0.0, 128
        %4318 = vxpose.xlu0.b32.cont [12/16] 0.0, 128
        %4319 = vxpose.xlu0.b32.cont [13/16] 0.0, 128
        %4320 = vxpose.xlu0.b32.cont [14/16] 0.0, 128
        %4321 = vxpose.xlu0.b32.cont [15/16] 0.0, 128
        %4322 = vxpose.xlu0.b32.end [16/16] 0.0, 128
        %v4323 = vpop.trf.xlu0
        %v4324 = vpop.trf.xlu0
        %v4325 = vpop.trf.xlu0
        %v4326 = vpop.trf.xlu0
        %v4327 = vpop.trf.xlu0
        %v4328 = vpop.trf.xlu0
        %v4329 = vpop.trf.xlu0
        %v4330 = vpop.trf.xlu0
        %v4331 = vpop.trf.xlu0
        %v4332 = vpop.trf.xlu0
        %v4333 = vpop.trf.xlu0
        %v4334 = vpop.trf.xlu0
        %v4335 = vpop.trf.xlu0
        %v4336 = vpop.trf.xlu0
        %v4337 = vpop.trf.xlu0
        %v4338 = vpop.trf.xlu0
        %4339 = vxpose.xlu0.b32.start [1/16] %v4238, 128
        %4340 = vxpose.xlu0.b32.cont [2/16] 0.0, 128
        %4341 = vxpose.xlu0.b32.cont [3/16] 0.0, 128
        %4342 = vxpose.xlu0.b32.cont [4/16] 0.0, 128
        %4343 = vxpose.xlu0.b32.cont [5/16] 0.0, 128
        %4344 = vxpose.xlu0.b32.cont [6/16] 0.0, 128
        %4345 = vxpose.xlu0.b32.cont [7/16] 0.0, 128
        %4346 = vxpose.xlu0.b32.cont [8/16] 0.0, 128
        %4347 = vxpose.xlu0.b32.cont [9/16] 0.0, 128
        %4348 = vxpose.xlu0.b32.cont [10/16] 0.0, 128
        %4349 = vxpose.xlu0.b32.cont [11/16] 0.0, 128
        %4350 = vxpose.xlu0.b32.cont [12/16] 0.0, 128
        %4351 = vxpose.xlu0.b32.cont [13/16] 0.0, 128
        %4352 = vxpose.xlu0.b32.cont [14/16] 0.0, 128
        %4353 = vxpose.xlu0.b32.cont [15/16] 0.0, 128
        %4354 = vxpose.xlu0.b32.end [16/16] 0.0, 128
        %v4355 = vpop.trf.xlu0
        %v4356 = vpop.trf.xlu0
        %v4357 = vpop.trf.xlu0
        %v4358 = vpop.trf.xlu0
        %v4359 = vpop.trf.xlu0
        %v4360 = vpop.trf.xlu0
        %v4361 = vpop.trf.xlu0
        %v4362 = vpop.trf.xlu0
        %v4363 = vpop.trf.xlu0
        %v4364 = vpop.trf.xlu0
        %v4365 = vpop.trf.xlu0
        %v4366 = vpop.trf.xlu0
        %v4367 = vpop.trf.xlu0
        %v4368 = vpop.trf.xlu0
        %v4369 = vpop.trf.xlu0
        %v4370 = vpop.trf.xlu0
        %v4371 = vcombine.low %v4259, %v4323
        %v4372 = vcombine.high %v4259, %v4323
        %v4374 = vunpack.c.l.s4 1983009808
        %v4375 = vunpack.c.0.s8 %v4374
        %v4376 = vlaneseq
        %v4377 = vshrl.u32 %v4376, 7
        %v4378 = vsub.s32 %v4375, %v4377
        %v4379 = vrot.slane %v4371, %v4378
        %v4381 = vunpack.c.l.s4 1983009808
        %v4382 = vunpack.c.0.s8 %v4381
        %v4383 = vlaneseq
        %v4384 = vshrl.u32 %v4383, 7
        %v4385 = vsub.s32 %v4382, %v4384
        %v4386 = vrot.slane %v4372, %v4385
        %v4387 = vcombine.low %v4291, %v4355
        %v4388 = vcombine.high %v4291, %v4355
        %v4390 = vunpack.c.l.s4 1983009808
        %v4391 = vunpack.c.0.s8 %v4390
        %v4392 = vlaneseq
        %v4393 = vshrl.u32 %v4392, 7
        %v4394 = vsub.s32 %v4391, %v4393
        %v4395 = vrot.slane %v4387, %v4394
        %v4397 = vunpack.c.l.s4 1983009808
        %v4398 = vunpack.c.0.s8 %v4397
        %v4399 = vlaneseq
        %v4400 = vshrl.u32 %v4399, 7
        %v4401 = vsub.s32 %v4398, %v4400
        %v4402 = vrot.slane %v4388, %v4401
        %v4403 = vcombine.low %v4379, %v4395
        %v4404 = vcombine.high %v4379, %v4395
        %v4406 = vunpack.c.l.s4 1934713408
        %v4407 = vunpack.c.0.s8 %v4406
        %v4408 = vlaneseq
        %v4409 = vshrl.u32 %v4408, 7
        %v4410 = vsub.s32 %v4407, %v4409
        %v4411 = vrot.slane %v4403, %v4410
        %v4413 = vunpack.c.l.s4 1934713408
        %v4414 = vunpack.c.0.s8 %v4413
        %v4415 = vlaneseq
        %v4416 = vshrl.u32 %v4415, 7
        %v4417 = vsub.s32 %v4414, %v4416
        %v4418 = vrot.slane %v4404, %v4417
        %v4419 = vcombine.low %v4386, %v4402
        %v4420 = vcombine.high %v4386, %v4402
        %v4422 = vunpack.c.l.s4 1934713408
        %v4423 = vunpack.c.0.s8 %v4422
        %v4424 = vlaneseq
        %v4425 = vshrl.u32 %v4424, 7
        %v4426 = vsub.s32 %v4423, %v4425
        %v4427 = vrot.slane %v4419, %v4426
        %v4429 = vunpack.c.l.s4 1934713408
        %v4430 = vunpack.c.0.s8 %v4429
        %v4431 = vlaneseq
        %v4432 = vshrl.u32 %v4431, 7
        %v4433 = vsub.s32 %v4430, %v4432
        %v4434 = vrot.slane %v4420, %v4433
        %v4435 = vcombine.high %v4411, 0.0
        %v4436 = vcombine.high %v4418, 0.0
        %v4437 = vcombine.high %v4427, 0.0
        %v4438 = vcombine.high %v4434, 0.0
        %v4439 = vcombine.low %v4411, %v4418
        %v4441 = vunpack.c.l.s4 1983009808
        %v4442 = vunpack.c.0.s8 %v4441
        %v4443 = vlaneseq
        %v4444 = vshrl.u32 %v4443, 7
        %v4445 = vsub.s32 %v4442, %v4444
        %v4446 = vrot.slane %v4439, %v4445
        %v4447 = vcombine.low %v4435, %v4436
        %v4449 = vunpack.c.l.s4 1983009808
        %v4450 = vunpack.c.0.s8 %v4449
        %v4451 = vlaneseq
        %v4452 = vshrl.u32 %v4451, 7
        %v4453 = vsub.s32 %v4450, %v4452
        %v4454 = vrot.slane %v4447, %v4453
        %v4455 = vcombine.low %v4427, %v4434
        %v4457 = vunpack.c.l.s4 1983009808
        %v4458 = vunpack.c.0.s8 %v4457
        %v4459 = vlaneseq
        %v4460 = vshrl.u32 %v4459, 7
        %v4461 = vsub.s32 %v4458, %v4460
        %v4462 = vrot.slane %v4455, %v4461
        %v4463 = vcombine.low %v4437, %v4438
        %v4465 = vunpack.c.l.s4 1983009808
        %v4466 = vunpack.c.0.s8 %v4465
        %v4467 = vlaneseq
        %v4468 = vshrl.u32 %v4467, 7
        %v4469 = vsub.s32 %v4466, %v4468
        %v4470 = vrot.slane %v4463, %v4469
        %v4471 = vcombine.low %v4446, %v4454
        %v4472 = vcombine.high %v4446, %v4454
        %v4474 = vunpack.c.l.s4 1934713408
        %v4475 = vunpack.c.0.s8 %v4474
        %v4476 = vlaneseq
        %v4477 = vshrl.u32 %v4476, 7
        %v4478 = vsub.s32 %v4475, %v4477
        %v4479 = vrot.slane %v4471, %v4478
        %v4481 = vunpack.c.l.s4 1934713408
        %v4482 = vunpack.c.0.s8 %v4481
        %v4483 = vlaneseq
        %v4484 = vshrl.u32 %v4483, 7
        %v4485 = vsub.s32 %v4482, %v4484
        %v4486 = vrot.slane %v4472, %v4485
        %v4487 = vcombine.low %v4462, %v4470
        %v4488 = vcombine.high %v4462, %v4470
        %v4490 = vunpack.c.l.s4 1934713408
        %v4491 = vunpack.c.0.s8 %v4490
        %v4492 = vlaneseq
        %v4493 = vshrl.u32 %v4492, 7
        %v4494 = vsub.s32 %v4491, %v4493
        %v4495 = vrot.slane %v4487, %v4494
        %v4497 = vunpack.c.l.s4 1934713408
        %v4498 = vunpack.c.0.s8 %v4497
        %v4499 = vlaneseq
        %v4500 = vshrl.u32 %v4499, 7
        %v4501 = vsub.s32 %v4498, %v4500
        %v4502 = vrot.slane %v4488, %v4501
        %v4503 = vcombine.low %v4479, %v4495
        %v4504 = vcombine.high %v4479, %v4495
        %v4505 = vcombine.low %v4486, %v4502
        %v4506 = vcombine.high %v4486, %v4502
        %4508 = vrot.lane.b32.xlu0 %v4504, 8
        %v4509 = vpop.permute.xlu0 %4508
        %4512 = vrot.lane.b32.xlu0 %v4505, 16
        %v4513 = vpop.permute.xlu0 %4512
        %4516 = vrot.lane.b32.xlu0 %v4506, 24
        %v4517 = vpop.permute.xlu0 %4516
        %v4519 = vsel %vm1324, %v4503, %v4509
        %v4520 = vsel %vm2445, %v4519, %v4513
        %v4521 = vsel %vm2447, %v4520, %v4517
        %v4522 = vpack.c.bf16 %v4521, %v4521
        %v4523 = vld [vmem:[#allocation7] sm:$0xf]
        %v4524 = vld [vmem:[#allocation7 + $0x4] sm:$0xf]
        %v4525 = vld [vmem:[#allocation7 + $0x8] sm:$0xf]
        %v4526 = vld [vmem:[#allocation7 + $0xc] sm:$0xf]
        %v4531 = vunpack.c.l.b16 %v4523
        %v4532 = vunpack.c.l.b16 %v4524
        %v4533 = vunpack.c.l.b16 %v4525
        %v4534 = vunpack.c.l.b16 %v4526
        %v4535 = vpack.c.b16 %v4532, %v4531
        %v4536 = vpack.c.b16 %v4534, %v4533
        %v4540 = vsel %vm532, %v4522, 0
        %4542 = vmatprep.subr.bf16.mxu0 0
        %4543 = vmatpush1.bf16.msra.mxu0 %v4535
        %4544 = vmatprep.subr.bf16.mxu0 0
        %4545 = vmatpush1.bf16.msra.mxu0 %v4536
        %4546 = vmatprep.subr.bf16.mxu0 0
        %4547 = vmatpush1.bf16.msra.mxu0 0
        %4548 = vmatprep.subr.bf16.mxu0 0
        %4549 = vmatpush1.bf16.msra.mxu0 0
        %4550 = vmatprep.subr.bf16.mxu0 0
        %4551 = vmatpush1.bf16.msra.mxu0 0
        %4552 = vmatprep.subr.bf16.mxu0 0
        %4553 = vmatpush1.bf16.msra.mxu0 0
        %4554 = vmatprep.subr.bf16.mxu0 0
        %4555 = vmatpush1.bf16.msra.mxu0 0
        %4556 = vmatprep.subr.bf16.mxu0 0
        %4557 = vmatpush1.bf16.msra.mxu0 0
        %4558 = vmatprep.subr.bf16.mxu0 0
        %4559 = vmatpush1.bf16.msra.mxu0 0
        %4560 = vmatprep.subr.bf16.mxu0 0
        %4561 = vmatpush1.bf16.msra.mxu0 0
        %4562 = vmatprep.subr.bf16.mxu0 0
        %4563 = vmatpush1.bf16.msra.mxu0 0
        %4564 = vmatprep.subr.bf16.mxu0 0
        %4565 = vmatpush1.bf16.msra.mxu0 0
        %4566 = vmatprep.subr.bf16.mxu0 0
        %4567 = vmatpush1.bf16.msra.mxu0 0
        %4568 = vmatprep.subr.bf16.mxu0 0
        %4569 = vmatpush1.bf16.msra.mxu0 0
        %4570 = vmatprep.subr.bf16.mxu0 0
        %4571 = vmatpush1.bf16.msra.mxu0 0
        %4572 = vmatprep.subr.bf16.mxu0 0
        %4573 = vmatpush1.bf16.msra.mxu0 0
        %4574 = vmatprep.mubr.bf16.mxu0 0
        %4575 = vmatmul.mubr.bf16.gmra.mrb[0].mxu0 %v4540
        %v4576 = vpop.f32.mrb[0].mxu0
        %v4577 = vadd.f32 0.0, %v4576
        %v4578 = vpop.f32.mrb[0].mxu0
        %v4579 = vpop.f32.mrb[0].mxu0
        %v4580 = vpop.f32.mrb[0].mxu0
        %4581 = vdwg.mxu0
        %v4582 = vadd.f32 %v2533, %v4577
        %v4583 = vsel %vm532, %v4582, 0.0
        %4584 = vadd.xlane.f32.xlu0 %v4583
        %v4585 = vpop.xlane.xlu0 %4584
        %v4586 = vmul.f32 %v4585, %v2513
        %v4587 = vsub.f32 %v4582, %v4586
        %v4588 = vmul.f32 %v4587, %v4587
        %v4589 = vsel %vm532, %v4588, 0.0
        %4590 = vadd.xlane.f32.xlu0 %v4589
        %v4591 = vpop.xlane.xlu0 %4590
        %v4592 = vmul.f32 %v4591, %v2513
        %v4593 = vadd.f32 %v4592, 1e-05
        %v4594 = vrsqrt.pop %v4593
        %v4595 = vmul.f32 %v4587, %v4594
        %v4596 = vlaneseq
        %v4597 = vshrl.u32 %v4596, 7
        %v4598 = vsub.s32 2, %v4597
        %v4599 = vrot.slane %v514, %v4598
        %v4600 = vmul.f32 %v4595, %v4599
        %v4601 = vlaneseq
        %v4602 = vshrl.u32 %v4601, 7
        %v4603 = vsub.s32 3, %v4602
        %v4604 = vrot.slane %v514, %v4603
        %v4605 = vadd.f32 %v4600, %v4604
        %v4606 = vpack.c.bf16 %v4605, %v4605
        %v4607 = vld [vmem:[#allocation8] sm:$0xf]
        %v4608 = vld [vmem:[#allocation8 + $0x4] sm:$0xf]
        %v4609 = vld [vmem:[#allocation8 + $0x8] sm:$0xf]
        %v4610 = vld [vmem:[#allocation8 + $0xc] sm:$0xf]
        %v4611 = vld [vmem:[%s9] sm:$0x1]
        %v4613 = vlaneseq
        %v4614 = vshrl.u32 %v4613, 7
        %v4615 = vsub.s32 0, %v4614
        %v4616 = vrot.slane %v4611, %v4615
        %v4622 = vunpack.c.l.b16 %v4607
        %v4623 = vunpack.c.l.b16 %v4608
        %v4624 = vunpack.c.l.b16 %v4609
        %v4625 = vunpack.c.l.b16 %v4610
        %v4626 = vpack.c.b16 %v4623, %v4622
        %v4627 = vpack.c.b16 %v4625, %v4624
        %v4631 = vsel %vm532, %v4606, 0
        %4633 = vmatprep.subr.bf16.mxu0 0
        %4634 = vmatpush1.bf16.msra.mxu0 %v4626
        %4635 = vmatprep.subr.bf16.mxu0 0
        %4636 = vmatpush1.bf16.msra.mxu0 %v4627
        %4637 = vmatprep.subr.bf16.mxu0 0
        %4638 = vmatpush1.bf16.msra.mxu0 0
        %4639 = vmatprep.subr.bf16.mxu0 0
        %4640 = vmatpush1.bf16.msra.mxu0 0
        %4641 = vmatprep.subr.bf16.mxu0 0
        %4642 = vmatpush1.bf16.msra.mxu0 0
        %4643 = vmatprep.subr.bf16.mxu0 0
        %4644 = vmatpush1.bf16.msra.mxu0 0
        %4645 = vmatprep.subr.bf16.mxu0 0
        %4646 = vmatpush1.bf16.msra.mxu0 0
        %4647 = vmatprep.subr.bf16.mxu0 0
        %4648 = vmatpush1.bf16.msra.mxu0 0
        %4649 = vmatprep.subr.bf16.mxu0 0
        %4650 = vmatpush1.bf16.msra.mxu0 0
        %4651 = vmatprep.subr.bf16.mxu0 0
        %4652 = vmatpush1.bf16.msra.mxu0 0
        %4653 = vmatprep.subr.bf16.mxu0 0
        %4654 = vmatpush1.bf16.msra.mxu0 0
        %4655 = vmatprep.subr.bf16.mxu0 0
        %4656 = vmatpush1.bf16.msra.mxu0 0
        %4657 = vmatprep.subr.bf16.mxu0 0
        %4658 = vmatpush1.bf16.msra.mxu0 0
        %4659 = vmatprep.subr.bf16.mxu0 0
        %4660 = vmatpush1.bf16.msra.mxu0 0
        %4661 = vmatprep.subr.bf16.mxu0 0
        %4662 = vmatpush1.bf16.msra.mxu0 0
        %4663 = vmatprep.subr.bf16.mxu0 0
        %4664 = vmatpush1.bf16.msra.mxu0 0
        %4665 = vmatprep.mubr.bf16.mxu0 0
        %4666 = vmatmul.mubr.bf16.gmra.mrb[0].mxu0 %v4631
        %v4667 = vpop.f32.mrb[0].mxu0
        %v4668 = vadd.f32 %v4616, %v4667
        %v4669 = vpop.f32.mrb[0].mxu0
        %v4670 = vpop.f32.mrb[0].mxu0
        %v4671 = vpop.f32.mrb[0].mxu0
        %4672 = vdwg.mxu0
        %v4673 = vmax.f32 %v4668, 0.0
        %v4674 = vpack.c.bf16 %v4673, %v4673
        %v4675 = vld [vmem:[%s10] sm:$0xf]
        %v4676 = vld [vmem:[%s10 + $0x4] sm:$0xf]
        %v4677 = vld [vmem:[%s10 + $0x8] sm:$0xf]
        %v4678 = vld [vmem:[%s10 + $0xc] sm:$0xf]
        %v4679 = vld [vmem:[%s10 + $0x10] sm:$0xf]
        %v4680 = vld [vmem:[%s10 + $0x14] sm:$0xf]
        %v4681 = vld [vmem:[%s10 + $0x18] sm:$0xf]
        %v4682 = vld [vmem:[%s10 + $0x1c] sm:$0xf]
        %v4683 = vlaneseq
        %v4684 = vshrl.u32 %v4683, 7
        %v4685 = vsub.s32 6, %v4684
        %v4686 = vrot.slane %v514, %v4685
        %v4695 = vunpack.c.l.b16 %v4675
        %v4696 = vunpack.c.l.b16 %v4676
        %v4697 = vunpack.c.l.b16 %v4677
        %v4698 = vunpack.c.l.b16 %v4678
        %v4699 = vunpack.c.l.b16 %v4679
        %v4700 = vunpack.c.l.b16 %v4680
        %v4701 = vunpack.c.l.b16 %v4681
        %v4702 = vunpack.c.l.b16 %v4682
        %v4703 = vpack.c.b16 %v4696, %v4695
        %v4704 = vpack.c.b16 %v4698, %v4697
        %v4705 = vpack.c.b16 %v4700, %v4699
        %v4706 = vpack.c.b16 %v4702, %v4701
        %vm4711 = vcmask 523264
        %v4713 = vsel %vm4711, %v4674, 0
        %4715 = vmatprep.subr.bf16.mxu0 0
        %4716 = vmatpush1.bf16.msra.mxu0 %v4703
        %4717 = vmatprep.subr.bf16.mxu0 0
        %4718 = vmatpush1.bf16.msra.mxu0 %v4704
        %4719 = vmatprep.subr.bf16.mxu0 0
        %4720 = vmatpush1.bf16.msra.mxu0 %v4705
        %4721 = vmatprep.subr.bf16.mxu0 0
        %4722 = vmatpush1.bf16.msra.mxu0 %v4706
        %4723 = vmatprep.subr.bf16.mxu0 0
        %4724 = vmatpush1.bf16.msra.mxu0 0
        %4725 = vmatprep.subr.bf16.mxu0 0
        %4726 = vmatpush1.bf16.msra.mxu0 0
        %4727 = vmatprep.subr.bf16.mxu0 0
        %4728 = vmatpush1.bf16.msra.mxu0 0
        %4729 = vmatprep.subr.bf16.mxu0 0
        %4730 = vmatpush1.bf16.msra.mxu0 0
        %4731 = vmatprep.subr.bf16.mxu0 0
        %4732 = vmatpush1.bf16.msra.mxu0 0
        %4733 = vmatprep.subr.bf16.mxu0 0
        %4734 = vmatpush1.bf16.msra.mxu0 0
        %4735 = vmatprep.subr.bf16.mxu0 0
        %4736 = vmatpush1.bf16.msra.mxu0 0
        %4737 = vmatprep.subr.bf16.mxu0 0
        %4738 = vmatpush1.bf16.msra.mxu0 0
        %4739 = vmatprep.subr.bf16.mxu0 0
        %4740 = vmatpush1.bf16.msra.mxu0 0
        %4741 = vmatprep.subr.bf16.mxu0 0
        %4742 = vmatpush1.bf16.msra.mxu0 0
        %4743 = vmatprep.subr.bf16.mxu0 0
        %4744 = vmatpush1.bf16.msra.mxu0 0
        %4745 = vmatprep.subr.bf16.mxu0 0
        %4746 = vmatpush1.bf16.msra.mxu0 0
        %4747 = vmatprep.mubr.bf16.mxu0 0
        %4748 = vmatmul.mubr.bf16.gmra.mrb[0].mxu0 %v4713
        %v4749 = vpop.f32.mrb[0].mxu0
        %v4750 = vadd.f32 %v4686, %v4749
        %v4751 = vpop.f32.mrb[0].mxu0
        %v4752 = vpop.f32.mrb[0].mxu0
        %v4753 = vpop.f32.mrb[0].mxu0
        %4754 = vdwg.mxu0
        %v4755 = vadd.f32 %v4605, %v4750
        %v4756 = vsel %vm532, %v4755, 0.0
        %4757 = vadd.xlane.f32.xlu0 %v4756
        %v4758 = vpop.xlane.xlu0 %4757
        %v4759 = vmul.f32 %v4758, %v2513
        %v4760 = vsub.f32 %v4755, %v4759
        %v4761 = vmul.f32 %v4760, %v4760
        %v4762 = vsel %vm532, %v4761, 0.0
        %4763 = vadd.xlane.f32.xlu0 %v4762
        %v4764 = vpop.xlane.xlu0 %4763
        %v4765 = vmul.f32 %v4764, %v2513
        %v4766 = vadd.f32 %v4765, 1e-05
        %v4767 = vrsqrt.pop %v4766
        %v4768 = vmul.f32 %v4760, %v4767
        %v4769 = vlaneseq
        %v4770 = vshrl.u32 %v4769, 7
        %v4771 = vsub.s32 4, %v4770
        %v4772 = vrot.slane %v514, %v4771
        %v4773 = vmul.f32 %v4768, %v4772
        %v4774 = vlaneseq
        %v4775 = vshrl.u32 %v4774, 7
        %v4776 = vsub.s32 5, %v4775
        %v4777 = vrot.slane %v514, %v4776
        %v4778 = vadd.f32 %v4773, %v4777
        %4779 = vst.msk [vmem:[%s499] sm:$0xff] %vm532, %v4778
        %s4780 = sand.u32 %s304, 1
        %s4781 = scalar_lea.sflag [#allocation4], %s4780
        %s4782 = sand.u32 %s304, 1
        %s4783 = smul.addr %s4782, 8
        %s4784 = scalar_lea.vmem [#allocation11], %s4783
        // Predicated region
        $region89: #{decoder_block_pallas.1} parent=67 // pred_check
          %p4785 = pneg %p314
        $region90: #{decoder_block_pallas.1} parent=67 // pred_check_branch
          %4787 = sbr.rel (%p4785) target = $region92
        $region91: #{decoder_block_pallas.1} parent=67 // pred_region
          %s4789 = ssub.s32 128, 128
          %4790 = vsyncadd %s4781, %s4789
          %s4791 = smul.addr %s29, 128
          %s4792 = scalar_lea.hbm %s12, %s4791
          %s4794 = sshll.u32 %s4784, 4
          %s4795 = int_to_ptr.vmem [resolvable:$true] %s4794
          %4797 = dma.vmem_to_hbm [thread:$0]  %s4795, 128, %s4792, %s4781
        $region92: #{decoder_block_pallas.1} parent=67 // pred_fallthru
          _
      $region68: #{decoder_block_pallas.1} parent=5 // pred_fallthru
        _
      %p4798 = scmp.le.s32.totalorder 2, %s24
      // Predicated region
      $region93: #{decoder_block_pallas.1} parent=5 // pred_check
        %p4799 = pneg %p4798
      $region94: #{decoder_block_pallas.1} parent=5 // pred_check_branch
        %4801 = sbr.rel (%p4799) target = $region96
      $region95: #{decoder_block_pallas.1} parent=5 // pred_region
        %s4802 = ssub.s32 %s24, 2
        // Predicated region
        $region97: #{decoder_block_pallas.1} parent=95 // pred_check
          %p4803 = pneg %p320
        $region98: #{decoder_block_pallas.1} parent=95 // pred_check_branch
          %4805 = sbr.rel (%p4803) target = $region100
        $region99: #{decoder_block_pallas.1} parent=95 // pred_region
          %s4806 = sand.u32 %s305, 1
          %s4807 = scalar_lea.sflag [#allocation4], %s4806
          %s4808 = sand.u32 %s305, 1
          %s4809 = smul.addr %s4808, 8
          %s4810 = scalar_lea.vmem [#allocation11], %s4809
          %4811 = dma.done %s4807, 128
        $region100: #{decoder_block_pallas.1} parent=95 // pred_fallthru
          _
      $region96: #{decoder_block_pallas.1} parent=5 // pred_fallthru
        _
    $region6: #{decoder_block_pallas.1} parent=1 // loop_footer
      %s28 = sadd.s32 1, %s24
    $region7: #{decoder_block_pallas.1} parent=1 // loop_footer_branch
      %23 = sbr.rel target = $region3
    $region8: #{decoder_block_pallas.1} parent=1 // loop_exit
      _
    %4812 = vsyncpa [#allocation3], 1
    %s4813 = scalar_lea.sflag [#allocation3], 1
    %4814 = vsyncpa %s4813, 1
    %4815 = vsyncpa [#allocation6], 1
    %4816 = vsyncpa [#allocation9], 1
    %4817 = vsyncpa [#allocation4], 1
    %s4818 = scalar_lea.sflag [#allocation4], 1
    %4819 = vsyncpa %s4818, 1

</llo_original>
